<compile_context>
chip_gen: v6e
topology: v6e:2x2x1
jax: 0.10.0
libtpu: 0.0.40
codegen_flags: <defaults>
</compile_context>

<pallas_src>
import functools

import jax
import jax.numpy as jnp
from jax.experimental import pallas as pl
from jax.experimental.pallas import tpu as pltpu

EPS = 1e-5
KH = KW = 3


def _round_up(x, m):
    return (x + m - 1) // m * m


def _cba_kernel(x_ref, w_ref, p_ref, m_ref, o_ref, *, wp, count):
    """Fused 3x3 conv (9 MXU matmuls + lane rolls) + bias + ReLU + BatchNorm.

    x_ref : (Cin_pad, COLS) bf16   channels-major, spatially padded, lane-padded
    w_ref : (9, Cout, Cin_pad) bf16  per-(kh,kw) weight slices
    p_ref : (Cout, 3) f32          [conv bias | BN gamma | BN beta]
    m_ref : (1, COLS) f32          1.0 on valid output columns, 0.0 elsewhere
    o_ref : (Cout, COLS) f32       conv output layout (channels on sublanes)
    """
    cout, cols = o_ref.shape
    xv = x_ref[...]                                            # (Cin_pad, COLS) bf16

    # --- convolution: 9 accumulating MXU matmuls, shift applied to the partial ---
    acc = jnp.dot(w_ref[0], xv, preferred_element_type=jnp.float32)   # delta = 0
    for k in range(1, KH * KW):
        delta = (k // KW) * wp + (k % KW)
        part = jnp.dot(w_ref[k], xv, preferred_element_type=jnp.float32)
        # roll left by delta: result[:, q] = part[:, q + delta] for all valid q
        acc = acc + pltpu.roll(part, shift=cols - delta, axis=1)

    bias = p_ref[:, 0:1]                                       # (Cout, 1)
    gamma = p_ref[:, 1:2]
    beta = p_ref[:, 2:3]

    y = jnp.maximum(acc + bias, 0.0)                           # bias + ReLU

    # --- BatchNorm over (N, H, W): single-pass masked sufficient statistics ---
    mask = m_ref[...]                                          # (1, COLS)
    ym = y * mask
    inv_cnt = 1.0 / count
    s1 = jnp.sum(ym, axis=1, keepdims=True)                    # (Cout, 1)
    s2 = jnp.sum(ym * ym, axis=1, keepdims=True)
    mean = s1 * inv_cnt
    var = jnp.maximum(s2 * inv_cnt - mean * mean, 0.0)
    scale = jax.lax.rsqrt(var + EPS) * gamma
    o_ref[...] = ((y - mean) * scale + beta).astype(o_ref.dtype)


@jax.jit
def cba_forward(x_nchw, weight, bias, gamma, beta):
    """x_nchw: (N, Cin, H, W); weight: (Cout, Cin, 3, 3). Returns (N, Cout, H, W) f32."""
    n, cin, h, w = x_nchw.shape
    cout = weight.shape[0]
    hp, wp = h + 2, w + 2
    cin_pad = max(_round_up(cin, 16), 16)          # bf16 sublane pack
    cols_raw = n * hp * wp
    cols = _round_up(cols_raw, 128)                # lane-dense slab

    # --- input: cast to bf16 first, one small transpose, zero pads (no im2col) ---
    x_t = x_nchw.astype(jnp.bfloat16).transpose(1, 0, 2, 3)           # (Cin, N, H, W)
    x_p = jnp.pad(x_t, ((0, cin_pad - cin), (0, 0), (1, 1), (1, 1)))  # (Cin_pad, N, HP, WP)
    x_flat = jnp.pad(x_p.reshape(cin_pad, cols_raw),
                     ((0, 0), (0, cols - cols_raw)))                  # (Cin_pad, COLS)

    # --- weights: (kh, kw)-major slices, channel-padded, bf16 (tiny) ---
    w_p = jnp.pad(weight, ((0, 0), (0, cin_pad - cin), (0, 0), (0, 0)))
    w9 = (w_p.transpose(2, 3, 0, 1)                                   # (3, 3, Cout, Cin_pad)
          .reshape(KH * KW, cout, cin_pad).astype(jnp.bfloat16))

    # --- per-channel params merged into one operand ---
    pvec = jnp.stack([bias, gamma, beta], axis=1).astype(jnp.float32)  # (Cout, 3)

    # --- validity mask over columns (jit-time constant) ---
    c = jnp.arange(cols)
    r = c % (hp * wp)
    valid = (c < cols_raw) & ((r % wp) < w) & ((r // wp) < h)
    maskv = valid.astype(jnp.float32).reshape(1, cols)

    kernel = functools.partial(_cba_kernel, wp=wp, count=float(n * h * w))
    bytes_accessed = (cin_pad * cols * 2 + KH * KW * cout * cin_pad * 2
                      + cout * 3 * 4 + cols * 4 + cout * cols * 4)
    out_t = pl.pallas_call(
        kernel,
        out_shape=jax.ShapeDtypeStruct((cout, cols), jnp.float32),
        in_specs=[pl.BlockSpec(memory_space=pltpu.MemorySpace.VMEM)] * 4,
        out_specs=pl.BlockSpec(memory_space=pltpu.MemorySpace.VMEM),
        cost_estimate=pl.CostEstimate(
            flops=2 * cout * KH * KW * cin_pad * cols,
            transcendentals=cout,
            bytes_accessed=bytes_accessed),
    )(x_flat, w9, pvec, maskv)

    # (Cout, COLS) -> drop halo/pad columns -> (N, Cout, H, W)
    out = (out_t[:, :cols_raw]
           .reshape(cout, n, hp, wp)[:, :, :h, :w]
           .transpose(1, 0, 2, 3))
    return out


def _reference(x_nchw, weight, bias, gamma, beta):
    """Pure-JAX f32 reference for validation."""
    y = jax.lax.conv_general_dilated(
        x_nchw.astype(jnp.float32), weight.astype(jnp.float32),
        window_strides=(1, 1), padding=((1, 1), (1, 1)),
        dimension_numbers=("NCHW", "OIHW", "NCHW"))
    y = y + bias[None, :, None, None]
    y = jnp.maximum(y, 0.0)
    mean = jnp.mean(y, axis=(0, 2, 3), keepdims=True)
    var = jnp.mean((y - mean) ** 2, axis=(0, 2, 3), keepdims=True)
    return (gamma[None, :, None, None] * (y - mean) * jax.lax.rsqrt(var + EPS)
            + beta[None, :, None, None])


if __name__ == "__main__":
    # small shapes consistent with CBA defaults: Cin=150, Cout=32, 3x3, pad=1
    N, CIN, COUT, H, W = 2, 150, 32, 16, 16

    key = jax.random.PRNGKey(0)
    k0, k1, k2, k3, k4 = jax.random.split(key, 5)
    x = jax.random.normal(k0, (N, CIN, H, W), jnp.float32)
    weight = 0.05 * jax.random.normal(k1, (COUT, CIN, KH, KW), jnp.float32)
    bias = 0.05 * jax.random.normal(k2, (COUT,), jnp.float32)
    gamma = 1.0 + 0.1 * jax.random.normal(k3, (COUT,), jnp.float32)
    beta = 0.1 * jax.random.normal(k4, (COUT,), jnp.float32)

    out = cba_forward(x, weight, bias, gamma, beta)
    jax.block_until_ready(out)

    ref = _reference(x, weight, bias, gamma, beta)
    assert out.shape == (N, COUT, H, W)
    # bf16 matmul operands with f32 accumulation: 2e-2 tolerance vs f32 reference
    assert jnp.allclose(out, ref, atol=2e-2, rtol=2e-2), "mismatch vs JAX reference"

    print("KERNEL_OK")
</pallas_src>

<mosaic_0001>
module attributes {stable_mosaic.version = 11 : i64} {
  func.func @_cba_kernel(%arg0: memref<160x768xbf16, #tpu.memory_space<vmem>>, %arg1: memref<9x32x160xbf16, #tpu.memory_space<vmem>>, %arg2: memref<32x3xf32, #tpu.memory_space<vmem>>, %arg3: memref<1x768xf32, #tpu.memory_space<vmem>>, %arg4: memref<32x768xf32, #tpu.memory_space<vmem>>) attributes {dimension_semantics = [], scalar_prefetch = 0 : i64, scratch_operands = 0 : i64, tpu.core_type = #tpu.core_type<tc>} {
    %c0 = arith.constant 0 : index
    %c0_0 = arith.constant 0 : index
    %0 = vector.load %arg0[%c0, %c0_0] : memref<160x768xbf16, #tpu.memory_space<vmem>>, vector<160x768xbf16>
    %c0_1 = arith.constant 0 : index
    %c0_2 = arith.constant 0 : index
    %c0_3 = arith.constant 0 : index
    %1 = vector.load %arg1[%c0_1, %c0_2, %c0_3] : memref<9x32x160xbf16, #tpu.memory_space<vmem>>, vector<1x32x160xbf16>
    %2 = vector.shape_cast %1 : vector<1x32x160xbf16> to vector<32x160xbf16>
    %cst = arith.constant dense<0.000000e+00> : vector<32x768xf32>
    %3 = tpu.matmul %2, %0, %cst {dimension_numbers = #tpu.dot_dimension_numbers<[1], [0], [0], [1], [0, 0, 1, 1], [], []>} : vector<32x160xbf16>, vector<160x768xbf16>, vector<32x768xf32> -> vector<32x768xf32>
    %c1 = arith.constant 1 : index
    %c0_4 = arith.constant 0 : index
    %c0_5 = arith.constant 0 : index
    %4 = vector.load %arg1[%c1, %c0_4, %c0_5] : memref<9x32x160xbf16, #tpu.memory_space<vmem>>, vector<1x32x160xbf16>
    %5 = vector.shape_cast %4 : vector<1x32x160xbf16> to vector<32x160xbf16>
    %cst_6 = arith.constant dense<0.000000e+00> : vector<32x768xf32>
    %6 = tpu.matmul %5, %0, %cst_6 {dimension_numbers = #tpu.dot_dimension_numbers<[1], [0], [0], [1], [0, 0, 1, 1], [], []>} : vector<32x160xbf16>, vector<160x768xbf16>, vector<32x768xf32> -> vector<32x768xf32>
    %c767_i32 = arith.constant 767 : i32
    %7 = tpu.dynamic_rotate %6 by %c767_i32 dim 1 : vector<32x768xf32>, i32 -> vector<32x768xf32>
    %8 = arith.addf %3, %7 : vector<32x768xf32>
    %c2 = arith.constant 2 : index
    %c0_7 = arith.constant 0 : index
    %c0_8 = arith.constant 0 : index
    %9 = vector.load %arg1[%c2, %c0_7, %c0_8] : memref<9x32x160xbf16, #tpu.memory_space<vmem>>, vector<1x32x160xbf16>
    %10 = vector.shape_cast %9 : vector<1x32x160xbf16> to vector<32x160xbf16>
    %cst_9 = arith.constant dense<0.000000e+00> : vector<32x768xf32>
    %11 = tpu.matmul %10, %0, %cst_9 {dimension_numbers = #tpu.dot_dimension_numbers<[1], [0], [0], [1], [0, 0, 1, 1], [], []>} : vector<32x160xbf16>, vector<160x768xbf16>, vector<32x768xf32> -> vector<32x768xf32>
    %c766_i32 = arith.constant 766 : i32
    %12 = tpu.dynamic_rotate %11 by %c766_i32 dim 1 : vector<32x768xf32>, i32 -> vector<32x768xf32>
    %13 = arith.addf %8, %12 : vector<32x768xf32>
    %c3 = arith.constant 3 : index
    %c0_10 = arith.constant 0 : index
    %c0_11 = arith.constant 0 : index
    %14 = vector.load %arg1[%c3, %c0_10, %c0_11] : memref<9x32x160xbf16, #tpu.memory_space<vmem>>, vector<1x32x160xbf16>
    %15 = vector.shape_cast %14 : vector<1x32x160xbf16> to vector<32x160xbf16>
    %cst_12 = arith.constant dense<0.000000e+00> : vector<32x768xf32>
    %16 = tpu.matmul %15, %0, %cst_12 {dimension_numbers = #tpu.dot_dimension_numbers<[1], [0], [0], [1], [0, 0, 1, 1], [], []>} : vector<32x160xbf16>, vector<160x768xbf16>, vector<32x768xf32> -> vector<32x768xf32>
    %c750_i32 = arith.constant 750 : i32
    %17 = tpu.dynamic_rotate %16 by %c750_i32 dim 1 : vector<32x768xf32>, i32 -> vector<32x768xf32>
    %18 = arith.addf %13, %17 : vector<32x768xf32>
    %c4 = arith.constant 4 : index
    %c0_13 = arith.constant 0 : index
    %c0_14 = arith.constant 0 : index
    %19 = vector.load %arg1[%c4, %c0_13, %c0_14] : memref<9x32x160xbf16, #tpu.memory_space<vmem>>, vector<1x32x160xbf16>
    %20 = vector.shape_cast %19 : vector<1x32x160xbf16> to vector<32x160xbf16>
    %cst_15 = arith.constant dense<0.000000e+00> : vector<32x768xf32>
    %21 = tpu.matmul %20, %0, %cst_15 {dimension_numbers = #tpu.dot_dimension_numbers<[1], [0], [0], [1], [0, 0, 1, 1], [], []>} : vector<32x160xbf16>, vector<160x768xbf16>, vector<32x768xf32> -> vector<32x768xf32>
    %c749_i32 = arith.constant 749 : i32
    %22 = tpu.dynamic_rotate %21 by %c749_i32 dim 1 : vector<32x768xf32>, i32 -> vector<32x768xf32>
    %23 = arith.addf %18, %22 : vector<32x768xf32>
    %c5 = arith.constant 5 : index
    %c0_16 = arith.constant 0 : index
    %c0_17 = arith.constant 0 : index
    %24 = vector.load %arg1[%c5, %c0_16, %c0_17] : memref<9x32x160xbf16, #tpu.memory_space<vmem>>, vector<1x32x160xbf16>
    %25 = vector.shape_cast %24 : vector<1x32x160xbf16> to vector<32x160xbf16>
    %cst_18 = arith.constant dense<0.000000e+00> : vector<32x768xf32>
    %26 = tpu.matmul %25, %0, %cst_18 {dimension_numbers = #tpu.dot_dimension_numbers<[1], [0], [0], [1], [0, 0, 1, 1], [], []>} : vector<32x160xbf16>, vector<160x768xbf16>, vector<32x768xf32> -> vector<32x768xf32>
    %c748_i32 = arith.constant 748 : i32
    %27 = tpu.dynamic_rotate %26 by %c748_i32 dim 1 : vector<32x768xf32>, i32 -> vector<32x768xf32>
    %28 = arith.addf %23, %27 : vector<32x768xf32>
    %c6 = arith.constant 6 : index
    %c0_19 = arith.constant 0 : index
    %c0_20 = arith.constant 0 : index
    %29 = vector.load %arg1[%c6, %c0_19, %c0_20] : memref<9x32x160xbf16, #tpu.memory_space<vmem>>, vector<1x32x160xbf16>
    %30 = vector.shape_cast %29 : vector<1x32x160xbf16> to vector<32x160xbf16>
    %cst_21 = arith.constant dense<0.000000e+00> : vector<32x768xf32>
    %31 = tpu.matmul %30, %0, %cst_21 {dimension_numbers = #tpu.dot_dimension_numbers<[1], [0], [0], [1], [0, 0, 1, 1], [], []>} : vector<32x160xbf16>, vector<160x768xbf16>, vector<32x768xf32> -> vector<32x768xf32>
    %c732_i32 = arith.constant 732 : i32
    %32 = tpu.dynamic_rotate %31 by %c732_i32 dim 1 : vector<32x768xf32>, i32 -> vector<32x768xf32>
    %33 = arith.addf %28, %32 : vector<32x768xf32>
    %c7 = arith.constant 7 : index
    %c0_22 = arith.constant 0 : index
    %c0_23 = arith.constant 0 : index
    %34 = vector.load %arg1[%c7, %c0_22, %c0_23] : memref<9x32x160xbf16, #tpu.memory_space<vmem>>, vector<1x32x160xbf16>
    %35 = vector.shape_cast %34 : vector<1x32x160xbf16> to vector<32x160xbf16>
    %cst_24 = arith.constant dense<0.000000e+00> : vector<32x768xf32>
    %36 = tpu.matmul %35, %0, %cst_24 {dimension_numbers = #tpu.dot_dimension_numbers<[1], [0], [0], [1], [0, 0, 1, 1], [], []>} : vector<32x160xbf16>, vector<160x768xbf16>, vector<32x768xf32> -> vector<32x768xf32>
    %c731_i32 = arith.constant 731 : i32
    %37 = tpu.dynamic_rotate %36 by %c731_i32 dim 1 : vector<32x768xf32>, i32 -> vector<32x768xf32>
    %38 = arith.addf %33, %37 : vector<32x768xf32>
    %c8 = arith.constant 8 : index
    %c0_25 = arith.constant 0 : index
    %c0_26 = arith.constant 0 : index
    %39 = vector.load %arg1[%c8, %c0_25, %c0_26] : memref<9x32x160xbf16, #tpu.memory_space<vmem>>, vector<1x32x160xbf16>
    %40 = vector.shape_cast %39 : vector<1x32x160xbf16> to vector<32x160xbf16>
    %cst_27 = arith.constant dense<0.000000e+00> : vector<32x768xf32>
    %41 = tpu.matmul %40, %0, %cst_27 {dimension_numbers = #tpu.dot_dimension_numbers<[1], [0], [0], [1], [0, 0, 1, 1], [], []>} : vector<32x160xbf16>, vector<160x768xbf16>, vector<32x768xf32> -> vector<32x768xf32>
    %c730_i32 = arith.constant 730 : i32
    %42 = tpu.dynamic_rotate %41 by %c730_i32 dim 1 : vector<32x768xf32>, i32 -> vector<32x768xf32>
    %43 = arith.addf %38, %42 : vector<32x768xf32>
    %c0_28 = arith.constant 0 : index
    %c0_29 = arith.constant 0 : index
    %44 = vector.load %arg2[%c0_28, %c0_29] : memref<32x3xf32, #tpu.memory_space<vmem>>, vector<32x1xf32>
    %c0_30 = arith.constant 0 : index
    %c1_31 = arith.constant 1 : index
    %45 = vector.load %arg2[%c0_30, %c1_31] : memref<32x3xf32, #tpu.memory_space<vmem>>, vector<32x1xf32>
    %c0_32 = arith.constant 0 : index
    %c2_33 = arith.constant 2 : index
    %46 = vector.load %arg2[%c0_32, %c2_33] : memref<32x3xf32, #tpu.memory_space<vmem>>, vector<32x1xf32>
    %47 = vector.broadcast %44 : vector<32x1xf32> to vector<32x768xf32>
    %48 = arith.addf %43, %47 : vector<32x768xf32>
    %cst_34 = arith.constant 0.000000e+00 : f32
    %49 = vector.broadcast %cst_34 : f32 to vector<32x768xf32>
    %50 = arith.maximumf %48, %49 : vector<32x768xf32>
    %c0_35 = arith.constant 0 : index
    %c0_36 = arith.constant 0 : index
    %51 = vector.load %arg3[%c0_35, %c0_36] : memref<1x768xf32, #tpu.memory_space<vmem>>, vector<1x768xf32>
    %52 = vector.broadcast %51 : vector<1x768xf32> to vector<32x768xf32>
    %53 = arith.mulf %50, %52 : vector<32x768xf32>
    %cst_37 = arith.constant dense<0.000000e+00> : vector<32xf32>
    %54 = vector.multi_reduction <add>, %53, %cst_37 [1] : vector<32x768xf32> to vector<32xf32>
    %55 = vector.shape_cast %54 : vector<32xf32> to vector<32x1xf32>
    %56 = arith.mulf %53, %53 : vector<32x768xf32>
    %cst_38 = arith.constant dense<0.000000e+00> : vector<32xf32>
    %57 = vector.multi_reduction <add>, %56, %cst_38 [1] : vector<32x768xf32> to vector<32xf32>
    %58 = vector.shape_cast %57 : vector<32xf32> to vector<32x1xf32>
    %cst_39 = arith.constant 0.001953125 : f32
    %59 = vector.broadcast %cst_39 : f32 to vector<32x1xf32>
    %60 = arith.mulf %55, %59 : vector<32x1xf32>
    %cst_40 = arith.constant 0.001953125 : f32
    %61 = vector.broadcast %cst_40 : f32 to vector<32x1xf32>
    %62 = arith.mulf %58, %61 : vector<32x1xf32>
    %63 = arith.mulf %60, %60 : vector<32x1xf32>
    %64 = arith.subf %62, %63 : vector<32x1xf32>
    %cst_41 = arith.constant 0.000000e+00 : f32
    %65 = vector.broadcast %cst_41 : f32 to vector<32x1xf32>
    %66 = arith.maximumf %64, %65 : vector<32x1xf32>
    %cst_42 = arith.constant 9.99999974E-6 : f32
    %67 = vector.broadcast %cst_42 : f32 to vector<32x1xf32>
    %68 = arith.addf %66, %67 : vector<32x1xf32>
    %69 = math.rsqrt %68 : vector<32x1xf32>
    %70 = arith.mulf %69, %45 : vector<32x1xf32>
    %71 = vector.broadcast %60 : vector<32x1xf32> to vector<32x768xf32>
    %72 = arith.subf %50, %71 : vector<32x768xf32>
    %73 = vector.broadcast %70 : vector<32x1xf32> to vector<32x768xf32>
    %74 = arith.mulf %72, %73 : vector<32x768xf32>
    %75 = vector.broadcast %46 : vector<32x1xf32> to vector<32x768xf32>
    %76 = arith.addf %74, %75 : vector<32x768xf32>
    %c0_43 = arith.constant 0 : index
    %c0_44 = arith.constant 0 : index
    %77 = vector.load %arg4[%c0_43, %c0_44] : memref<32x768xf32, #tpu.memory_space<vmem>>, vector<32x768xf32>
    tpu.vector_store %arg4[%c0_43, %c0_44], %76 {strides = array<i32>} : memref<32x768xf32, #tpu.memory_space<vmem>>, vector<32x768xf32>,
    return
  }
}

</mosaic_0001>

<llo_original>
// kernel: cba_forward.1
$region0: #{cba_forward.1}
  #allocation0 [shape = 'u32[]', space=smem, size = 0x4, offset = 0x4, fixed_abs, tag = 'smem constant byte address 0x4 - core index']
  #allocation1 [shape = 'u32[144,128]{1,0:T(1,128)}', space=vmem, size = 0x12000, scoped, tag = 'internal scratch']
  %s0 = inlined_call_operand.vmem [shape: bf16[160,768], index: 0, kind: input, shape index: {}]
  %s1 = inlined_call_operand.vmem [shape: bf16[9,32,160], index: 1, kind: input, shape index: {}]
  %s2 = inlined_call_operand.vmem [shape: f32[32,3], index: 2, kind: input, shape index: {}]
  %s3 = inlined_call_operand.vmem [shape: f32[1,768], index: 3, kind: input, shape index: {}]
  %s4 = inlined_call_operand.vmem [shape: f32[32,768], index: 4, kind: output, shape index: {}]
  %s5 = sld [smem:[#allocation0]]
  $region26: #{cba_forward.1} parent=0
    _
  %s7 = ssub.s32 1, %s5
  %s8 = scalar_select 0, %s7, %s5
  // Predicated region
  $region2: #{cba_forward.1} parent=0 // pred_check
    _
  $region3: #{cba_forward.1} parent=0 // pred_check_branch
    %10 = sbr.rel (0) target = $region5
  $region4: #{cba_forward.1} parent=0 // pred_region
    _
  $region5: #{cba_forward.1} parent=0 // pred_fallthru
    _
  // Predicated region
  $region6: #{cba_forward.1} parent=0 // pred_check
    _
  $region7: #{cba_forward.1} parent=0 // pred_check_branch
    %12 = sbr.rel (0) target = $region9
  $region8: #{cba_forward.1} parent=0 // pred_region
    _
  $region9: #{cba_forward.1} parent=0 // pred_fallthru
    _
  // Predicated region
  $region10: #{cba_forward.1} parent=0 // pred_check
    _
  $region11: #{cba_forward.1} parent=0 // pred_check_branch
    %14 = sbr.rel (0) target = $region13
  $region12: #{cba_forward.1} parent=0 // pred_region
    _
  $region13: #{cba_forward.1} parent=0 // pred_fallthru
    _
  // Predicated region
  $region14: #{cba_forward.1} parent=0 // pred_check
    _
  $region15: #{cba_forward.1} parent=0 // pred_check_branch
    %16 = sbr.rel (0) target = $region17
  $region16: #{cba_forward.1} parent=0 // pred_region
    _
  $region17: #{cba_forward.1} parent=0 // pred_fallthru
    _
  %v18 = vld [vmem:[%s0] sm:$0xff]
  %v19 = vld [vmem:[%s0 + $0x8] sm:$0xff]
  %v20 = vld [vmem:[%s0 + $0x10] sm:$0xff]
  %v21 = vld [vmem:[%s0 + $0x18] sm:$0xff]
  %v22 = vld [vmem:[%s0 + $0x20] sm:$0xff]
  %v23 = vld [vmem:[%s0 + $0x28] sm:$0xff]
  %v24 = vld [vmem:[%s0 + $0x30] sm:$0xff]
  %v25 = vld [vmem:[%s0 + $0x38] sm:$0xff]
  %v26 = vld [vmem:[%s0 + $0x40] sm:$0xff]
  %v27 = vld [vmem:[%s0 + $0x48] sm:$0xff]
  %v28 = vld [vmem:[%s0 + $0x50] sm:$0xff]
  %v29 = vld [vmem:[%s0 + $0x58] sm:$0xff]
  %v30 = vld [vmem:[%s0 + $0x60] sm:$0xff]
  %v31 = vld [vmem:[%s0 + $0x68] sm:$0xff]
  %v32 = vld [vmem:[%s0 + $0x70] sm:$0xff]
  %v33 = vld [vmem:[%s0 + $0x78] sm:$0xff]
  %v34 = vld [vmem:[%s0 + $0x80] sm:$0xff]
  %v35 = vld [vmem:[%s0 + $0x88] sm:$0xff]
  %v36 = vld [vmem:[%s0 + $0x90] sm:$0xff]
  %v37 = vld [vmem:[%s0 + $0x98] sm:$0xff]
  %v38 = vld [vmem:[%s0 + $0xa0] sm:$0xff]
  %v39 = vld [vmem:[%s0 + $0xa8] sm:$0xff]
  %v40 = vld [vmem:[%s0 + $0xb0] sm:$0xff]
  %v41 = vld [vmem:[%s0 + $0xb8] sm:$0xff]
  %v42 = vld [vmem:[%s0 + $0xc0] sm:$0xff]
  %v43 = vld [vmem:[%s0 + $0xc8] sm:$0xff]
  %v44 = vld [vmem:[%s0 + $0xd0] sm:$0xff]
  %v45 = vld [vmem:[%s0 + $0xd8] sm:$0xff]
  %v46 = vld [vmem:[%s0 + $0xe0] sm:$0xff]
  %v47 = vld [vmem:[%s0 + $0xe8] sm:$0xff]
  %v48 = vld [vmem:[%s0 + $0xf0] sm:$0xff]
  %v49 = vld [vmem:[%s0 + $0xf8] sm:$0xff]
  %v50 = vld [vmem:[%s0 + $0x100] sm:$0xff]
  %v51 = vld [vmem:[%s0 + $0x108] sm:$0xff]
  %v52 = vld [vmem:[%s0 + $0x110] sm:$0xff]
  %v53 = vld [vmem:[%s0 + $0x118] sm:$0xff]
  %v54 = vld [vmem:[%s0 + $0x120] sm:$0xff]
  %v55 = vld [vmem:[%s0 + $0x128] sm:$0xff]
  %v56 = vld [vmem:[%s0 + $0x130] sm:$0xff]
  %v57 = vld [vmem:[%s0 + $0x138] sm:$0xff]
  %v58 = vld [vmem:[%s0 + $0x140] sm:$0xff]
  %v59 = vld [vmem:[%s0 + $0x148] sm:$0xff]
  %v60 = vld [vmem:[%s0 + $0x150] sm:$0xff]
  %v61 = vld [vmem:[%s0 + $0x158] sm:$0xff]
  %v62 = vld [vmem:[%s0 + $0x160] sm:$0xff]
  %v63 = vld [vmem:[%s0 + $0x168] sm:$0xff]
  %v64 = vld [vmem:[%s0 + $0x170] sm:$0xff]
  %v65 = vld [vmem:[%s0 + $0x178] sm:$0xff]
  %v66 = vld [vmem:[%s0 + $0x180] sm:$0xff]
  %v67 = vld [vmem:[%s0 + $0x188] sm:$0xff]
  %v68 = vld [vmem:[%s0 + $0x190] sm:$0xff]
  %v69 = vld [vmem:[%s0 + $0x198] sm:$0xff]
  %v70 = vld [vmem:[%s0 + $0x1a0] sm:$0xff]
  %v71 = vld [vmem:[%s0 + $0x1a8] sm:$0xff]
  %v72 = vld [vmem:[%s0 + $0x1b0] sm:$0xff]
  %v73 = vld [vmem:[%s0 + $0x1b8] sm:$0xff]
  %v74 = vld [vmem:[%s0 + $0x1c0] sm:$0xff]
  %v75 = vld [vmem:[%s0 + $0x1c8] sm:$0xff]
  %v76 = vld [vmem:[%s0 + $0x1d0] sm:$0xff]
  %v77 = vld [vmem:[%s0 + $0x1d8] sm:$0xff]
  %v78 = vld [vmem:[%s1] sm:$0xff]
  %v79 = vld [vmem:[%s1 + $0x8] sm:$0xff]
  %v80 = vld [vmem:[%s1 + $0x10] sm:$0xff]
  %v81 = vld [vmem:[%s1 + $0x18] sm:$0xff]
  %s82 = scalar_lea.vmem %s1, 32
  %v83 = vld [vmem:[%s82] sm:$0xff]
  %v84 = vld [vmem:[%s82 + $0x8] sm:$0xff]
  %v85 = vld [vmem:[%s82 + $0x10] sm:$0xff]
  %v86 = vld [vmem:[%s82 + $0x18] sm:$0xff]
  %v91 = vunpack.c.l.b16 %v83
  %v92 = vunpack.c.h.b16 %v83
  %v93 = vunpack.c.l.b16 %v84
  %v94 = vunpack.c.h.b16 %v84
  %v95 = vunpack.c.l.b16 %v85
  %v96 = vunpack.c.h.b16 %v85
  %v97 = vunpack.c.l.b16 %v86
  %v98 = vunpack.c.h.b16 %v86
  %v99 = vpack.c.b16 %v93, %v91
  %v100 = vpack.c.b16 %v94, %v92
  %v101 = vpack.c.b16 %v97, %v95
  %v102 = vpack.c.b16 %v98, %v96
  %v165 = vunpack.c.l.b16 %v18
  %v166 = vunpack.c.h.b16 %v18
  %v167 = vunpack.c.l.b16 %v19
  %v168 = vunpack.c.h.b16 %v19
  %v169 = vunpack.c.l.b16 %v20
  %v170 = vunpack.c.h.b16 %v20
  %v171 = vunpack.c.l.b16 %v21
  %v172 = vunpack.c.h.b16 %v21
  %v173 = vunpack.c.l.b16 %v22
  %v174 = vunpack.c.h.b16 %v22
  %v175 = vunpack.c.l.b16 %v23
  %v176 = vunpack.c.h.b16 %v23
  %v177 = vunpack.c.l.b16 %v24
  %v178 = vunpack.c.h.b16 %v24
  %v179 = vunpack.c.l.b16 %v25
  %v180 = vunpack.c.h.b16 %v25
  %v181 = vunpack.c.l.b16 %v26
  %v182 = vunpack.c.h.b16 %v26
  %v183 = vunpack.c.l.b16 %v27
  %v184 = vunpack.c.h.b16 %v27
  %v185 = vunpack.c.l.b16 %v28
  %v186 = vunpack.c.h.b16 %v28
  %v187 = vunpack.c.l.b16 %v29
  %v188 = vunpack.c.h.b16 %v29
  %v189 = vunpack.c.l.b16 %v30
  %v190 = vunpack.c.h.b16 %v30
  %v191 = vunpack.c.l.b16 %v31
  %v192 = vunpack.c.h.b16 %v31
  %v193 = vunpack.c.l.b16 %v32
  %v194 = vunpack.c.h.b16 %v32
  %v195 = vunpack.c.l.b16 %v33
  %v196 = vunpack.c.h.b16 %v33
  %v197 = vunpack.c.l.b16 %v34
  %v198 = vunpack.c.h.b16 %v34
  %v199 = vunpack.c.l.b16 %v35
  %v200 = vunpack.c.h.b16 %v35
  %v201 = vunpack.c.l.b16 %v36
  %v202 = vunpack.c.h.b16 %v36
  %v203 = vunpack.c.l.b16 %v37
  %v204 = vunpack.c.h.b16 %v37
  %v205 = vunpack.c.l.b16 %v38
  %v206 = vunpack.c.h.b16 %v38
  %v207 = vunpack.c.l.b16 %v39
  %v208 = vunpack.c.h.b16 %v39
  %v209 = vunpack.c.l.b16 %v40
  %v210 = vunpack.c.h.b16 %v40
  %v211 = vunpack.c.l.b16 %v41
  %v212 = vunpack.c.h.b16 %v41
  %v213 = vunpack.c.l.b16 %v42
  %v214 = vunpack.c.h.b16 %v42
  %v215 = vunpack.c.l.b16 %v43
  %v216 = vunpack.c.h.b16 %v43
  %v217 = vunpack.c.l.b16 %v44
  %v218 = vunpack.c.h.b16 %v44
  %v219 = vunpack.c.l.b16 %v45
  %v220 = vunpack.c.h.b16 %v45
  %v221 = vunpack.c.l.b16 %v46
  %v222 = vunpack.c.h.b16 %v46
  %v223 = vunpack.c.l.b16 %v47
  %v224 = vunpack.c.h.b16 %v47
  %v225 = vunpack.c.l.b16 %v48
  %v226 = vunpack.c.h.b16 %v48
  %v227 = vunpack.c.l.b16 %v49
  %v228 = vunpack.c.h.b16 %v49
  %v229 = vunpack.c.l.b16 %v50
  %v230 = vunpack.c.h.b16 %v50
  %v231 = vunpack.c.l.b16 %v51
  %v232 = vunpack.c.h.b16 %v51
  %v233 = vunpack.c.l.b16 %v52
  %v234 = vunpack.c.h.b16 %v52
  %v235 = vunpack.c.l.b16 %v53
  %v236 = vunpack.c.h.b16 %v53
  %v237 = vunpack.c.l.b16 %v54
  %v238 = vunpack.c.h.b16 %v54
  %v239 = vunpack.c.l.b16 %v55
  %v240 = vunpack.c.h.b16 %v55
  %v241 = vunpack.c.l.b16 %v56
  %v242 = vunpack.c.h.b16 %v56
  %v243 = vunpack.c.l.b16 %v57
  %v244 = vunpack.c.h.b16 %v57
  %v245 = vunpack.c.l.b16 %v58
  %v246 = vunpack.c.h.b16 %v58
  %v247 = vunpack.c.l.b16 %v59
  %v248 = vunpack.c.h.b16 %v59
  %v249 = vunpack.c.l.b16 %v60
  %v250 = vunpack.c.h.b16 %v60
  %v251 = vunpack.c.l.b16 %v61
  %v252 = vunpack.c.h.b16 %v61
  %v253 = vunpack.c.l.b16 %v62
  %v254 = vunpack.c.h.b16 %v62
  %v255 = vunpack.c.l.b16 %v63
  %v256 = vunpack.c.h.b16 %v63
  %v257 = vunpack.c.l.b16 %v64
  %v258 = vunpack.c.h.b16 %v64
  %v259 = vunpack.c.l.b16 %v65
  %v260 = vunpack.c.h.b16 %v65
  %v261 = vunpack.c.l.b16 %v66
  %v262 = vunpack.c.h.b16 %v66
  %v263 = vunpack.c.l.b16 %v67
  %v264 = vunpack.c.h.b16 %v67
  %v265 = vunpack.c.l.b16 %v68
  %v266 = vunpack.c.h.b16 %v68
  %v267 = vunpack.c.l.b16 %v69
  %v268 = vunpack.c.h.b16 %v69
  %v269 = vunpack.c.l.b16 %v70
  %v270 = vunpack.c.h.b16 %v70
  %v271 = vunpack.c.l.b16 %v71
  %v272 = vunpack.c.h.b16 %v71
  %v273 = vunpack.c.l.b16 %v72
  %v274 = vunpack.c.h.b16 %v72
  %v275 = vunpack.c.l.b16 %v73
  %v276 = vunpack.c.h.b16 %v73
  %v277 = vunpack.c.l.b16 %v74
  %v278 = vunpack.c.h.b16 %v74
  %v279 = vunpack.c.l.b16 %v75
  %v280 = vunpack.c.h.b16 %v75
  %v281 = vunpack.c.l.b16 %v76
  %v282 = vunpack.c.h.b16 %v76
  %v283 = vunpack.c.l.b16 %v77
  %v284 = vunpack.c.h.b16 %v77
  %v285 = vpack.c.b16 %v171, %v165
  %v286 = vpack.c.b16 %v172, %v166
  %v287 = vpack.c.b16 %v173, %v167
  %v288 = vpack.c.b16 %v174, %v168
  %v289 = vpack.c.b16 %v175, %v169
  %v290 = vpack.c.b16 %v176, %v170
  %v291 = vpack.c.b16 %v183, %v177
  %v292 = vpack.c.b16 %v184, %v178
  %v293 = vpack.c.b16 %v185, %v179
  %v294 = vpack.c.b16 %v186, %v180
  %v295 = vpack.c.b16 %v187, %v181
  %v296 = vpack.c.b16 %v188, %v182
  %v297 = vpack.c.b16 %v195, %v189
  %v298 = vpack.c.b16 %v196, %v190
  %v299 = vpack.c.b16 %v197, %v191
  %v300 = vpack.c.b16 %v198, %v192
  %v301 = vpack.c.b16 %v199, %v193
  %v302 = vpack.c.b16 %v200, %v194
  %v303 = vpack.c.b16 %v207, %v201
  %v304 = vpack.c.b16 %v208, %v202
  %v305 = vpack.c.b16 %v209, %v203
  %v306 = vpack.c.b16 %v210, %v204
  %v307 = vpack.c.b16 %v211, %v205
  %v308 = vpack.c.b16 %v212, %v206
  %v309 = vpack.c.b16 %v219, %v213
  %v310 = vpack.c.b16 %v220, %v214
  %v311 = vpack.c.b16 %v221, %v215
  %v312 = vpack.c.b16 %v222, %v216
  %v313 = vpack.c.b16 %v223, %v217
  %v314 = vpack.c.b16 %v224, %v218
  %v315 = vpack.c.b16 %v231, %v225
  %v316 = vpack.c.b16 %v232, %v226
  %v317 = vpack.c.b16 %v233, %v227
  %v318 = vpack.c.b16 %v234, %v228
  %v319 = vpack.c.b16 %v235, %v229
  %v320 = vpack.c.b16 %v236, %v230
  %v321 = vpack.c.b16 %v243, %v237
  %v322 = vpack.c.b16 %v244, %v238
  %v323 = vpack.c.b16 %v245, %v239
  %v324 = vpack.c.b16 %v246, %v240
  %v325 = vpack.c.b16 %v247, %v241
  %v326 = vpack.c.b16 %v248, %v242
  %v327 = vpack.c.b16 %v255, %v249
  %v328 = vpack.c.b16 %v256, %v250
  %v329 = vpack.c.b16 %v257, %v251
  %v330 = vpack.c.b16 %v258, %v252
  %v331 = vpack.c.b16 %v259, %v253
  %v332 = vpack.c.b16 %v260, %v254
  %v333 = vpack.c.b16 %v267, %v261
  %v334 = vpack.c.b16 %v268, %v262
  %v335 = vpack.c.b16 %v269, %v263
  %v336 = vpack.c.b16 %v270, %v264
  %v337 = vpack.c.b16 %v271, %v265
  %v338 = vpack.c.b16 %v272, %v266
  %v339 = vpack.c.b16 %v279, %v273
  %v340 = vpack.c.b16 %v280, %v274
  %v341 = vpack.c.b16 %v281, %v275
  %v342 = vpack.c.b16 %v282, %v276
  %v343 = vpack.c.b16 %v283, %v277
  %v344 = vpack.c.b16 %v284, %v278
  %vm405 = vcmask 261120
  %v407 = vsel %vm405, %v100, 0
  %v410 = vsel %vm405, %v102, 0
  %412 = vmatprep.subr.bf16.mxu0 %v328
  %413 = vmatpush1.bf16.msra.mxu0 %v327
  %414 = vmatprep.subr.bf16.mxu0 %v322
  %415 = vmatpush1.bf16.msra.mxu0 %v321
  %416 = vmatprep.subr.bf16.mxu0 %v316
  %417 = vmatpush1.bf16.msra.mxu0 %v315
  %418 = vmatprep.subr.bf16.mxu0 %v310
  %419 = vmatpush1.bf16.msra.mxu0 %v309
  %420 = vmatprep.subr.bf16.mxu0 %v304
  %421 = vmatpush1.bf16.msra.mxu0 %v303
  %422 = vmatprep.subr.bf16.mxu0 %v298
  %423 = vmatpush1.bf16.msra.mxu0 %v297
  %424 = vmatprep.subr.bf16.mxu0 %v292
  %425 = vmatpush1.bf16.msra.mxu0 %v291
  %426 = vmatprep.subr.bf16.mxu0 %v286
  %427 = vmatpush1.bf16.msra.mxu0 %v285
  %428 = vmatprep.subr.bf16.mxu0 0
  %429 = vmatpush2.bf16.msra.mxu0 0
  %430 = vmatprep.subr.bf16.mxu0 0
  %431 = vmatpush2.bf16.msra.mxu0 0
  %432 = vmatprep.subr.bf16.mxu0 0
  %433 = vmatpush2.bf16.msra.mxu0 0
  %434 = vmatprep.subr.bf16.mxu0 0
  %435 = vmatpush2.bf16.msra.mxu0 0
  %436 = vmatprep.subr.bf16.mxu0 0
  %437 = vmatpush2.bf16.msra.mxu0 0
  %438 = vmatprep.subr.bf16.mxu0 0
  %439 = vmatpush2.bf16.msra.mxu0 0
  %440 = vmatprep.subr.bf16.mxu0 %v340
  %441 = vmatpush2.bf16.msra.mxu0 %v339
  %442 = vmatprep.subr.bf16.mxu0 %v334
  %443 = vmatpush2.bf16.msra.mxu0 %v333
  %444 = vmatprep.mubr.bf16.mxu0 %v407
  %445 = vmatmul.mubr.bf16.gmra.mxu0 %v99
  %v446 = vpop.f32.mrf.mxu0
  %v447 = vadd.f32 0.0, %v446
  %v448 = vpop.f32.mrf.mxu0
  %v449 = vadd.f32 0.0, %v448
  %v450 = vpop.f32.mrf.mxu0
  %v451 = vadd.f32 0.0, %v450
  %v452 = vpop.f32.mrf.mxu0
  %v453 = vadd.f32 0.0, %v452
  %454 = vmatprep.mubr.bf16.mxu0 %v410
  %455 = vmatmul.mubr.bf16.gmra.mxu0 %v101
  %v456 = vpop.f32.mrf.mxu0
  %v457 = vadd.f32 0.0, %v456
  %v458 = vpop.f32.mrf.mxu0
  %v459 = vadd.f32 0.0, %v458
  %v460 = vpop.f32.mrf.mxu0
  %v461 = vadd.f32 0.0, %v460
  %v462 = vpop.f32.mrf.mxu0
  %v463 = vadd.f32 0.0, %v462
  %464 = vdwg.mxu0
  %465 = vmatprep.subr.bf16.mxu0 %v330
  %466 = vmatpush1.bf16.msra.mxu0 %v329
  %467 = vmatprep.subr.bf16.mxu0 %v324
  %468 = vmatpush1.bf16.msra.mxu0 %v323
  %469 = vmatprep.subr.bf16.mxu0 %v318
  %470 = vmatpush1.bf16.msra.mxu0 %v317
  %471 = vmatprep.subr.bf16.mxu0 %v312
  %472 = vmatpush1.bf16.msra.mxu0 %v311
  %473 = vmatprep.subr.bf16.mxu0 %v306
  %474 = vmatpush1.bf16.msra.mxu0 %v305
  %475 = vmatprep.subr.bf16.mxu0 %v300
  %476 = vmatpush1.bf16.msra.mxu0 %v299
  %477 = vmatprep.subr.bf16.mxu0 %v294
  %478 = vmatpush1.bf16.msra.mxu0 %v293
  %479 = vmatprep.subr.bf16.mxu0 %v288
  %480 = vmatpush1.bf16.msra.mxu0 %v287
  %481 = vmatprep.subr.bf16.mxu0 0
  %482 = vmatpush2.bf16.msra.mxu0 0
  %483 = vmatprep.subr.bf16.mxu0 0
  %484 = vmatpush2.bf16.msra.mxu0 0
  %485 = vmatprep.subr.bf16.mxu0 0
  %486 = vmatpush2.bf16.msra.mxu0 0
  %487 = vmatprep.subr.bf16.mxu0 0
  %488 = vmatpush2.bf16.msra.mxu0 0
  %489 = vmatprep.subr.bf16.mxu0 0
  %490 = vmatpush2.bf16.msra.mxu0 0
  %491 = vmatprep.subr.bf16.mxu0 0
  %492 = vmatpush2.bf16.msra.mxu0 0
  %493 = vmatprep.subr.bf16.mxu0 %v342
  %494 = vmatpush2.bf16.msra.mxu0 %v341
  %495 = vmatprep.subr.bf16.mxu0 %v336
  %496 = vmatpush2.bf16.msra.mxu0 %v335
  %497 = vmatprep.mubr.bf16.mxu0 %v407
  %498 = vmatmul.mubr.bf16.gmra.mxu0 %v99
  %v499 = vpop.f32.mrf.mxu0
  %v500 = vadd.f32 0.0, %v499
  %v501 = vpop.f32.mrf.mxu0
  %v502 = vadd.f32 0.0, %v501
  %v503 = vpop.f32.mrf.mxu0
  %v504 = vadd.f32 0.0, %v503
  %v505 = vpop.f32.mrf.mxu0
  %v506 = vadd.f32 0.0, %v505
  %507 = vmatprep.mubr.bf16.mxu0 %v410
  %508 = vmatmul.mubr.bf16.gmra.mxu0 %v101
  %v509 = vpop.f32.mrf.mxu0
  %v510 = vadd.f32 0.0, %v509
  %v511 = vpop.f32.mrf.mxu0
  %v512 = vadd.f32 0.0, %v511
  %v513 = vpop.f32.mrf.mxu0
  %v514 = vadd.f32 0.0, %v513
  %v515 = vpop.f32.mrf.mxu0
  %v516 = vadd.f32 0.0, %v515
  %517 = vdwg.mxu0
  %518 = vmatprep.subr.bf16.mxu0 %v332
  %519 = vmatpush1.bf16.msra.mxu0 %v331
  %520 = vmatprep.subr.bf16.mxu0 %v326
  %521 = vmatpush1.bf16.msra.mxu0 %v325
  %522 = vmatprep.subr.bf16.mxu0 %v320
  %523 = vmatpush1.bf16.msra.mxu0 %v319
  %524 = vmatprep.subr.bf16.mxu0 %v314
  %525 = vmatpush1.bf16.msra.mxu0 %v313
  %526 = vmatprep.subr.bf16.mxu0 %v308
  %527 = vmatpush1.bf16.msra.mxu0 %v307
  %528 = vmatprep.subr.bf16.mxu0 %v302
  %529 = vmatpush1.bf16.msra.mxu0 %v301
  %530 = vmatprep.subr.bf16.mxu0 %v296
  %531 = vmatpush1.bf16.msra.mxu0 %v295
  %532 = vmatprep.subr.bf16.mxu0 %v290
  %533 = vmatpush1.bf16.msra.mxu0 %v289
  %534 = vmatprep.subr.bf16.mxu0 0
  %535 = vmatpush2.bf16.msra.mxu0 0
  %536 = vmatprep.subr.bf16.mxu0 0
  %537 = vmatpush2.bf16.msra.mxu0 0
  %538 = vmatprep.subr.bf16.mxu0 0
  %539 = vmatpush2.bf16.msra.mxu0 0
  %540 = vmatprep.subr.bf16.mxu0 0
  %541 = vmatpush2.bf16.msra.mxu0 0
  %542 = vmatprep.subr.bf16.mxu0 0
  %543 = vmatpush2.bf16.msra.mxu0 0
  %544 = vmatprep.subr.bf16.mxu0 0
  %545 = vmatpush2.bf16.msra.mxu0 0
  %546 = vmatprep.subr.bf16.mxu0 %v344
  %547 = vmatpush2.bf16.msra.mxu0 %v343
  %548 = vmatprep.subr.bf16.mxu0 %v338
  %549 = vmatpush2.bf16.msra.mxu0 %v337
  %550 = vmatprep.mubr.bf16.mxu0 %v407
  %551 = vmatmul.mubr.bf16.gmra.mxu0 %v99
  %v552 = vpop.f32.mrf.mxu0
  %v553 = vadd.f32 0.0, %v552
  %v554 = vpop.f32.mrf.mxu0
  %v555 = vadd.f32 0.0, %v554
  %v556 = vpop.f32.mrf.mxu0
  %v557 = vadd.f32 0.0, %v556
  %v558 = vpop.f32.mrf.mxu0
  %v559 = vadd.f32 0.0, %v558
  %560 = vmatprep.mubr.bf16.mxu0 %v410
  %561 = vmatmul.mubr.bf16.gmra.mxu0 %v101
  %v562 = vpop.f32.mrf.mxu0
  %v563 = vadd.f32 0.0, %v562
  %v564 = vpop.f32.mrf.mxu0
  %v565 = vadd.f32 0.0, %v564
  %v566 = vpop.f32.mrf.mxu0
  %v567 = vadd.f32 0.0, %v566
  %v568 = vpop.f32.mrf.mxu0
  %v569 = vadd.f32 0.0, %v568
  %570 = vdwg.mxu0
  %571 = vrot.lane.b32.xlu0 %v447, 127
  %v572 = vpop.permute.xlu0 %571
  %573 = vrot.lane.b32.xlu0 %v451, 127
  %v574 = vpop.permute.xlu0 %573
  %575 = vrot.lane.b32.xlu0 %v457, 127
  %v576 = vpop.permute.xlu0 %575
  %577 = vrot.lane.b32.xlu0 %v461, 127
  %v578 = vpop.permute.xlu0 %577
  %579 = vrot.lane.b32.xlu0 %v449, 127
  %v580 = vpop.permute.xlu0 %579
  %581 = vrot.lane.b32.xlu0 %v453, 127
  %v582 = vpop.permute.xlu0 %581
  %583 = vrot.lane.b32.xlu0 %v459, 127
  %v584 = vpop.permute.xlu0 %583
  %585 = vrot.lane.b32.xlu0 %v463, 127
  %v586 = vpop.permute.xlu0 %585
  %587 = vrot.lane.b32.xlu0 %v500, 127
  %v588 = vpop.permute.xlu0 %587
  %589 = vrot.lane.b32.xlu0 %v504, 127
  %v590 = vpop.permute.xlu0 %589
  %591 = vrot.lane.b32.xlu0 %v510, 127
  %v592 = vpop.permute.xlu0 %591
  %593 = vrot.lane.b32.xlu0 %v514, 127
  %v594 = vpop.permute.xlu0 %593
  %595 = vrot.lane.b32.xlu0 %v502, 127
  %v596 = vpop.permute.xlu0 %595
  %597 = vrot.lane.b32.xlu0 %v506, 127
  %v598 = vpop.permute.xlu0 %597
  %599 = vrot.lane.b32.xlu0 %v512, 127
  %v600 = vpop.permute.xlu0 %599
  %601 = vrot.lane.b32.xlu0 %v516, 127
  %v602 = vpop.permute.xlu0 %601
  %603 = vrot.lane.b32.xlu0 %v553, 127
  %v604 = vpop.permute.xlu0 %603
  %605 = vrot.lane.b32.xlu0 %v557, 127
  %v606 = vpop.permute.xlu0 %605
  %607 = vrot.lane.b32.xlu0 %v563, 127
  %v608 = vpop.permute.xlu0 %607
  %609 = vrot.lane.b32.xlu0 %v567, 127
  %v610 = vpop.permute.xlu0 %609
  %611 = vrot.lane.b32.xlu0 %v555, 127
  %v612 = vpop.permute.xlu0 %611
  %613 = vrot.lane.b32.xlu0 %v559, 127
  %v614 = vpop.permute.xlu0 %613
  %615 = vrot.lane.b32.xlu0 %v565, 127
  %v616 = vpop.permute.xlu0 %615
  %617 = vrot.lane.b32.xlu0 %v569, 127
  %v618 = vpop.permute.xlu0 %617
  %v619 = vlaneseq
  %v620 = vand.u32 %v619, 127
  %vm621 = vcmp.lt.s32.totalorder %v620, 127
  %v622 = vsel %vm621, %v604, %v612
  %v623 = vsel %vm621, %v606, %v614
  %v624 = vsel %vm621, %v608, %v616
  %v625 = vsel %vm621, %v610, %v618
  %v626 = vsel %vm621, %v596, %v604
  %v627 = vsel %vm621, %v598, %v606
  %v628 = vsel %vm621, %v600, %v608
  %v629 = vsel %vm621, %v602, %v610
  %v630 = vsel %vm621, %v588, %v596
  %v631 = vsel %vm621, %v590, %v598
  %v632 = vsel %vm621, %v592, %v600
  %v633 = vsel %vm621, %v594, %v602
  %v634 = vsel %vm621, %v580, %v588
  %v635 = vsel %vm621, %v582, %v590
  %v636 = vsel %vm621, %v584, %v592
  %v637 = vsel %vm621, %v586, %v594
  %v638 = vsel %vm621, %v572, %v580
  %v639 = vsel %vm621, %v574, %v582
  %v640 = vsel %vm621, %v576, %v584
  %v641 = vsel %vm621, %v578, %v586
  %v642 = vsel %vm621, %v612, %v572
  %v643 = vsel %vm621, %v614, %v574
  %v644 = vsel %vm621, %v616, %v576
  %v645 = vsel %vm621, %v618, %v578
  %v650 = vunpack.c.l.b16 %v78
  %v651 = vunpack.c.h.b16 %v78
  %v652 = vunpack.c.l.b16 %v79
  %v653 = vunpack.c.h.b16 %v79
  %v654 = vunpack.c.l.b16 %v80
  %v655 = vunpack.c.h.b16 %v80
  %v656 = vunpack.c.l.b16 %v81
  %v657 = vunpack.c.h.b16 %v81
  %v658 = vpack.c.b16 %v652, %v650
  %v659 = vpack.c.b16 %v653, %v651
  %v660 = vpack.c.b16 %v656, %v654
  %v661 = vpack.c.b16 %v657, %v655
  %v665 = vsel %vm405, %v659, 0
  %v668 = vsel %vm405, %v661, 0
  %670 = vmatprep.subr.bf16.mxu0 %v328
  %671 = vmatpush1.bf16.msra.mxu0 %v327
  %672 = vmatprep.subr.bf16.mxu0 %v322
  %673 = vmatpush1.bf16.msra.mxu0 %v321
  %674 = vmatprep.subr.bf16.mxu0 %v316
  %675 = vmatpush1.bf16.msra.mxu0 %v315
  %676 = vmatprep.subr.bf16.mxu0 %v310
  %677 = vmatpush1.bf16.msra.mxu0 %v309
  %678 = vmatprep.subr.bf16.mxu0 %v304
  %679 = vmatpush1.bf16.msra.mxu0 %v303
  %680 = vmatprep.subr.bf16.mxu0 %v298
  %681 = vmatpush1.bf16.msra.mxu0 %v297
  %682 = vmatprep.subr.bf16.mxu0 %v292
  %683 = vmatpush1.bf16.msra.mxu0 %v291
  %684 = vmatprep.subr.bf16.mxu0 %v286
  %685 = vmatpush1.bf16.msra.mxu0 %v285
  %686 = vmatprep.subr.bf16.mxu0 0
  %687 = vmatpush2.bf16.msra.mxu0 0
  %688 = vmatprep.subr.bf16.mxu0 0
  %689 = vmatpush2.bf16.msra.mxu0 0
  %690 = vmatprep.subr.bf16.mxu0 0
  %691 = vmatpush2.bf16.msra.mxu0 0
  %692 = vmatprep.subr.bf16.mxu0 0
  %693 = vmatpush2.bf16.msra.mxu0 0
  %694 = vmatprep.subr.bf16.mxu0 0
  %695 = vmatpush2.bf16.msra.mxu0 0
  %696 = vmatprep.subr.bf16.mxu0 0
  %697 = vmatpush2.bf16.msra.mxu0 0
  %698 = vmatprep.subr.bf16.mxu0 %v340
  %699 = vmatpush2.bf16.msra.mxu0 %v339
  %700 = vmatprep.subr.bf16.mxu0 %v334
  %701 = vmatpush2.bf16.msra.mxu0 %v333
  %702 = vmatprep.mubr.bf16.mxu0 %v665
  %703 = vmatmul.mubr.bf16.gmra.mxu0 %v658
  %v704 = vpop.f32.mrf.mxu0
  %v705 = vadd.f32 %v638, %v704
  %v706 = vpop.f32.mrf.mxu0
  %v707 = vadd.f32 %v634, %v706
  %v708 = vpop.f32.mrf.mxu0
  %v709 = vadd.f32 %v639, %v708
  %v710 = vpop.f32.mrf.mxu0
  %v711 = vadd.f32 %v635, %v710
  %712 = vmatprep.mubr.bf16.mxu0 %v668
  %713 = vmatmul.mubr.bf16.gmra.mxu0 %v660
  %v714 = vpop.f32.mrf.mxu0
  %v715 = vadd.f32 %v640, %v714
  %v716 = vpop.f32.mrf.mxu0
  %v717 = vadd.f32 %v636, %v716
  %v718 = vpop.f32.mrf.mxu0
  %v719 = vadd.f32 %v641, %v718
  %v720 = vpop.f32.mrf.mxu0
  %v721 = vadd.f32 %v637, %v720
  %722 = vdwg.mxu0
  %723 = vmatprep.subr.bf16.mxu0 %v330
  %724 = vmatpush1.bf16.msra.mxu0 %v329
  %725 = vmatprep.subr.bf16.mxu0 %v324
  %726 = vmatpush1.bf16.msra.mxu0 %v323
  %727 = vmatprep.subr.bf16.mxu0 %v318
  %728 = vmatpush1.bf16.msra.mxu0 %v317
  %729 = vmatprep.subr.bf16.mxu0 %v312
  %730 = vmatpush1.bf16.msra.mxu0 %v311
  %731 = vmatprep.subr.bf16.mxu0 %v306
  %732 = vmatpush1.bf16.msra.mxu0 %v305
  %733 = vmatprep.subr.bf16.mxu0 %v300
  %734 = vmatpush1.bf16.msra.mxu0 %v299
  %735 = vmatprep.subr.bf16.mxu0 %v294
  %736 = vmatpush1.bf16.msra.mxu0 %v293
  %737 = vmatprep.subr.bf16.mxu0 %v288
  %738 = vmatpush1.bf16.msra.mxu0 %v287
  %739 = vmatprep.subr.bf16.mxu0 0
  %740 = vmatpush2.bf16.msra.mxu0 0
  %741 = vmatprep.subr.bf16.mxu0 0
  %742 = vmatpush2.bf16.msra.mxu0 0
  %743 = vmatprep.subr.bf16.mxu0 0
  %744 = vmatpush2.bf16.msra.mxu0 0
  %745 = vmatprep.subr.bf16.mxu0 0
  %746 = vmatpush2.bf16.msra.mxu0 0
  %747 = vmatprep.subr.bf16.mxu0 0
  %748 = vmatpush2.bf16.msra.mxu0 0
  %749 = vmatprep.subr.bf16.mxu0 0
  %750 = vmatpush2.bf16.msra.mxu0 0
  %751 = vmatprep.subr.bf16.mxu0 %v342
  %752 = vmatpush2.bf16.msra.mxu0 %v341
  %753 = vmatprep.subr.bf16.mxu0 %v336
  %754 = vmatpush2.bf16.msra.mxu0 %v335
  %755 = vmatprep.mubr.bf16.mxu0 %v665
  %756 = vmatmul.mubr.bf16.gmra.mxu0 %v658
  %v757 = vpop.f32.mrf.mxu0
  %v758 = vadd.f32 %v630, %v757
  %v759 = vpop.f32.mrf.mxu0
  %v760 = vadd.f32 %v626, %v759
  %v761 = vpop.f32.mrf.mxu0
  %v762 = vadd.f32 %v631, %v761
  %v763 = vpop.f32.mrf.mxu0
  %v764 = vadd.f32 %v627, %v763
  %765 = vmatprep.mubr.bf16.mxu0 %v668
  %766 = vmatmul.mubr.bf16.gmra.mxu0 %v660
  %v767 = vpop.f32.mrf.mxu0
  %v768 = vadd.f32 %v632, %v767
  %v769 = vpop.f32.mrf.mxu0
  %v770 = vadd.f32 %v628, %v769
  %v771 = vpop.f32.mrf.mxu0
  %v772 = vadd.f32 %v633, %v771
  %v773 = vpop.f32.mrf.mxu0
  %v774 = vadd.f32 %v629, %v773
  %775 = vdwg.mxu0
  %776 = vmatprep.subr.bf16.mxu0 %v332
  %777 = vmatpush1.bf16.msra.mxu0 %v331
  %778 = vmatprep.subr.bf16.mxu0 %v326
  %779 = vmatpush1.bf16.msra.mxu0 %v325
  %780 = vmatprep.subr.bf16.mxu0 %v320
  %781 = vmatpush1.bf16.msra.mxu0 %v319
  %782 = vmatprep.subr.bf16.mxu0 %v314
  %783 = vmatpush1.bf16.msra.mxu0 %v313
  %784 = vmatprep.subr.bf16.mxu0 %v308
  %785 = vmatpush1.bf16.msra.mxu0 %v307
  %786 = vmatprep.subr.bf16.mxu0 %v302
  %787 = vmatpush1.bf16.msra.mxu0 %v301
  %788 = vmatprep.subr.bf16.mxu0 %v296
  %789 = vmatpush1.bf16.msra.mxu0 %v295
  %790 = vmatprep.subr.bf16.mxu0 %v290
  %791 = vmatpush1.bf16.msra.mxu0 %v289
  %792 = vmatprep.subr.bf16.mxu0 0
  %793 = vmatpush2.bf16.msra.mxu0 0
  %794 = vmatprep.subr.bf16.mxu0 0
  %795 = vmatpush2.bf16.msra.mxu0 0
  %796 = vmatprep.subr.bf16.mxu0 0
  %797 = vmatpush2.bf16.msra.mxu0 0
  %798 = vmatprep.subr.bf16.mxu0 0
  %799 = vmatpush2.bf16.msra.mxu0 0
  %800 = vmatprep.subr.bf16.mxu0 0
  %801 = vmatpush2.bf16.msra.mxu0 0
  %802 = vmatprep.subr.bf16.mxu0 0
  %803 = vmatpush2.bf16.msra.mxu0 0
  %804 = vmatprep.subr.bf16.mxu0 %v344
  %805 = vmatpush2.bf16.msra.mxu0 %v343
  %806 = vmatprep.subr.bf16.mxu0 %v338
  %807 = vmatpush2.bf16.msra.mxu0 %v337
  %808 = vmatprep.mubr.bf16.mxu0 %v665
  %809 = vmatmul.mubr.bf16.gmra.mxu0 %v658
  %v810 = vpop.f32.mrf.mxu0
  %v811 = vadd.f32 %v622, %v810
  %v812 = vpop.f32.mrf.mxu0
  %v813 = vadd.f32 %v642, %v812
  %v814 = vpop.f32.mrf.mxu0
  %v815 = vadd.f32 %v623, %v814
  %v816 = vpop.f32.mrf.mxu0
  %v817 = vadd.f32 %v643, %v816
  %818 = vmatprep.mubr.bf16.mxu0 %v668
  %819 = vmatmul.mubr.bf16.gmra.mxu0 %v660
  %v820 = vpop.f32.mrf.mxu0
  %v821 = vadd.f32 %v624, %v820
  %v822 = vpop.f32.mrf.mxu0
  %v823 = vadd.f32 %v644, %v822
  %v824 = vpop.f32.mrf.mxu0
  %v825 = vadd.f32 %v625, %v824
  %v826 = vpop.f32.mrf.mxu0
  %v827 = vadd.f32 %v645, %v826
  %828 = vdwg.mxu0
  %s829 = scalar_lea.vmem %s1, 64
  %v830 = vld [vmem:[%s829] sm:$0xff]
  %v831 = vld [vmem:[%s829 + $0x8] sm:$0xff]
  %v832 = vld [vmem:[%s829 + $0x10] sm:$0xff]
  %v833 = vld [vmem:[%s829 + $0x18] sm:$0xff]
  %v838 = vunpack.c.l.b16 %v830
  %v839 = vunpack.c.h.b16 %v830
  %v840 = vunpack.c.l.b16 %v831
  %v841 = vunpack.c.h.b16 %v831
  %v842 = vunpack.c.l.b16 %v832
  %v843 = vunpack.c.h.b16 %v832
  %v844 = vunpack.c.l.b16 %v833
  %v845 = vunpack.c.h.b16 %v833
  %v846 = vpack.c.b16 %v840, %v838
  %v847 = vpack.c.b16 %v841, %v839
  %v848 = vpack.c.b16 %v844, %v842
  %v849 = vpack.c.b16 %v845, %v843
  %v853 = vsel %vm405, %v847, 0
  %v856 = vsel %vm405, %v849, 0
  %858 = vmatprep.subr.bf16.mxu0 %v328
  %859 = vmatpush1.bf16.msra.mxu0 %v327
  %860 = vmatprep.subr.bf16.mxu0 %v322
  %861 = vmatpush1.bf16.msra.mxu0 %v321
  %862 = vmatprep.subr.bf16.mxu0 %v316
  %863 = vmatpush1.bf16.msra.mxu0 %v315
  %864 = vmatprep.subr.bf16.mxu0 %v310
  %865 = vmatpush1.bf16.msra.mxu0 %v309
  %866 = vmatprep.subr.bf16.mxu0 %v304
  %867 = vmatpush1.bf16.msra.mxu0 %v303
  %868 = vmatprep.subr.bf16.mxu0 %v298
  %869 = vmatpush1.bf16.msra.mxu0 %v297
  %870 = vmatprep.subr.bf16.mxu0 %v292
  %871 = vmatpush1.bf16.msra.mxu0 %v291
  %872 = vmatprep.subr.bf16.mxu0 %v286
  %873 = vmatpush1.bf16.msra.mxu0 %v285
  %874 = vmatprep.subr.bf16.mxu0 0
  %875 = vmatpush2.bf16.msra.mxu0 0
  %876 = vmatprep.subr.bf16.mxu0 0
  %877 = vmatpush2.bf16.msra.mxu0 0
  %878 = vmatprep.subr.bf16.mxu0 0
  %879 = vmatpush2.bf16.msra.mxu0 0
  %880 = vmatprep.subr.bf16.mxu0 0
  %881 = vmatpush2.bf16.msra.mxu0 0
  %882 = vmatprep.subr.bf16.mxu0 0
  %883 = vmatpush2.bf16.msra.mxu0 0
  %884 = vmatprep.subr.bf16.mxu0 0
  %885 = vmatpush2.bf16.msra.mxu0 0
  %886 = vmatprep.subr.bf16.mxu0 %v340
  %887 = vmatpush2.bf16.msra.mxu0 %v339
  %888 = vmatprep.subr.bf16.mxu0 %v334
  %889 = vmatpush2.bf16.msra.mxu0 %v333
  %890 = vmatprep.mubr.bf16.mxu0 %v853
  %891 = vmatmul.mubr.bf16.gmra.mxu0 %v846
  %v892 = vpop.f32.mrf.mxu0
  %v893 = vadd.f32 0.0, %v892
  %v894 = vpop.f32.mrf.mxu0
  %v895 = vadd.f32 0.0, %v894
  %v896 = vpop.f32.mrf.mxu0
  %v897 = vadd.f32 0.0, %v896
  %v898 = vpop.f32.mrf.mxu0
  %v899 = vadd.f32 0.0, %v898
  %900 = vmatprep.mubr.bf16.mxu0 %v856
  %901 = vmatmul.mubr.bf16.gmra.mxu0 %v848
  %v902 = vpop.f32.mrf.mxu0
  %v903 = vadd.f32 0.0, %v902
  %v904 = vpop.f32.mrf.mxu0
  %v905 = vadd.f32 0.0, %v904
  %v906 = vpop.f32.mrf.mxu0
  %v907 = vadd.f32 0.0, %v906
  %v908 = vpop.f32.mrf.mxu0
  %v909 = vadd.f32 0.0, %v908
  %910 = vdwg.mxu0
  %911 = vmatprep.subr.bf16.mxu0 %v330
  %912 = vmatpush1.bf16.msra.mxu0 %v329
  %913 = vmatprep.subr.bf16.mxu0 %v324
  %914 = vmatpush1.bf16.msra.mxu0 %v323
  %915 = vmatprep.subr.bf16.mxu0 %v318
  %916 = vmatpush1.bf16.msra.mxu0 %v317
  %917 = vmatprep.subr.bf16.mxu0 %v312
  %918 = vmatpush1.bf16.msra.mxu0 %v311
  %919 = vmatprep.subr.bf16.mxu0 %v306
  %920 = vmatpush1.bf16.msra.mxu0 %v305
  %921 = vmatprep.subr.bf16.mxu0 %v300
  %922 = vmatpush1.bf16.msra.mxu0 %v299
  %923 = vmatprep.subr.bf16.mxu0 %v294
  %924 = vmatpush1.bf16.msra.mxu0 %v293
  %925 = vmatprep.subr.bf16.mxu0 %v288
  %926 = vmatpush1.bf16.msra.mxu0 %v287
  %927 = vmatprep.subr.bf16.mxu0 0
  %928 = vmatpush2.bf16.msra.mxu0 0
  %929 = vmatprep.subr.bf16.mxu0 0
  %930 = vmatpush2.bf16.msra.mxu0 0
  %931 = vmatprep.subr.bf16.mxu0 0
  %932 = vmatpush2.bf16.msra.mxu0 0
  %933 = vmatprep.subr.bf16.mxu0 0
  %934 = vmatpush2.bf16.msra.mxu0 0
  %935 = vmatprep.subr.bf16.mxu0 0
  %936 = vmatpush2.bf16.msra.mxu0 0
  %937 = vmatprep.subr.bf16.mxu0 0
  %938 = vmatpush2.bf16.msra.mxu0 0
  %939 = vmatprep.subr.bf16.mxu0 %v342
  %940 = vmatpush2.bf16.msra.mxu0 %v341
  %941 = vmatprep.subr.bf16.mxu0 %v336
  %942 = vmatpush2.bf16.msra.mxu0 %v335
  %943 = vmatprep.mubr.bf16.mxu0 %v853
  %944 = vmatmul.mubr.bf16.gmra.mxu0 %v846
  %v945 = vpop.f32.mrf.mxu0
  %v946 = vadd.f32 0.0, %v945
  %v947 = vpop.f32.mrf.mxu0
  %v948 = vadd.f32 0.0, %v947
  %v949 = vpop.f32.mrf.mxu0
  %v950 = vadd.f32 0.0, %v949
  %v951 = vpop.f32.mrf.mxu0
  %v952 = vadd.f32 0.0, %v951
  %953 = vmatprep.mubr.bf16.mxu0 %v856
  %954 = vmatmul.mubr.bf16.gmra.mxu0 %v848
  %v955 = vpop.f32.mrf.mxu0
  %v956 = vadd.f32 0.0, %v955
  %v957 = vpop.f32.mrf.mxu0
  %v958 = vadd.f32 0.0, %v957
  %v959 = vpop.f32.mrf.mxu0
  %v960 = vadd.f32 0.0, %v959
  %v961 = vpop.f32.mrf.mxu0
  %v962 = vadd.f32 0.0, %v961
  %963 = vdwg.mxu0
  %964 = vmatprep.subr.bf16.mxu0 %v332
  %965 = vmatpush1.bf16.msra.mxu0 %v331
  %966 = vmatprep.subr.bf16.mxu0 %v326
  %967 = vmatpush1.bf16.msra.mxu0 %v325
  %968 = vmatprep.subr.bf16.mxu0 %v320
  %969 = vmatpush1.bf16.msra.mxu0 %v319
  %970 = vmatprep.subr.bf16.mxu0 %v314
  %971 = vmatpush1.bf16.msra.mxu0 %v313
  %972 = vmatprep.subr.bf16.mxu0 %v308
  %973 = vmatpush1.bf16.msra.mxu0 %v307
  %974 = vmatprep.subr.bf16.mxu0 %v302
  %975 = vmatpush1.bf16.msra.mxu0 %v301
  %976 = vmatprep.subr.bf16.mxu0 %v296
  %977 = vmatpush1.bf16.msra.mxu0 %v295
  %978 = vmatprep.subr.bf16.mxu0 %v290
  %979 = vmatpush1.bf16.msra.mxu0 %v289
  %980 = vmatprep.subr.bf16.mxu0 0
  %981 = vmatpush2.bf16.msra.mxu0 0
  %982 = vmatprep.subr.bf16.mxu0 0
  %983 = vmatpush2.bf16.msra.mxu0 0
  %984 = vmatprep.subr.bf16.mxu0 0
  %985 = vmatpush2.bf16.msra.mxu0 0
  %986 = vmatprep.subr.bf16.mxu0 0
  %987 = vmatpush2.bf16.msra.mxu0 0
  %988 = vmatprep.subr.bf16.mxu0 0
  %989 = vmatpush2.bf16.msra.mxu0 0
  %990 = vmatprep.subr.bf16.mxu0 0
  %991 = vmatpush2.bf16.msra.mxu0 0
  %992 = vmatprep.subr.bf16.mxu0 %v344
  %993 = vmatpush2.bf16.msra.mxu0 %v343
  %994 = vmatprep.subr.bf16.mxu0 %v338
  %995 = vmatpush2.bf16.msra.mxu0 %v337
  %996 = vmatprep.mubr.bf16.mxu0 %v853
  %997 = vmatmul.mubr.bf16.gmra.mxu0 %v846
  %v998 = vpop.f32.mrf.mxu0
  %v999 = vadd.f32 0.0, %v998
  %v1000 = vpop.f32.mrf.mxu0
  %v1001 = vadd.f32 0.0, %v1000
  %v1002 = vpop.f32.mrf.mxu0
  %v1003 = vadd.f32 0.0, %v1002
  %v1004 = vpop.f32.mrf.mxu0
  %v1005 = vadd.f32 0.0, %v1004
  %1006 = vmatprep.mubr.bf16.mxu0 %v856
  %1007 = vmatmul.mubr.bf16.gmra.mxu0 %v848
  %v1008 = vpop.f32.mrf.mxu0
  %v1009 = vadd.f32 0.0, %v1008
  %v1010 = vpop.f32.mrf.mxu0
  %v1011 = vadd.f32 0.0, %v1010
  %v1012 = vpop.f32.mrf.mxu0
  %v1013 = vadd.f32 0.0, %v1012
  %v1014 = vpop.f32.mrf.mxu0
  %v1015 = vadd.f32 0.0, %v1014
  %1016 = vdwg.mxu0
  %1017 = vrot.lane.b32.xlu0 %v893, 126
  %v1018 = vpop.permute.xlu0 %1017
  %1019 = vrot.lane.b32.xlu0 %v897, 126
  %v1020 = vpop.permute.xlu0 %1019
  %1021 = vrot.lane.b32.xlu0 %v903, 126
  %v1022 = vpop.permute.xlu0 %1021
  %1023 = vrot.lane.b32.xlu0 %v907, 126
  %v1024 = vpop.permute.xlu0 %1023
  %1025 = vrot.lane.b32.xlu0 %v895, 126
  %v1026 = vpop.permute.xlu0 %1025
  %1027 = vrot.lane.b32.xlu0 %v899, 126
  %v1028 = vpop.permute.xlu0 %1027
  %1029 = vrot.lane.b32.xlu0 %v905, 126
  %v1030 = vpop.permute.xlu0 %1029
  %1031 = vrot.lane.b32.xlu0 %v909, 126
  %v1032 = vpop.permute.xlu0 %1031
  %1033 = vrot.lane.b32.xlu0 %v946, 126
  %v1034 = vpop.permute.xlu0 %1033
  %1035 = vrot.lane.b32.xlu0 %v950, 126
  %v1036 = vpop.permute.xlu0 %1035
  %1037 = vrot.lane.b32.xlu0 %v956, 126
  %v1038 = vpop.permute.xlu0 %1037
  %1039 = vrot.lane.b32.xlu0 %v960, 126
  %v1040 = vpop.permute.xlu0 %1039
  %1041 = vrot.lane.b32.xlu0 %v948, 126
  %v1042 = vpop.permute.xlu0 %1041
  %1043 = vrot.lane.b32.xlu0 %v952, 126
  %v1044 = vpop.permute.xlu0 %1043
  %1045 = vrot.lane.b32.xlu0 %v958, 126
  %v1046 = vpop.permute.xlu0 %1045
  %1047 = vrot.lane.b32.xlu0 %v962, 126
  %v1048 = vpop.permute.xlu0 %1047
  %1049 = vrot.lane.b32.xlu0 %v999, 126
  %v1050 = vpop.permute.xlu0 %1049
  %1051 = vrot.lane.b32.xlu0 %v1003, 126
  %v1052 = vpop.permute.xlu0 %1051
  %1053 = vrot.lane.b32.xlu0 %v1009, 126
  %v1054 = vpop.permute.xlu0 %1053
  %1055 = vrot.lane.b32.xlu0 %v1013, 126
  %v1056 = vpop.permute.xlu0 %1055
  %1057 = vrot.lane.b32.xlu0 %v1001, 126
  %v1058 = vpop.permute.xlu0 %1057
  %1059 = vrot.lane.b32.xlu0 %v1005, 126
  %v1060 = vpop.permute.xlu0 %1059
  %1061 = vrot.lane.b32.xlu0 %v1011, 126
  %v1062 = vpop.permute.xlu0 %1061
  %1063 = vrot.lane.b32.xlu0 %v1015, 126
  %v1064 = vpop.permute.xlu0 %1063
  %vm1065 = vcmp.lt.s32.totalorder %v620, 126
  %v1066 = vsel %vm1065, %v1050, %v1058
  %v1067 = vsel %vm1065, %v1052, %v1060
  %v1068 = vsel %vm1065, %v1054, %v1062
  %v1069 = vsel %vm1065, %v1056, %v1064
  %v1070 = vsel %vm1065, %v1042, %v1050
  %v1071 = vsel %vm1065, %v1044, %v1052
  %v1072 = vsel %vm1065, %v1046, %v1054
  %v1073 = vsel %vm1065, %v1048, %v1056
  %v1074 = vsel %vm1065, %v1034, %v1042
  %v1075 = vsel %vm1065, %v1036, %v1044
  %v1076 = vsel %vm1065, %v1038, %v1046
  %v1077 = vsel %vm1065, %v1040, %v1048
  %v1078 = vsel %vm1065, %v1026, %v1034
  %v1079 = vsel %vm1065, %v1028, %v1036
  %v1080 = vsel %vm1065, %v1030, %v1038
  %v1081 = vsel %vm1065, %v1032, %v1040
  %v1082 = vsel %vm1065, %v1018, %v1026
  %v1083 = vsel %vm1065, %v1020, %v1028
  %v1084 = vsel %vm1065, %v1022, %v1030
  %v1085 = vsel %vm1065, %v1024, %v1032
  %v1086 = vsel %vm1065, %v1058, %v1018
  %v1087 = vsel %vm1065, %v1060, %v1020
  %v1088 = vsel %vm1065, %v1062, %v1022
  %v1089 = vsel %vm1065, %v1064, %v1024
  %v1090 = vadd.f32 %v705, %v1082
  %v1091 = vadd.f32 %v707, %v1078
  %v1092 = vadd.f32 %v758, %v1074
  %v1093 = vadd.f32 %v760, %v1070
  %v1094 = vadd.f32 %v811, %v1066
  %v1095 = vadd.f32 %v813, %v1086
  %v1096 = vadd.f32 %v709, %v1083
  %v1097 = vadd.f32 %v711, %v1079
  %v1098 = vadd.f32 %v762, %v1075
  %v1099 = vadd.f32 %v764, %v1071
  %v1100 = vadd.f32 %v815, %v1067
  %v1101 = vadd.f32 %v817, %v1087
  %v1102 = vadd.f32 %v715, %v1084
  %v1103 = vadd.f32 %v717, %v1080
  %v1104 = vadd.f32 %v768, %v1076
  %v1105 = vadd.f32 %v770, %v1072
  %v1106 = vadd.f32 %v821, %v1068
  %v1107 = vadd.f32 %v823, %v1088
  %v1108 = vadd.f32 %v719, %v1085
  %v1109 = vadd.f32 %v721, %v1081
  %v1110 = vadd.f32 %v772, %v1077
  %v1111 = vadd.f32 %v774, %v1073
  %v1112 = vadd.f32 %v825, %v1069
  %v1113 = vadd.f32 %v827, %v1089
  %s1114 = scalar_lea.vmem %s1, 96
  %v1115 = vld [vmem:[%s1114] sm:$0xff]
  %v1116 = vld [vmem:[%s1114 + $0x8] sm:$0xff]
  %v1117 = vld [vmem:[%s1114 + $0x10] sm:$0xff]
  %v1118 = vld [vmem:[%s1114 + $0x18] sm:$0xff]
  %v1123 = vunpack.c.l.b16 %v1115
  %v1124 = vunpack.c.h.b16 %v1115
  %v1125 = vunpack.c.l.b16 %v1116
  %v1126 = vunpack.c.h.b16 %v1116
  %v1127 = vunpack.c.l.b16 %v1117
  %v1128 = vunpack.c.h.b16 %v1117
  %v1129 = vunpack.c.l.b16 %v1118
  %v1130 = vunpack.c.h.b16 %v1118
  %v1131 = vpack.c.b16 %v1125, %v1123
  %v1132 = vpack.c.b16 %v1126, %v1124
  %v1133 = vpack.c.b16 %v1129, %v1127
  %v1134 = vpack.c.b16 %v1130, %v1128
  %v1138 = vsel %vm405, %v1132, 0
  %v1141 = vsel %vm405, %v1134, 0
  %1143 = vmatprep.subr.bf16.mxu0 %v328
  %1144 = vmatpush1.bf16.msra.mxu0 %v327
  %1145 = vmatprep.subr.bf16.mxu0 %v322
  %1146 = vmatpush1.bf16.msra.mxu0 %v321
  %1147 = vmatprep.subr.bf16.mxu0 %v316
  %1148 = vmatpush1.bf16.msra.mxu0 %v315
  %1149 = vmatprep.subr.bf16.mxu0 %v310
  %1150 = vmatpush1.bf16.msra.mxu0 %v309
  %1151 = vmatprep.subr.bf16.mxu0 %v304
  %1152 = vmatpush1.bf16.msra.mxu0 %v303
  %1153 = vmatprep.subr.bf16.mxu0 %v298
  %1154 = vmatpush1.bf16.msra.mxu0 %v297
  %1155 = vmatprep.subr.bf16.mxu0 %v292
  %1156 = vmatpush1.bf16.msra.mxu0 %v291
  %1157 = vmatprep.subr.bf16.mxu0 %v286
  %1158 = vmatpush1.bf16.msra.mxu0 %v285
  %1159 = vmatprep.subr.bf16.mxu0 0
  %1160 = vmatpush2.bf16.msra.mxu0 0
  %1161 = vmatprep.subr.bf16.mxu0 0
  %1162 = vmatpush2.bf16.msra.mxu0 0
  %1163 = vmatprep.subr.bf16.mxu0 0
  %1164 = vmatpush2.bf16.msra.mxu0 0
  %1165 = vmatprep.subr.bf16.mxu0 0
  %1166 = vmatpush2.bf16.msra.mxu0 0
  %1167 = vmatprep.subr.bf16.mxu0 0
  %1168 = vmatpush2.bf16.msra.mxu0 0
  %1169 = vmatprep.subr.bf16.mxu0 0
  %1170 = vmatpush2.bf16.msra.mxu0 0
  %1171 = vmatprep.subr.bf16.mxu0 %v340
  %1172 = vmatpush2.bf16.msra.mxu0 %v339
  %1173 = vmatprep.subr.bf16.mxu0 %v334
  %1174 = vmatpush2.bf16.msra.mxu0 %v333
  %1175 = vmatprep.mubr.bf16.mxu0 %v1138
  %1176 = vmatmul.mubr.bf16.gmra.mxu0 %v1131
  %v1177 = vpop.f32.mrf.mxu0
  %v1178 = vadd.f32 0.0, %v1177
  %v1179 = vpop.f32.mrf.mxu0
  %v1180 = vadd.f32 0.0, %v1179
  %v1181 = vpop.f32.mrf.mxu0
  %v1182 = vadd.f32 0.0, %v1181
  %v1183 = vpop.f32.mrf.mxu0
  %v1184 = vadd.f32 0.0, %v1183
  %1185 = vmatprep.mubr.bf16.mxu0 %v1141
  %1186 = vmatmul.mubr.bf16.gmra.mxu0 %v1133
  %v1187 = vpop.f32.mrf.mxu0
  %v1188 = vadd.f32 0.0, %v1187
  %v1189 = vpop.f32.mrf.mxu0
  %v1190 = vadd.f32 0.0, %v1189
  %v1191 = vpop.f32.mrf.mxu0
  %v1192 = vadd.f32 0.0, %v1191
  %v1193 = vpop.f32.mrf.mxu0
  %v1194 = vadd.f32 0.0, %v1193
  %1195 = vdwg.mxu0
  %1196 = vmatprep.subr.bf16.mxu0 %v330
  %1197 = vmatpush1.bf16.msra.mxu0 %v329
  %1198 = vmatprep.subr.bf16.mxu0 %v324
  %1199 = vmatpush1.bf16.msra.mxu0 %v323
  %1200 = vmatprep.subr.bf16.mxu0 %v318
  %1201 = vmatpush1.bf16.msra.mxu0 %v317
  %1202 = vmatprep.subr.bf16.mxu0 %v312
  %1203 = vmatpush1.bf16.msra.mxu0 %v311
  %1204 = vmatprep.subr.bf16.mxu0 %v306
  %1205 = vmatpush1.bf16.msra.mxu0 %v305
  %1206 = vmatprep.subr.bf16.mxu0 %v300
  %1207 = vmatpush1.bf16.msra.mxu0 %v299
  %1208 = vmatprep.subr.bf16.mxu0 %v294
  %1209 = vmatpush1.bf16.msra.mxu0 %v293
  %1210 = vmatprep.subr.bf16.mxu0 %v288
  %1211 = vmatpush1.bf16.msra.mxu0 %v287
  %1212 = vmatprep.subr.bf16.mxu0 0
  %1213 = vmatpush2.bf16.msra.mxu0 0
  %1214 = vmatprep.subr.bf16.mxu0 0
  %1215 = vmatpush2.bf16.msra.mxu0 0
  %1216 = vmatprep.subr.bf16.mxu0 0
  %1217 = vmatpush2.bf16.msra.mxu0 0
  %1218 = vmatprep.subr.bf16.mxu0 0
  %1219 = vmatpush2.bf16.msra.mxu0 0
  %1220 = vmatprep.subr.bf16.mxu0 0
  %1221 = vmatpush2.bf16.msra.mxu0 0
  %1222 = vmatprep.subr.bf16.mxu0 0
  %1223 = vmatpush2.bf16.msra.mxu0 0
  %1224 = vmatprep.subr.bf16.mxu0 %v342
  %1225 = vmatpush2.bf16.msra.mxu0 %v341
  %1226 = vmatprep.subr.bf16.mxu0 %v336
  %1227 = vmatpush2.bf16.msra.mxu0 %v335
  %1228 = vmatprep.mubr.bf16.mxu0 %v1138
  %1229 = vmatmul.mubr.bf16.gmra.mxu0 %v1131
  %v1230 = vpop.f32.mrf.mxu0
  %v1231 = vadd.f32 0.0, %v1230
  %v1232 = vpop.f32.mrf.mxu0
  %v1233 = vadd.f32 0.0, %v1232
  %v1234 = vpop.f32.mrf.mxu0
  %v1235 = vadd.f32 0.0, %v1234
  %v1236 = vpop.f32.mrf.mxu0
  %v1237 = vadd.f32 0.0, %v1236
  %1238 = vmatprep.mubr.bf16.mxu0 %v1141
  %1239 = vmatmul.mubr.bf16.gmra.mxu0 %v1133
  %v1240 = vpop.f32.mrf.mxu0
  %v1241 = vadd.f32 0.0, %v1240
  %v1242 = vpop.f32.mrf.mxu0
  %v1243 = vadd.f32 0.0, %v1242
  %v1244 = vpop.f32.mrf.mxu0
  %v1245 = vadd.f32 0.0, %v1244
  %v1246 = vpop.f32.mrf.mxu0
  %v1247 = vadd.f32 0.0, %v1246
  %1248 = vdwg.mxu0
  %1249 = vmatprep.subr.bf16.mxu0 %v332
  %1250 = vmatpush1.bf16.msra.mxu0 %v331
  %1251 = vmatprep.subr.bf16.mxu0 %v326
  %1252 = vmatpush1.bf16.msra.mxu0 %v325
  %1253 = vmatprep.subr.bf16.mxu0 %v320
  %1254 = vmatpush1.bf16.msra.mxu0 %v319
  %1255 = vmatprep.subr.bf16.mxu0 %v314
  %1256 = vmatpush1.bf16.msra.mxu0 %v313
  %1257 = vmatprep.subr.bf16.mxu0 %v308
  %1258 = vmatpush1.bf16.msra.mxu0 %v307
  %1259 = vmatprep.subr.bf16.mxu0 %v302
  %1260 = vmatpush1.bf16.msra.mxu0 %v301
  %1261 = vmatprep.subr.bf16.mxu0 %v296
  %1262 = vmatpush1.bf16.msra.mxu0 %v295
  %1263 = vmatprep.subr.bf16.mxu0 %v290
  %1264 = vmatpush1.bf16.msra.mxu0 %v289
  %1265 = vmatprep.subr.bf16.mxu0 0
  %1266 = vmatpush2.bf16.msra.mxu0 0
  %1267 = vmatprep.subr.bf16.mxu0 0
  %1268 = vmatpush2.bf16.msra.mxu0 0
  %1269 = vmatprep.subr.bf16.mxu0 0
  %1270 = vmatpush2.bf16.msra.mxu0 0
  %1271 = vmatprep.subr.bf16.mxu0 0
  %1272 = vmatpush2.bf16.msra.mxu0 0
  %1273 = vmatprep.subr.bf16.mxu0 0
  %1274 = vmatpush2.bf16.msra.mxu0 0
  %1275 = vmatprep.subr.bf16.mxu0 0
  %1276 = vmatpush2.bf16.msra.mxu0 0
  %1277 = vmatprep.subr.bf16.mxu0 %v344
  %1278 = vmatpush2.bf16.msra.mxu0 %v343
  %1279 = vmatprep.subr.bf16.mxu0 %v338
  %1280 = vmatpush2.bf16.msra.mxu0 %v337
  %1281 = vmatprep.mubr.bf16.mxu0 %v1138
  %1282 = vmatmul.mubr.bf16.gmra.mxu0 %v1131
  %v1283 = vpop.f32.mrf.mxu0
  %v1284 = vadd.f32 0.0, %v1283
  %v1285 = vpop.f32.mrf.mxu0
  %v1286 = vadd.f32 0.0, %v1285
  %v1287 = vpop.f32.mrf.mxu0
  %v1288 = vadd.f32 0.0, %v1287
  %v1289 = vpop.f32.mrf.mxu0
  %v1290 = vadd.f32 0.0, %v1289
  %1291 = vmatprep.mubr.bf16.mxu0 %v1141
  %1292 = vmatmul.mubr.bf16.gmra.mxu0 %v1133
  %v1293 = vpop.f32.mrf.mxu0
  %v1294 = vadd.f32 0.0, %v1293
  %v1295 = vpop.f32.mrf.mxu0
  %v1296 = vadd.f32 0.0, %v1295
  %v1297 = vpop.f32.mrf.mxu0
  %v1298 = vadd.f32 0.0, %v1297
  %v1299 = vpop.f32.mrf.mxu0
  %v1300 = vadd.f32 0.0, %v1299
  %1301 = vdwg.mxu0
  %1302 = vrot.lane.b32.xlu0 %v1178, 110
  %v1303 = vpop.permute.xlu0 %1302
  %1304 = vrot.lane.b32.xlu0 %v1182, 110
  %v1305 = vpop.permute.xlu0 %1304
  %1306 = vrot.lane.b32.xlu0 %v1188, 110
  %v1307 = vpop.permute.xlu0 %1306
  %1308 = vrot.lane.b32.xlu0 %v1192, 110
  %v1309 = vpop.permute.xlu0 %1308
  %1310 = vrot.lane.b32.xlu0 %v1180, 110
  %v1311 = vpop.permute.xlu0 %1310
  %1312 = vrot.lane.b32.xlu0 %v1184, 110
  %v1313 = vpop.permute.xlu0 %1312
  %1314 = vrot.lane.b32.xlu0 %v1190, 110
  %v1315 = vpop.permute.xlu0 %1314
  %1316 = vrot.lane.b32.xlu0 %v1194, 110
  %v1317 = vpop.permute.xlu0 %1316
  %1318 = vrot.lane.b32.xlu0 %v1231, 110
  %v1319 = vpop.permute.xlu0 %1318
  %1320 = vrot.lane.b32.xlu0 %v1235, 110
  %v1321 = vpop.permute.xlu0 %1320
  %1322 = vrot.lane.b32.xlu0 %v1241, 110
  %v1323 = vpop.permute.xlu0 %1322
  %1324 = vrot.lane.b32.xlu0 %v1245, 110
  %v1325 = vpop.permute.xlu0 %1324
  %1326 = vrot.lane.b32.xlu0 %v1233, 110
  %v1327 = vpop.permute.xlu0 %1326
  %1328 = vrot.lane.b32.xlu0 %v1237, 110
  %v1329 = vpop.permute.xlu0 %1328
  %1330 = vrot.lane.b32.xlu0 %v1243, 110
  %v1331 = vpop.permute.xlu0 %1330
  %1332 = vrot.lane.b32.xlu0 %v1247, 110
  %v1333 = vpop.permute.xlu0 %1332
  %1334 = vrot.lane.b32.xlu0 %v1284, 110
  %v1335 = vpop.permute.xlu0 %1334
  %1336 = vrot.lane.b32.xlu0 %v1288, 110
  %v1337 = vpop.permute.xlu0 %1336
  %1338 = vrot.lane.b32.xlu0 %v1294, 110
  %v1339 = vpop.permute.xlu0 %1338
  %1340 = vrot.lane.b32.xlu0 %v1298, 110
  %v1341 = vpop.permute.xlu0 %1340
  %1342 = vrot.lane.b32.xlu0 %v1286, 110
  %v1343 = vpop.permute.xlu0 %1342
  %1344 = vrot.lane.b32.xlu0 %v1290, 110
  %v1345 = vpop.permute.xlu0 %1344
  %1346 = vrot.lane.b32.xlu0 %v1296, 110
  %v1347 = vpop.permute.xlu0 %1346
  %1348 = vrot.lane.b32.xlu0 %v1300, 110
  %v1349 = vpop.permute.xlu0 %1348
  %vm1350 = vcmp.lt.s32.totalorder %v620, 110
  %v1351 = vsel %vm1350, %v1335, %v1343
  %v1352 = vsel %vm1350, %v1337, %v1345
  %v1353 = vsel %vm1350, %v1339, %v1347
  %v1354 = vsel %vm1350, %v1341, %v1349
  %v1355 = vsel %vm1350, %v1327, %v1335
  %v1356 = vsel %vm1350, %v1329, %v1337
  %v1357 = vsel %vm1350, %v1331, %v1339
  %v1358 = vsel %vm1350, %v1333, %v1341
  %v1359 = vsel %vm1350, %v1319, %v1327
  %v1360 = vsel %vm1350, %v1321, %v1329
  %v1361 = vsel %vm1350, %v1323, %v1331
  %v1362 = vsel %vm1350, %v1325, %v1333
  %v1363 = vsel %vm1350, %v1311, %v1319
  %v1364 = vsel %vm1350, %v1313, %v1321
  %v1365 = vsel %vm1350, %v1315, %v1323
  %v1366 = vsel %vm1350, %v1317, %v1325
  %v1367 = vsel %vm1350, %v1303, %v1311
  %v1368 = vsel %vm1350, %v1305, %v1313
  %v1369 = vsel %vm1350, %v1307, %v1315
  %v1370 = vsel %vm1350, %v1309, %v1317
  %v1371 = vsel %vm1350, %v1343, %v1303
  %v1372 = vsel %vm1350, %v1345, %v1305
  %v1373 = vsel %vm1350, %v1347, %v1307
  %v1374 = vsel %vm1350, %v1349, %v1309
  %v1375 = vadd.f32 %v1090, %v1367
  %v1376 = vadd.f32 %v1091, %v1363
  %v1377 = vadd.f32 %v1092, %v1359
  %v1378 = vadd.f32 %v1093, %v1355
  %v1379 = vadd.f32 %v1094, %v1351
  %v1380 = vadd.f32 %v1095, %v1371
  %v1381 = vadd.f32 %v1096, %v1368
  %v1382 = vadd.f32 %v1097, %v1364
  %v1383 = vadd.f32 %v1098, %v1360
  %v1384 = vadd.f32 %v1099, %v1356
  %v1385 = vadd.f32 %v1100, %v1352
  %v1386 = vadd.f32 %v1101, %v1372
  %v1387 = vadd.f32 %v1102, %v1369
  %v1388 = vadd.f32 %v1103, %v1365
  %v1389 = vadd.f32 %v1104, %v1361
  %v1390 = vadd.f32 %v1105, %v1357
  %v1391 = vadd.f32 %v1106, %v1353
  %v1392 = vadd.f32 %v1107, %v1373
  %v1393 = vadd.f32 %v1108, %v1370
  %v1394 = vadd.f32 %v1109, %v1366
  %v1395 = vadd.f32 %v1110, %v1362
  %v1396 = vadd.f32 %v1111, %v1358
  %v1397 = vadd.f32 %v1112, %v1354
  %v1398 = vadd.f32 %v1113, %v1374
  %s1399 = scalar_lea.vmem %s1, 128
  %v1400 = vld [vmem:[%s1399] sm:$0xff]
  %v1401 = vld [vmem:[%s1399 + $0x8] sm:$0xff]
  %v1402 = vld [vmem:[%s1399 + $0x10] sm:$0xff]
  %v1403 = vld [vmem:[%s1399 + $0x18] sm:$0xff]
  %v1408 = vunpack.c.l.b16 %v1400
  %v1409 = vunpack.c.h.b16 %v1400
  %v1410 = vunpack.c.l.b16 %v1401
  %v1411 = vunpack.c.h.b16 %v1401
  %v1412 = vunpack.c.l.b16 %v1402
  %v1413 = vunpack.c.h.b16 %v1402
  %v1414 = vunpack.c.l.b16 %v1403
  %v1415 = vunpack.c.h.b16 %v1403
  %v1416 = vpack.c.b16 %v1410, %v1408
  %v1417 = vpack.c.b16 %v1411, %v1409
  %v1418 = vpack.c.b16 %v1414, %v1412
  %v1419 = vpack.c.b16 %v1415, %v1413
  %v1423 = vsel %vm405, %v1417, 0
  %v1426 = vsel %vm405, %v1419, 0
  %1428 = vmatprep.subr.bf16.mxu0 %v328
  %1429 = vmatpush1.bf16.msra.mxu0 %v327
  %1430 = vmatprep.subr.bf16.mxu0 %v322
  %1431 = vmatpush1.bf16.msra.mxu0 %v321
  %1432 = vmatprep.subr.bf16.mxu0 %v316
  %1433 = vmatpush1.bf16.msra.mxu0 %v315
  %1434 = vmatprep.subr.bf16.mxu0 %v310
  %1435 = vmatpush1.bf16.msra.mxu0 %v309
  %1436 = vmatprep.subr.bf16.mxu0 %v304
  %1437 = vmatpush1.bf16.msra.mxu0 %v303
  %1438 = vmatprep.subr.bf16.mxu0 %v298
  %1439 = vmatpush1.bf16.msra.mxu0 %v297
  %1440 = vmatprep.subr.bf16.mxu0 %v292
  %1441 = vmatpush1.bf16.msra.mxu0 %v291
  %1442 = vmatprep.subr.bf16.mxu0 %v286
  %1443 = vmatpush1.bf16.msra.mxu0 %v285
  %1444 = vmatprep.subr.bf16.mxu0 0
  %1445 = vmatpush2.bf16.msra.mxu0 0
  %1446 = vmatprep.subr.bf16.mxu0 0
  %1447 = vmatpush2.bf16.msra.mxu0 0
  %1448 = vmatprep.subr.bf16.mxu0 0
  %1449 = vmatpush2.bf16.msra.mxu0 0
  %1450 = vmatprep.subr.bf16.mxu0 0
  %1451 = vmatpush2.bf16.msra.mxu0 0
  %1452 = vmatprep.subr.bf16.mxu0 0
  %1453 = vmatpush2.bf16.msra.mxu0 0
  %1454 = vmatprep.subr.bf16.mxu0 0
  %1455 = vmatpush2.bf16.msra.mxu0 0
  %1456 = vmatprep.subr.bf16.mxu0 %v340
  %1457 = vmatpush2.bf16.msra.mxu0 %v339
  %1458 = vmatprep.subr.bf16.mxu0 %v334
  %1459 = vmatpush2.bf16.msra.mxu0 %v333
  %1460 = vmatprep.mubr.bf16.mxu0 %v1423
  %1461 = vmatmul.mubr.bf16.gmra.mxu0 %v1416
  %v1462 = vpop.f32.mrf.mxu0
  %v1463 = vadd.f32 0.0, %v1462
  %v1464 = vpop.f32.mrf.mxu0
  %v1465 = vadd.f32 0.0, %v1464
  %v1466 = vpop.f32.mrf.mxu0
  %v1467 = vadd.f32 0.0, %v1466
  %v1468 = vpop.f32.mrf.mxu0
  %v1469 = vadd.f32 0.0, %v1468
  %1470 = vmatprep.mubr.bf16.mxu0 %v1426
  %1471 = vmatmul.mubr.bf16.gmra.mxu0 %v1418
  %v1472 = vpop.f32.mrf.mxu0
  %v1473 = vadd.f32 0.0, %v1472
  %v1474 = vpop.f32.mrf.mxu0
  %v1475 = vadd.f32 0.0, %v1474
  %v1476 = vpop.f32.mrf.mxu0
  %v1477 = vadd.f32 0.0, %v1476
  %v1478 = vpop.f32.mrf.mxu0
  %v1479 = vadd.f32 0.0, %v1478
  %1480 = vdwg.mxu0
  %1481 = vmatprep.subr.bf16.mxu0 %v330
  %1482 = vmatpush1.bf16.msra.mxu0 %v329
  %1483 = vmatprep.subr.bf16.mxu0 %v324
  %1484 = vmatpush1.bf16.msra.mxu0 %v323
  %1485 = vmatprep.subr.bf16.mxu0 %v318
  %1486 = vmatpush1.bf16.msra.mxu0 %v317
  %1487 = vmatprep.subr.bf16.mxu0 %v312
  %1488 = vmatpush1.bf16.msra.mxu0 %v311
  %1489 = vmatprep.subr.bf16.mxu0 %v306
  %1490 = vmatpush1.bf16.msra.mxu0 %v305
  %1491 = vmatprep.subr.bf16.mxu0 %v300
  %1492 = vmatpush1.bf16.msra.mxu0 %v299
  %1493 = vmatprep.subr.bf16.mxu0 %v294
  %1494 = vmatpush1.bf16.msra.mxu0 %v293
  %1495 = vmatprep.subr.bf16.mxu0 %v288
  %1496 = vmatpush1.bf16.msra.mxu0 %v287
  %1497 = vmatprep.subr.bf16.mxu0 0
  %1498 = vmatpush2.bf16.msra.mxu0 0
  %1499 = vmatprep.subr.bf16.mxu0 0
  %1500 = vmatpush2.bf16.msra.mxu0 0
  %1501 = vmatprep.subr.bf16.mxu0 0
  %1502 = vmatpush2.bf16.msra.mxu0 0
  %1503 = vmatprep.subr.bf16.mxu0 0
  %1504 = vmatpush2.bf16.msra.mxu0 0
  %1505 = vmatprep.subr.bf16.mxu0 0
  %1506 = vmatpush2.bf16.msra.mxu0 0
  %1507 = vmatprep.subr.bf16.mxu0 0
  %1508 = vmatpush2.bf16.msra.mxu0 0
  %1509 = vmatprep.subr.bf16.mxu0 %v342
  %1510 = vmatpush2.bf16.msra.mxu0 %v341
  %1511 = vmatprep.subr.bf16.mxu0 %v336
  %1512 = vmatpush2.bf16.msra.mxu0 %v335
  %1513 = vmatprep.mubr.bf16.mxu0 %v1423
  %1514 = vmatmul.mubr.bf16.gmra.mxu0 %v1416
  %v1515 = vpop.f32.mrf.mxu0
  %v1516 = vadd.f32 0.0, %v1515
  %v1517 = vpop.f32.mrf.mxu0
  %v1518 = vadd.f32 0.0, %v1517
  %v1519 = vpop.f32.mrf.mxu0
  %v1520 = vadd.f32 0.0, %v1519
  %v1521 = vpop.f32.mrf.mxu0
  %v1522 = vadd.f32 0.0, %v1521
  %1523 = vmatprep.mubr.bf16.mxu0 %v1426
  %1524 = vmatmul.mubr.bf16.gmra.mxu0 %v1418
  %v1525 = vpop.f32.mrf.mxu0
  %v1526 = vadd.f32 0.0, %v1525
  %v1527 = vpop.f32.mrf.mxu0
  %v1528 = vadd.f32 0.0, %v1527
  %v1529 = vpop.f32.mrf.mxu0
  %v1530 = vadd.f32 0.0, %v1529
  %v1531 = vpop.f32.mrf.mxu0
  %v1532 = vadd.f32 0.0, %v1531
  %1533 = vdwg.mxu0
  %1534 = vmatprep.subr.bf16.mxu0 %v332
  %1535 = vmatpush1.bf16.msra.mxu0 %v331
  %1536 = vmatprep.subr.bf16.mxu0 %v326
  %1537 = vmatpush1.bf16.msra.mxu0 %v325
  %1538 = vmatprep.subr.bf16.mxu0 %v320
  %1539 = vmatpush1.bf16.msra.mxu0 %v319
  %1540 = vmatprep.subr.bf16.mxu0 %v314
  %1541 = vmatpush1.bf16.msra.mxu0 %v313
  %1542 = vmatprep.subr.bf16.mxu0 %v308
  %1543 = vmatpush1.bf16.msra.mxu0 %v307
  %1544 = vmatprep.subr.bf16.mxu0 %v302
  %1545 = vmatpush1.bf16.msra.mxu0 %v301
  %1546 = vmatprep.subr.bf16.mxu0 %v296
  %1547 = vmatpush1.bf16.msra.mxu0 %v295
  %1548 = vmatprep.subr.bf16.mxu0 %v290
  %1549 = vmatpush1.bf16.msra.mxu0 %v289
  %1550 = vmatprep.subr.bf16.mxu0 0
  %1551 = vmatpush2.bf16.msra.mxu0 0
  %1552 = vmatprep.subr.bf16.mxu0 0
  %1553 = vmatpush2.bf16.msra.mxu0 0
  %1554 = vmatprep.subr.bf16.mxu0 0
  %1555 = vmatpush2.bf16.msra.mxu0 0
  %1556 = vmatprep.subr.bf16.mxu0 0
  %1557 = vmatpush2.bf16.msra.mxu0 0
  %1558 = vmatprep.subr.bf16.mxu0 0
  %1559 = vmatpush2.bf16.msra.mxu0 0
  %1560 = vmatprep.subr.bf16.mxu0 0
  %1561 = vmatpush2.bf16.msra.mxu0 0
  %1562 = vmatprep.subr.bf16.mxu0 %v344
  %1563 = vmatpush2.bf16.msra.mxu0 %v343
  %1564 = vmatprep.subr.bf16.mxu0 %v338
  %1565 = vmatpush2.bf16.msra.mxu0 %v337
  %1566 = vmatprep.mubr.bf16.mxu0 %v1423
  %1567 = vmatmul.mubr.bf16.gmra.mxu0 %v1416
  %v1568 = vpop.f32.mrf.mxu0
  %v1569 = vadd.f32 0.0, %v1568
  %v1570 = vpop.f32.mrf.mxu0
  %v1571 = vadd.f32 0.0, %v1570
  %v1572 = vpop.f32.mrf.mxu0
  %v1573 = vadd.f32 0.0, %v1572
  %v1574 = vpop.f32.mrf.mxu0
  %v1575 = vadd.f32 0.0, %v1574
  %1576 = vmatprep.mubr.bf16.mxu0 %v1426
  %1577 = vmatmul.mubr.bf16.gmra.mxu0 %v1418
  %v1578 = vpop.f32.mrf.mxu0
  %v1579 = vadd.f32 0.0, %v1578
  %v1580 = vpop.f32.mrf.mxu0
  %v1581 = vadd.f32 0.0, %v1580
  %v1582 = vpop.f32.mrf.mxu0
  %v1583 = vadd.f32 0.0, %v1582
  %v1584 = vpop.f32.mrf.mxu0
  %v1585 = vadd.f32 0.0, %v1584
  %1586 = vdwg.mxu0
  %1587 = vrot.lane.b32.xlu0 %v1463, 109
  %v1588 = vpop.permute.xlu0 %1587
  %1589 = vrot.lane.b32.xlu0 %v1467, 109
  %v1590 = vpop.permute.xlu0 %1589
  %1591 = vrot.lane.b32.xlu0 %v1473, 109
  %v1592 = vpop.permute.xlu0 %1591
  %1593 = vrot.lane.b32.xlu0 %v1477, 109
  %v1594 = vpop.permute.xlu0 %1593
  %1595 = vrot.lane.b32.xlu0 %v1465, 109
  %v1596 = vpop.permute.xlu0 %1595
  %1597 = vrot.lane.b32.xlu0 %v1469, 109
  %v1598 = vpop.permute.xlu0 %1597
  %1599 = vrot.lane.b32.xlu0 %v1475, 109
  %v1600 = vpop.permute.xlu0 %1599
  %1601 = vrot.lane.b32.xlu0 %v1479, 109
  %v1602 = vpop.permute.xlu0 %1601
  %1603 = vrot.lane.b32.xlu0 %v1516, 109
  %v1604 = vpop.permute.xlu0 %1603
  %1605 = vrot.lane.b32.xlu0 %v1520, 109
  %v1606 = vpop.permute.xlu0 %1605
  %1607 = vrot.lane.b32.xlu0 %v1526, 109
  %v1608 = vpop.permute.xlu0 %1607
  %1609 = vrot.lane.b32.xlu0 %v1530, 109
  %v1610 = vpop.permute.xlu0 %1609
  %1611 = vrot.lane.b32.xlu0 %v1518, 109
  %v1612 = vpop.permute.xlu0 %1611
  %1613 = vrot.lane.b32.xlu0 %v1522, 109
  %v1614 = vpop.permute.xlu0 %1613
  %1615 = vrot.lane.b32.xlu0 %v1528, 109
  %v1616 = vpop.permute.xlu0 %1615
  %1617 = vrot.lane.b32.xlu0 %v1532, 109
  %v1618 = vpop.permute.xlu0 %1617
  %1619 = vrot.lane.b32.xlu0 %v1569, 109
  %v1620 = vpop.permute.xlu0 %1619
  %1621 = vrot.lane.b32.xlu0 %v1573, 109
  %v1622 = vpop.permute.xlu0 %1621
  %1623 = vrot.lane.b32.xlu0 %v1579, 109
  %v1624 = vpop.permute.xlu0 %1623
  %1625 = vrot.lane.b32.xlu0 %v1583, 109
  %v1626 = vpop.permute.xlu0 %1625
  %1627 = vrot.lane.b32.xlu0 %v1571, 109
  %v1628 = vpop.permute.xlu0 %1627
  %1629 = vrot.lane.b32.xlu0 %v1575, 109
  %v1630 = vpop.permute.xlu0 %1629
  %1631 = vrot.lane.b32.xlu0 %v1581, 109
  %v1632 = vpop.permute.xlu0 %1631
  %1633 = vrot.lane.b32.xlu0 %v1585, 109
  %v1634 = vpop.permute.xlu0 %1633
  %vm1635 = vcmp.lt.s32.totalorder %v620, 109
  %v1636 = vsel %vm1635, %v1620, %v1628
  %v1637 = vsel %vm1635, %v1622, %v1630
  %v1638 = vsel %vm1635, %v1624, %v1632
  %v1639 = vsel %vm1635, %v1626, %v1634
  %v1640 = vsel %vm1635, %v1612, %v1620
  %v1641 = vsel %vm1635, %v1614, %v1622
  %v1642 = vsel %vm1635, %v1616, %v1624
  %v1643 = vsel %vm1635, %v1618, %v1626
  %v1644 = vsel %vm1635, %v1604, %v1612
  %v1645 = vsel %vm1635, %v1606, %v1614
  %v1646 = vsel %vm1635, %v1608, %v1616
  %v1647 = vsel %vm1635, %v1610, %v1618
  %v1648 = vsel %vm1635, %v1596, %v1604
  %v1649 = vsel %vm1635, %v1598, %v1606
  %v1650 = vsel %vm1635, %v1600, %v1608
  %v1651 = vsel %vm1635, %v1602, %v1610
  %v1652 = vsel %vm1635, %v1588, %v1596
  %v1653 = vsel %vm1635, %v1590, %v1598
  %v1654 = vsel %vm1635, %v1592, %v1600
  %v1655 = vsel %vm1635, %v1594, %v1602
  %v1656 = vsel %vm1635, %v1628, %v1588
  %v1657 = vsel %vm1635, %v1630, %v1590
  %v1658 = vsel %vm1635, %v1632, %v1592
  %v1659 = vsel %vm1635, %v1634, %v1594
  %v1660 = vadd.f32 %v1375, %v1652
  %v1661 = vadd.f32 %v1376, %v1648
  %v1662 = vadd.f32 %v1377, %v1644
  %v1663 = vadd.f32 %v1378, %v1640
  %v1664 = vadd.f32 %v1379, %v1636
  %v1665 = vadd.f32 %v1380, %v1656
  %v1666 = vadd.f32 %v1381, %v1653
  %v1667 = vadd.f32 %v1382, %v1649
  %v1668 = vadd.f32 %v1383, %v1645
  %v1669 = vadd.f32 %v1384, %v1641
  %v1670 = vadd.f32 %v1385, %v1637
  %v1671 = vadd.f32 %v1386, %v1657
  %v1672 = vadd.f32 %v1387, %v1654
  %v1673 = vadd.f32 %v1388, %v1650
  %v1674 = vadd.f32 %v1389, %v1646
  %v1675 = vadd.f32 %v1390, %v1642
  %v1676 = vadd.f32 %v1391, %v1638
  %v1677 = vadd.f32 %v1392, %v1658
  %v1678 = vadd.f32 %v1393, %v1655
  %v1679 = vadd.f32 %v1394, %v1651
  %v1680 = vadd.f32 %v1395, %v1647
  %v1681 = vadd.f32 %v1396, %v1643
  %v1682 = vadd.f32 %v1397, %v1639
  %v1683 = vadd.f32 %v1398, %v1659
  %s1684 = scalar_lea.vmem %s1, 160
  %v1685 = vld [vmem:[%s1684] sm:$0xff]
  %v1686 = vld [vmem:[%s1684 + $0x8] sm:$0xff]
  %v1687 = vld [vmem:[%s1684 + $0x10] sm:$0xff]
  %v1688 = vld [vmem:[%s1684 + $0x18] sm:$0xff]
  %v1693 = vunpack.c.l.b16 %v1685
  %v1694 = vunpack.c.h.b16 %v1685
  %v1695 = vunpack.c.l.b16 %v1686
  %v1696 = vunpack.c.h.b16 %v1686
  %v1697 = vunpack.c.l.b16 %v1687
  %v1698 = vunpack.c.h.b16 %v1687
  %v1699 = vunpack.c.l.b16 %v1688
  %v1700 = vunpack.c.h.b16 %v1688
  %v1701 = vpack.c.b16 %v1695, %v1693
  %v1702 = vpack.c.b16 %v1696, %v1694
  %v1703 = vpack.c.b16 %v1699, %v1697
  %v1704 = vpack.c.b16 %v1700, %v1698
  %v1708 = vsel %vm405, %v1702, 0
  %v1711 = vsel %vm405, %v1704, 0
  %1713 = vmatprep.subr.bf16.mxu0 %v328
  %1714 = vmatpush1.bf16.msra.mxu0 %v327
  %1715 = vmatprep.subr.bf16.mxu0 %v322
  %1716 = vmatpush1.bf16.msra.mxu0 %v321
  %1717 = vmatprep.subr.bf16.mxu0 %v316
  %1718 = vmatpush1.bf16.msra.mxu0 %v315
  %1719 = vmatprep.subr.bf16.mxu0 %v310
  %1720 = vmatpush1.bf16.msra.mxu0 %v309
  %1721 = vmatprep.subr.bf16.mxu0 %v304
  %1722 = vmatpush1.bf16.msra.mxu0 %v303
  %1723 = vmatprep.subr.bf16.mxu0 %v298
  %1724 = vmatpush1.bf16.msra.mxu0 %v297
  %1725 = vmatprep.subr.bf16.mxu0 %v292
  %1726 = vmatpush1.bf16.msra.mxu0 %v291
  %1727 = vmatprep.subr.bf16.mxu0 %v286
  %1728 = vmatpush1.bf16.msra.mxu0 %v285
  %1729 = vmatprep.subr.bf16.mxu0 0
  %1730 = vmatpush2.bf16.msra.mxu0 0
  %1731 = vmatprep.subr.bf16.mxu0 0
  %1732 = vmatpush2.bf16.msra.mxu0 0
  %1733 = vmatprep.subr.bf16.mxu0 0
  %1734 = vmatpush2.bf16.msra.mxu0 0
  %1735 = vmatprep.subr.bf16.mxu0 0
  %1736 = vmatpush2.bf16.msra.mxu0 0
  %1737 = vmatprep.subr.bf16.mxu0 0
  %1738 = vmatpush2.bf16.msra.mxu0 0
  %1739 = vmatprep.subr.bf16.mxu0 0
  %1740 = vmatpush2.bf16.msra.mxu0 0
  %1741 = vmatprep.subr.bf16.mxu0 %v340
  %1742 = vmatpush2.bf16.msra.mxu0 %v339
  %1743 = vmatprep.subr.bf16.mxu0 %v334
  %1744 = vmatpush2.bf16.msra.mxu0 %v333
  %1745 = vmatprep.mubr.bf16.mxu0 %v1708
  %1746 = vmatmul.mubr.bf16.gmra.mxu0 %v1701
  %v1747 = vpop.f32.mrf.mxu0
  %v1748 = vadd.f32 0.0, %v1747
  %v1749 = vpop.f32.mrf.mxu0
  %v1750 = vadd.f32 0.0, %v1749
  %v1751 = vpop.f32.mrf.mxu0
  %v1752 = vadd.f32 0.0, %v1751
  %v1753 = vpop.f32.mrf.mxu0
  %v1754 = vadd.f32 0.0, %v1753
  %1755 = vmatprep.mubr.bf16.mxu0 %v1711
  %1756 = vmatmul.mubr.bf16.gmra.mxu0 %v1703
  %v1757 = vpop.f32.mrf.mxu0
  %v1758 = vadd.f32 0.0, %v1757
  %v1759 = vpop.f32.mrf.mxu0
  %v1760 = vadd.f32 0.0, %v1759
  %v1761 = vpop.f32.mrf.mxu0
  %v1762 = vadd.f32 0.0, %v1761
  %v1763 = vpop.f32.mrf.mxu0
  %v1764 = vadd.f32 0.0, %v1763
  %1765 = vdwg.mxu0
  %1766 = vmatprep.subr.bf16.mxu0 %v330
  %1767 = vmatpush1.bf16.msra.mxu0 %v329
  %1768 = vmatprep.subr.bf16.mxu0 %v324
  %1769 = vmatpush1.bf16.msra.mxu0 %v323
  %1770 = vmatprep.subr.bf16.mxu0 %v318
  %1771 = vmatpush1.bf16.msra.mxu0 %v317
  %1772 = vmatprep.subr.bf16.mxu0 %v312
  %1773 = vmatpush1.bf16.msra.mxu0 %v311
  %1774 = vmatprep.subr.bf16.mxu0 %v306
  %1775 = vmatpush1.bf16.msra.mxu0 %v305
  %1776 = vmatprep.subr.bf16.mxu0 %v300
  %1777 = vmatpush1.bf16.msra.mxu0 %v299
  %1778 = vmatprep.subr.bf16.mxu0 %v294
  %1779 = vmatpush1.bf16.msra.mxu0 %v293
  %1780 = vmatprep.subr.bf16.mxu0 %v288
  %1781 = vmatpush1.bf16.msra.mxu0 %v287
  %1782 = vmatprep.subr.bf16.mxu0 0
  %1783 = vmatpush2.bf16.msra.mxu0 0
  %1784 = vmatprep.subr.bf16.mxu0 0
  %1785 = vmatpush2.bf16.msra.mxu0 0
  %1786 = vmatprep.subr.bf16.mxu0 0
  %1787 = vmatpush2.bf16.msra.mxu0 0
  %1788 = vmatprep.subr.bf16.mxu0 0
  %1789 = vmatpush2.bf16.msra.mxu0 0
  %1790 = vmatprep.subr.bf16.mxu0 0
  %1791 = vmatpush2.bf16.msra.mxu0 0
  %1792 = vmatprep.subr.bf16.mxu0 0
  %1793 = vmatpush2.bf16.msra.mxu0 0
  %1794 = vmatprep.subr.bf16.mxu0 %v342
  %1795 = vmatpush2.bf16.msra.mxu0 %v341
  %1796 = vmatprep.subr.bf16.mxu0 %v336
  %1797 = vmatpush2.bf16.msra.mxu0 %v335
  %1798 = vmatprep.mubr.bf16.mxu0 %v1708
  %1799 = vmatmul.mubr.bf16.gmra.mxu0 %v1701
  %v1800 = vpop.f32.mrf.mxu0
  %v1801 = vadd.f32 0.0, %v1800
  %v1802 = vpop.f32.mrf.mxu0
  %v1803 = vadd.f32 0.0, %v1802
  %v1804 = vpop.f32.mrf.mxu0
  %v1805 = vadd.f32 0.0, %v1804
  %v1806 = vpop.f32.mrf.mxu0
  %v1807 = vadd.f32 0.0, %v1806
  %1808 = vmatprep.mubr.bf16.mxu0 %v1711
  %1809 = vmatmul.mubr.bf16.gmra.mxu0 %v1703
  %v1810 = vpop.f32.mrf.mxu0
  %v1811 = vadd.f32 0.0, %v1810
  %v1812 = vpop.f32.mrf.mxu0
  %v1813 = vadd.f32 0.0, %v1812
  %v1814 = vpop.f32.mrf.mxu0
  %v1815 = vadd.f32 0.0, %v1814
  %v1816 = vpop.f32.mrf.mxu0
  %v1817 = vadd.f32 0.0, %v1816
  %1818 = vdwg.mxu0
  %1819 = vmatprep.subr.bf16.mxu0 %v332
  %1820 = vmatpush1.bf16.msra.mxu0 %v331
  %1821 = vmatprep.subr.bf16.mxu0 %v326
  %1822 = vmatpush1.bf16.msra.mxu0 %v325
  %1823 = vmatprep.subr.bf16.mxu0 %v320
  %1824 = vmatpush1.bf16.msra.mxu0 %v319
  %1825 = vmatprep.subr.bf16.mxu0 %v314
  %1826 = vmatpush1.bf16.msra.mxu0 %v313
  %1827 = vmatprep.subr.bf16.mxu0 %v308
  %1828 = vmatpush1.bf16.msra.mxu0 %v307
  %1829 = vmatprep.subr.bf16.mxu0 %v302
  %1830 = vmatpush1.bf16.msra.mxu0 %v301
  %1831 = vmatprep.subr.bf16.mxu0 %v296
  %1832 = vmatpush1.bf16.msra.mxu0 %v295
  %1833 = vmatprep.subr.bf16.mxu0 %v290
  %1834 = vmatpush1.bf16.msra.mxu0 %v289
  %1835 = vmatprep.subr.bf16.mxu0 0
  %1836 = vmatpush2.bf16.msra.mxu0 0
  %1837 = vmatprep.subr.bf16.mxu0 0
  %1838 = vmatpush2.bf16.msra.mxu0 0
  %1839 = vmatprep.subr.bf16.mxu0 0
  %1840 = vmatpush2.bf16.msra.mxu0 0
  %1841 = vmatprep.subr.bf16.mxu0 0
  %1842 = vmatpush2.bf16.msra.mxu0 0
  %1843 = vmatprep.subr.bf16.mxu0 0
  %1844 = vmatpush2.bf16.msra.mxu0 0
  %1845 = vmatprep.subr.bf16.mxu0 0
  %1846 = vmatpush2.bf16.msra.mxu0 0
  %1847 = vmatprep.subr.bf16.mxu0 %v344
  %1848 = vmatpush2.bf16.msra.mxu0 %v343
  %1849 = vmatprep.subr.bf16.mxu0 %v338
  %1850 = vmatpush2.bf16.msra.mxu0 %v337
  %1851 = vmatprep.mubr.bf16.mxu0 %v1708
  %1852 = vmatmul.mubr.bf16.gmra.mxu0 %v1701
  %v1853 = vpop.f32.mrf.mxu0
  %v1854 = vadd.f32 0.0, %v1853
  %v1855 = vpop.f32.mrf.mxu0
  %v1856 = vadd.f32 0.0, %v1855
  %v1857 = vpop.f32.mrf.mxu0
  %v1858 = vadd.f32 0.0, %v1857
  %v1859 = vpop.f32.mrf.mxu0
  %v1860 = vadd.f32 0.0, %v1859
  %1861 = vmatprep.mubr.bf16.mxu0 %v1711
  %1862 = vmatmul.mubr.bf16.gmra.mxu0 %v1703
  %v1863 = vpop.f32.mrf.mxu0
  %v1864 = vadd.f32 0.0, %v1863
  %v1865 = vpop.f32.mrf.mxu0
  %v1866 = vadd.f32 0.0, %v1865
  %v1867 = vpop.f32.mrf.mxu0
  %v1868 = vadd.f32 0.0, %v1867
  %v1869 = vpop.f32.mrf.mxu0
  %v1870 = vadd.f32 0.0, %v1869
  %1871 = vdwg.mxu0
  %1872 = vrot.lane.b32.xlu0 %v1748, 108
  %v1873 = vpop.permute.xlu0 %1872
  %1874 = vrot.lane.b32.xlu0 %v1752, 108
  %v1875 = vpop.permute.xlu0 %1874
  %1876 = vrot.lane.b32.xlu0 %v1758, 108
  %v1877 = vpop.permute.xlu0 %1876
  %1878 = vrot.lane.b32.xlu0 %v1762, 108
  %v1879 = vpop.permute.xlu0 %1878
  %1880 = vrot.lane.b32.xlu0 %v1750, 108
  %v1881 = vpop.permute.xlu0 %1880
  %1882 = vrot.lane.b32.xlu0 %v1754, 108
  %v1883 = vpop.permute.xlu0 %1882
  %1884 = vrot.lane.b32.xlu0 %v1760, 108
  %v1885 = vpop.permute.xlu0 %1884
  %1886 = vrot.lane.b32.xlu0 %v1764, 108
  %v1887 = vpop.permute.xlu0 %1886
  %1888 = vrot.lane.b32.xlu0 %v1801, 108
  %v1889 = vpop.permute.xlu0 %1888
  %1890 = vrot.lane.b32.xlu0 %v1805, 108
  %v1891 = vpop.permute.xlu0 %1890
  %1892 = vrot.lane.b32.xlu0 %v1811, 108
  %v1893 = vpop.permute.xlu0 %1892
  %1894 = vrot.lane.b32.xlu0 %v1815, 108
  %v1895 = vpop.permute.xlu0 %1894
  %1896 = vrot.lane.b32.xlu0 %v1803, 108
  %v1897 = vpop.permute.xlu0 %1896
  %1898 = vrot.lane.b32.xlu0 %v1807, 108
  %v1899 = vpop.permute.xlu0 %1898
  %1900 = vrot.lane.b32.xlu0 %v1813, 108
  %v1901 = vpop.permute.xlu0 %1900
  %1902 = vrot.lane.b32.xlu0 %v1817, 108
  %v1903 = vpop.permute.xlu0 %1902
  %1904 = vrot.lane.b32.xlu0 %v1854, 108
  %v1905 = vpop.permute.xlu0 %1904
  %1906 = vrot.lane.b32.xlu0 %v1858, 108
  %v1907 = vpop.permute.xlu0 %1906
  %1908 = vrot.lane.b32.xlu0 %v1864, 108
  %v1909 = vpop.permute.xlu0 %1908
  %1910 = vrot.lane.b32.xlu0 %v1868, 108
  %v1911 = vpop.permute.xlu0 %1910
  %1912 = vrot.lane.b32.xlu0 %v1856, 108
  %v1913 = vpop.permute.xlu0 %1912
  %1914 = vrot.lane.b32.xlu0 %v1860, 108
  %v1915 = vpop.permute.xlu0 %1914
  %1916 = vrot.lane.b32.xlu0 %v1866, 108
  %v1917 = vpop.permute.xlu0 %1916
  %1918 = vrot.lane.b32.xlu0 %v1870, 108
  %v1919 = vpop.permute.xlu0 %1918
  %vm1920 = vcmp.lt.s32.totalorder %v620, 108
  %v1921 = vsel %vm1920, %v1905, %v1913
  %v1922 = vsel %vm1920, %v1907, %v1915
  %v1923 = vsel %vm1920, %v1909, %v1917
  %v1924 = vsel %vm1920, %v1911, %v1919
  %v1925 = vsel %vm1920, %v1897, %v1905
  %v1926 = vsel %vm1920, %v1899, %v1907
  %v1927 = vsel %vm1920, %v1901, %v1909
  %v1928 = vsel %vm1920, %v1903, %v1911
  %v1929 = vsel %vm1920, %v1889, %v1897
  %v1930 = vsel %vm1920, %v1891, %v1899
  %v1931 = vsel %vm1920, %v1893, %v1901
  %v1932 = vsel %vm1920, %v1895, %v1903
  %v1933 = vsel %vm1920, %v1881, %v1889
  %v1934 = vsel %vm1920, %v1883, %v1891
  %v1935 = vsel %vm1920, %v1885, %v1893
  %v1936 = vsel %vm1920, %v1887, %v1895
  %v1937 = vsel %vm1920, %v1873, %v1881
  %v1938 = vsel %vm1920, %v1875, %v1883
  %v1939 = vsel %vm1920, %v1877, %v1885
  %v1940 = vsel %vm1920, %v1879, %v1887
  %v1941 = vsel %vm1920, %v1913, %v1873
  %v1942 = vsel %vm1920, %v1915, %v1875
  %v1943 = vsel %vm1920, %v1917, %v1877
  %v1944 = vsel %vm1920, %v1919, %v1879
  %v1945 = vadd.f32 %v1660, %v1937
  %v1946 = vadd.f32 %v1661, %v1933
  %v1947 = vadd.f32 %v1662, %v1929
  %v1948 = vadd.f32 %v1663, %v1925
  %v1949 = vadd.f32 %v1664, %v1921
  %v1950 = vadd.f32 %v1665, %v1941
  %v1951 = vadd.f32 %v1666, %v1938
  %v1952 = vadd.f32 %v1667, %v1934
  %v1953 = vadd.f32 %v1668, %v1930
  %v1954 = vadd.f32 %v1669, %v1926
  %v1955 = vadd.f32 %v1670, %v1922
  %v1956 = vadd.f32 %v1671, %v1942
  %v1957 = vadd.f32 %v1672, %v1939
  %v1958 = vadd.f32 %v1673, %v1935
  %v1959 = vadd.f32 %v1674, %v1931
  %v1960 = vadd.f32 %v1675, %v1927
  %v1961 = vadd.f32 %v1676, %v1923
  %v1962 = vadd.f32 %v1677, %v1943
  %v1963 = vadd.f32 %v1678, %v1940
  %v1964 = vadd.f32 %v1679, %v1936
  %v1965 = vadd.f32 %v1680, %v1932
  %v1966 = vadd.f32 %v1681, %v1928
  %v1967 = vadd.f32 %v1682, %v1924
  %v1968 = vadd.f32 %v1683, %v1944
  %s1969 = scalar_lea.vmem %s1, 192
  %v1970 = vld [vmem:[%s1969] sm:$0xff]
  %v1971 = vld [vmem:[%s1969 + $0x8] sm:$0xff]
  %v1972 = vld [vmem:[%s1969 + $0x10] sm:$0xff]
  %v1973 = vld [vmem:[%s1969 + $0x18] sm:$0xff]
  %v1978 = vunpack.c.l.b16 %v1970
  %v1979 = vunpack.c.h.b16 %v1970
  %v1980 = vunpack.c.l.b16 %v1971
  %v1981 = vunpack.c.h.b16 %v1971
  %v1982 = vunpack.c.l.b16 %v1972
  %v1983 = vunpack.c.h.b16 %v1972
  %v1984 = vunpack.c.l.b16 %v1973
  %v1985 = vunpack.c.h.b16 %v1973
  %v1986 = vpack.c.b16 %v1980, %v1978
  %v1987 = vpack.c.b16 %v1981, %v1979
  %v1988 = vpack.c.b16 %v1984, %v1982
  %v1989 = vpack.c.b16 %v1985, %v1983
  %v1993 = vsel %vm405, %v1987, 0
  %v1996 = vsel %vm405, %v1989, 0
  %1998 = vmatprep.subr.bf16.mxu0 %v328
  %1999 = vmatpush1.bf16.msra.mxu0 %v327
  %2000 = vmatprep.subr.bf16.mxu0 %v322
  %2001 = vmatpush1.bf16.msra.mxu0 %v321
  %2002 = vmatprep.subr.bf16.mxu0 %v316
  %2003 = vmatpush1.bf16.msra.mxu0 %v315
  %2004 = vmatprep.subr.bf16.mxu0 %v310
  %2005 = vmatpush1.bf16.msra.mxu0 %v309
  %2006 = vmatprep.subr.bf16.mxu0 %v304
  %2007 = vmatpush1.bf16.msra.mxu0 %v303
  %2008 = vmatprep.subr.bf16.mxu0 %v298
  %2009 = vmatpush1.bf16.msra.mxu0 %v297
  %2010 = vmatprep.subr.bf16.mxu0 %v292
  %2011 = vmatpush1.bf16.msra.mxu0 %v291
  %2012 = vmatprep.subr.bf16.mxu0 %v286
  %2013 = vmatpush1.bf16.msra.mxu0 %v285
  %2014 = vmatprep.subr.bf16.mxu0 0
  %2015 = vmatpush2.bf16.msra.mxu0 0
  %2016 = vmatprep.subr.bf16.mxu0 0
  %2017 = vmatpush2.bf16.msra.mxu0 0
  %2018 = vmatprep.subr.bf16.mxu0 0
  %2019 = vmatpush2.bf16.msra.mxu0 0
  %2020 = vmatprep.subr.bf16.mxu0 0
  %2021 = vmatpush2.bf16.msra.mxu0 0
  %2022 = vmatprep.subr.bf16.mxu0 0
  %2023 = vmatpush2.bf16.msra.mxu0 0
  %2024 = vmatprep.subr.bf16.mxu0 0
  %2025 = vmatpush2.bf16.msra.mxu0 0
  %2026 = vmatprep.subr.bf16.mxu0 %v340
  %2027 = vmatpush2.bf16.msra.mxu0 %v339
  %2028 = vmatprep.subr.bf16.mxu0 %v334
  %2029 = vmatpush2.bf16.msra.mxu0 %v333
  %2030 = vmatprep.mubr.bf16.mxu0 %v1993
  %2031 = vmatmul.mubr.bf16.gmra.mxu0 %v1986
  %v2032 = vpop.f32.mrf.mxu0
  %v2033 = vadd.f32 0.0, %v2032
  %v2034 = vpop.f32.mrf.mxu0
  %v2035 = vadd.f32 0.0, %v2034
  %v2036 = vpop.f32.mrf.mxu0
  %v2037 = vadd.f32 0.0, %v2036
  %v2038 = vpop.f32.mrf.mxu0
  %v2039 = vadd.f32 0.0, %v2038
  %2040 = vmatprep.mubr.bf16.mxu0 %v1996
  %2041 = vmatmul.mubr.bf16.gmra.mxu0 %v1988
  %v2042 = vpop.f32.mrf.mxu0
  %v2043 = vadd.f32 0.0, %v2042
  %v2044 = vpop.f32.mrf.mxu0
  %v2045 = vadd.f32 0.0, %v2044
  %v2046 = vpop.f32.mrf.mxu0
  %v2047 = vadd.f32 0.0, %v2046
  %v2048 = vpop.f32.mrf.mxu0
  %v2049 = vadd.f32 0.0, %v2048
  %2050 = vdwg.mxu0
  %2051 = vmatprep.subr.bf16.mxu0 %v330
  %2052 = vmatpush1.bf16.msra.mxu0 %v329
  %2053 = vmatprep.subr.bf16.mxu0 %v324
  %2054 = vmatpush1.bf16.msra.mxu0 %v323
  %2055 = vmatprep.subr.bf16.mxu0 %v318
  %2056 = vmatpush1.bf16.msra.mxu0 %v317
  %2057 = vmatprep.subr.bf16.mxu0 %v312
  %2058 = vmatpush1.bf16.msra.mxu0 %v311
  %2059 = vmatprep.subr.bf16.mxu0 %v306
  %2060 = vmatpush1.bf16.msra.mxu0 %v305
  %2061 = vmatprep.subr.bf16.mxu0 %v300
  %2062 = vmatpush1.bf16.msra.mxu0 %v299
  %2063 = vmatprep.subr.bf16.mxu0 %v294
  %2064 = vmatpush1.bf16.msra.mxu0 %v293
  %2065 = vmatprep.subr.bf16.mxu0 %v288
  %2066 = vmatpush1.bf16.msra.mxu0 %v287
  %2067 = vmatprep.subr.bf16.mxu0 0
  %2068 = vmatpush2.bf16.msra.mxu0 0
  %2069 = vmatprep.subr.bf16.mxu0 0
  %2070 = vmatpush2.bf16.msra.mxu0 0
  %2071 = vmatprep.subr.bf16.mxu0 0
  %2072 = vmatpush2.bf16.msra.mxu0 0
  %2073 = vmatprep.subr.bf16.mxu0 0
  %2074 = vmatpush2.bf16.msra.mxu0 0
  %2075 = vmatprep.subr.bf16.mxu0 0
  %2076 = vmatpush2.bf16.msra.mxu0 0
  %2077 = vmatprep.subr.bf16.mxu0 0
  %2078 = vmatpush2.bf16.msra.mxu0 0
  %2079 = vmatprep.subr.bf16.mxu0 %v342
  %2080 = vmatpush2.bf16.msra.mxu0 %v341
  %2081 = vmatprep.subr.bf16.mxu0 %v336
  %2082 = vmatpush2.bf16.msra.mxu0 %v335
  %2083 = vmatprep.mubr.bf16.mxu0 %v1993
  %2084 = vmatmul.mubr.bf16.gmra.mxu0 %v1986
  %v2085 = vpop.f32.mrf.mxu0
  %v2086 = vadd.f32 0.0, %v2085
  %v2087 = vpop.f32.mrf.mxu0
  %v2088 = vadd.f32 0.0, %v2087
  %v2089 = vpop.f32.mrf.mxu0
  %v2090 = vadd.f32 0.0, %v2089
  %v2091 = vpop.f32.mrf.mxu0
  %v2092 = vadd.f32 0.0, %v2091
  %2093 = vmatprep.mubr.bf16.mxu0 %v1996
  %2094 = vmatmul.mubr.bf16.gmra.mxu0 %v1988
  %v2095 = vpop.f32.mrf.mxu0
  %v2096 = vadd.f32 0.0, %v2095
  %v2097 = vpop.f32.mrf.mxu0
  %v2098 = vadd.f32 0.0, %v2097
  %v2099 = vpop.f32.mrf.mxu0
  %v2100 = vadd.f32 0.0, %v2099
  %v2101 = vpop.f32.mrf.mxu0
  %v2102 = vadd.f32 0.0, %v2101
  %2103 = vdwg.mxu0
  %2104 = vmatprep.subr.bf16.mxu0 %v332
  %2105 = vmatpush1.bf16.msra.mxu0 %v331
  %2106 = vmatprep.subr.bf16.mxu0 %v326
  %2107 = vmatpush1.bf16.msra.mxu0 %v325
  %2108 = vmatprep.subr.bf16.mxu0 %v320
  %2109 = vmatpush1.bf16.msra.mxu0 %v319
  %2110 = vmatprep.subr.bf16.mxu0 %v314
  %2111 = vmatpush1.bf16.msra.mxu0 %v313
  %2112 = vmatprep.subr.bf16.mxu0 %v308
  %2113 = vmatpush1.bf16.msra.mxu0 %v307
  %2114 = vmatprep.subr.bf16.mxu0 %v302
  %2115 = vmatpush1.bf16.msra.mxu0 %v301
  %2116 = vmatprep.subr.bf16.mxu0 %v296
  %2117 = vmatpush1.bf16.msra.mxu0 %v295
  %2118 = vmatprep.subr.bf16.mxu0 %v290
  %2119 = vmatpush1.bf16.msra.mxu0 %v289
  %2120 = vmatprep.subr.bf16.mxu0 0
  %2121 = vmatpush2.bf16.msra.mxu0 0
  %2122 = vmatprep.subr.bf16.mxu0 0
  %2123 = vmatpush2.bf16.msra.mxu0 0
  %2124 = vmatprep.subr.bf16.mxu0 0
  %2125 = vmatpush2.bf16.msra.mxu0 0
  %2126 = vmatprep.subr.bf16.mxu0 0
  %2127 = vmatpush2.bf16.msra.mxu0 0
  %2128 = vmatprep.subr.bf16.mxu0 0
  %2129 = vmatpush2.bf16.msra.mxu0 0
  %2130 = vmatprep.subr.bf16.mxu0 0
  %2131 = vmatpush2.bf16.msra.mxu0 0
  %2132 = vmatprep.subr.bf16.mxu0 %v344
  %2133 = vmatpush2.bf16.msra.mxu0 %v343
  %2134 = vmatprep.subr.bf16.mxu0 %v338
  %2135 = vmatpush2.bf16.msra.mxu0 %v337
  %2136 = vmatprep.mubr.bf16.mxu0 %v1993
  %2137 = vmatmul.mubr.bf16.gmra.mxu0 %v1986
  %v2138 = vpop.f32.mrf.mxu0
  %v2139 = vadd.f32 0.0, %v2138
  %v2140 = vpop.f32.mrf.mxu0
  %v2141 = vadd.f32 0.0, %v2140
  %v2142 = vpop.f32.mrf.mxu0
  %v2143 = vadd.f32 0.0, %v2142
  %v2144 = vpop.f32.mrf.mxu0
  %v2145 = vadd.f32 0.0, %v2144
  %2146 = vmatprep.mubr.bf16.mxu0 %v1996
  %2147 = vmatmul.mubr.bf16.gmra.mxu0 %v1988
  %v2148 = vpop.f32.mrf.mxu0
  %v2149 = vadd.f32 0.0, %v2148
  %v2150 = vpop.f32.mrf.mxu0
  %v2151 = vadd.f32 0.0, %v2150
  %v2152 = vpop.f32.mrf.mxu0
  %v2153 = vadd.f32 0.0, %v2152
  %v2154 = vpop.f32.mrf.mxu0
  %v2155 = vadd.f32 0.0, %v2154
  %2156 = vdwg.mxu0
  %2157 = vrot.lane.b32.xlu0 %v2033, 92
  %v2158 = vpop.permute.xlu0 %2157
  %2159 = vrot.lane.b32.xlu0 %v2037, 92
  %v2160 = vpop.permute.xlu0 %2159
  %2161 = vrot.lane.b32.xlu0 %v2043, 92
  %v2162 = vpop.permute.xlu0 %2161
  %2163 = vrot.lane.b32.xlu0 %v2047, 92
  %v2164 = vpop.permute.xlu0 %2163
  %2165 = vrot.lane.b32.xlu0 %v2035, 92
  %v2166 = vpop.permute.xlu0 %2165
  %2167 = vrot.lane.b32.xlu0 %v2039, 92
  %v2168 = vpop.permute.xlu0 %2167
  %2169 = vrot.lane.b32.xlu0 %v2045, 92
  %v2170 = vpop.permute.xlu0 %2169
  %2171 = vrot.lane.b32.xlu0 %v2049, 92
  %v2172 = vpop.permute.xlu0 %2171
  %2173 = vrot.lane.b32.xlu0 %v2086, 92
  %v2174 = vpop.permute.xlu0 %2173
  %2175 = vrot.lane.b32.xlu0 %v2090, 92
  %v2176 = vpop.permute.xlu0 %2175
  %2177 = vrot.lane.b32.xlu0 %v2096, 92
  %v2178 = vpop.permute.xlu0 %2177
  %2179 = vrot.lane.b32.xlu0 %v2100, 92
  %v2180 = vpop.permute.xlu0 %2179
  %2181 = vrot.lane.b32.xlu0 %v2088, 92
  %v2182 = vpop.permute.xlu0 %2181
  %2183 = vrot.lane.b32.xlu0 %v2092, 92
  %v2184 = vpop.permute.xlu0 %2183
  %2185 = vrot.lane.b32.xlu0 %v2098, 92
  %v2186 = vpop.permute.xlu0 %2185
  %2187 = vrot.lane.b32.xlu0 %v2102, 92
  %v2188 = vpop.permute.xlu0 %2187
  %2189 = vrot.lane.b32.xlu0 %v2139, 92
  %v2190 = vpop.permute.xlu0 %2189
  %2191 = vrot.lane.b32.xlu0 %v2143, 92
  %v2192 = vpop.permute.xlu0 %2191
  %2193 = vrot.lane.b32.xlu0 %v2149, 92
  %v2194 = vpop.permute.xlu0 %2193
  %2195 = vrot.lane.b32.xlu0 %v2153, 92
  %v2196 = vpop.permute.xlu0 %2195
  %2197 = vrot.lane.b32.xlu0 %v2141, 92
  %v2198 = vpop.permute.xlu0 %2197
  %2199 = vrot.lane.b32.xlu0 %v2145, 92
  %v2200 = vpop.permute.xlu0 %2199
  %2201 = vrot.lane.b32.xlu0 %v2151, 92
  %v2202 = vpop.permute.xlu0 %2201
  %2203 = vrot.lane.b32.xlu0 %v2155, 92
  %v2204 = vpop.permute.xlu0 %2203
  %vm2205 = vcmp.lt.s32.totalorder %v620, 92
  %v2206 = vsel %vm2205, %v2190, %v2198
  %v2207 = vsel %vm2205, %v2192, %v2200
  %v2208 = vsel %vm2205, %v2194, %v2202
  %v2209 = vsel %vm2205, %v2196, %v2204
  %v2210 = vsel %vm2205, %v2182, %v2190
  %v2211 = vsel %vm2205, %v2184, %v2192
  %v2212 = vsel %vm2205, %v2186, %v2194
  %v2213 = vsel %vm2205, %v2188, %v2196
  %v2214 = vsel %vm2205, %v2174, %v2182
  %v2215 = vsel %vm2205, %v2176, %v2184
  %v2216 = vsel %vm2205, %v2178, %v2186
  %v2217 = vsel %vm2205, %v2180, %v2188
  %v2218 = vsel %vm2205, %v2166, %v2174
  %v2219 = vsel %vm2205, %v2168, %v2176
  %v2220 = vsel %vm2205, %v2170, %v2178
  %v2221 = vsel %vm2205, %v2172, %v2180
  %v2222 = vsel %vm2205, %v2158, %v2166
  %v2223 = vsel %vm2205, %v2160, %v2168
  %v2224 = vsel %vm2205, %v2162, %v2170
  %v2225 = vsel %vm2205, %v2164, %v2172
  %v2226 = vsel %vm2205, %v2198, %v2158
  %v2227 = vsel %vm2205, %v2200, %v2160
  %v2228 = vsel %vm2205, %v2202, %v2162
  %v2229 = vsel %vm2205, %v2204, %v2164
  %v2230 = vadd.f32 %v1945, %v2222
  %v2231 = vadd.f32 %v1946, %v2218
  %v2232 = vadd.f32 %v1947, %v2214
  %v2233 = vadd.f32 %v1948, %v2210
  %v2234 = vadd.f32 %v1949, %v2206
  %v2235 = vadd.f32 %v1950, %v2226
  %v2236 = vadd.f32 %v1951, %v2223
  %v2237 = vadd.f32 %v1952, %v2219
  %v2238 = vadd.f32 %v1953, %v2215
  %v2239 = vadd.f32 %v1954, %v2211
  %v2240 = vadd.f32 %v1955, %v2207
  %v2241 = vadd.f32 %v1956, %v2227
  %v2242 = vadd.f32 %v1957, %v2224
  %v2243 = vadd.f32 %v1958, %v2220
  %v2244 = vadd.f32 %v1959, %v2216
  %v2245 = vadd.f32 %v1960, %v2212
  %v2246 = vadd.f32 %v1961, %v2208
  %v2247 = vadd.f32 %v1962, %v2228
  %v2248 = vadd.f32 %v1963, %v2225
  %v2249 = vadd.f32 %v1964, %v2221
  %v2250 = vadd.f32 %v1965, %v2217
  %v2251 = vadd.f32 %v1966, %v2213
  %v2252 = vadd.f32 %v1967, %v2209
  %v2253 = vadd.f32 %v1968, %v2229
  %s2254 = scalar_lea.vmem %s1, 224
  %v2255 = vld [vmem:[%s2254] sm:$0xff]
  %v2256 = vld [vmem:[%s2254 + $0x8] sm:$0xff]
  %v2257 = vld [vmem:[%s2254 + $0x10] sm:$0xff]
  %v2258 = vld [vmem:[%s2254 + $0x18] sm:$0xff]
  %v2263 = vunpack.c.l.b16 %v2255
  %v2264 = vunpack.c.h.b16 %v2255
  %v2265 = vunpack.c.l.b16 %v2256
  %v2266 = vunpack.c.h.b16 %v2256
  %v2267 = vunpack.c.l.b16 %v2257
  %v2268 = vunpack.c.h.b16 %v2257
  %v2269 = vunpack.c.l.b16 %v2258
  %v2270 = vunpack.c.h.b16 %v2258
  %v2271 = vpack.c.b16 %v2265, %v2263
  %v2272 = vpack.c.b16 %v2266, %v2264
  %v2273 = vpack.c.b16 %v2269, %v2267
  %v2274 = vpack.c.b16 %v2270, %v2268
  %v2278 = vsel %vm405, %v2272, 0
  %v2281 = vsel %vm405, %v2274, 0
  %2283 = vmatprep.subr.bf16.mxu0 %v328
  %2284 = vmatpush1.bf16.msra.mxu0 %v327
  %2285 = vmatprep.subr.bf16.mxu0 %v322
  %2286 = vmatpush1.bf16.msra.mxu0 %v321
  %2287 = vmatprep.subr.bf16.mxu0 %v316
  %2288 = vmatpush1.bf16.msra.mxu0 %v315
  %2289 = vmatprep.subr.bf16.mxu0 %v310
  %2290 = vmatpush1.bf16.msra.mxu0 %v309
  %2291 = vmatprep.subr.bf16.mxu0 %v304
  %2292 = vmatpush1.bf16.msra.mxu0 %v303
  %2293 = vmatprep.subr.bf16.mxu0 %v298
  %2294 = vmatpush1.bf16.msra.mxu0 %v297
  %2295 = vmatprep.subr.bf16.mxu0 %v292
  %2296 = vmatpush1.bf16.msra.mxu0 %v291
  %2297 = vmatprep.subr.bf16.mxu0 %v286
  %2298 = vmatpush1.bf16.msra.mxu0 %v285
  %2299 = vmatprep.subr.bf16.mxu0 0
  %2300 = vmatpush2.bf16.msra.mxu0 0
  %2301 = vmatprep.subr.bf16.mxu0 0
  %2302 = vmatpush2.bf16.msra.mxu0 0
  %2303 = vmatprep.subr.bf16.mxu0 0
  %2304 = vmatpush2.bf16.msra.mxu0 0
  %2305 = vmatprep.subr.bf16.mxu0 0
  %2306 = vmatpush2.bf16.msra.mxu0 0
  %2307 = vmatprep.subr.bf16.mxu0 0
  %2308 = vmatpush2.bf16.msra.mxu0 0
  %2309 = vmatprep.subr.bf16.mxu0 0
  %2310 = vmatpush2.bf16.msra.mxu0 0
  %2311 = vmatprep.subr.bf16.mxu0 %v340
  %2312 = vmatpush2.bf16.msra.mxu0 %v339
  %2313 = vmatprep.subr.bf16.mxu0 %v334
  %2314 = vmatpush2.bf16.msra.mxu0 %v333
  %2315 = vmatprep.mubr.bf16.mxu0 %v2278
  %2316 = vmatmul.mubr.bf16.gmra.mxu0 %v2271
  %v2317 = vpop.f32.mrf.mxu0
  %v2318 = vadd.f32 0.0, %v2317
  %v2319 = vpop.f32.mrf.mxu0
  %v2320 = vadd.f32 0.0, %v2319
  %v2321 = vpop.f32.mrf.mxu0
  %v2322 = vadd.f32 0.0, %v2321
  %v2323 = vpop.f32.mrf.mxu0
  %v2324 = vadd.f32 0.0, %v2323
  %2325 = vmatprep.mubr.bf16.mxu0 %v2281
  %2326 = vmatmul.mubr.bf16.gmra.mxu0 %v2273
  %v2327 = vpop.f32.mrf.mxu0
  %v2328 = vadd.f32 0.0, %v2327
  %v2329 = vpop.f32.mrf.mxu0
  %v2330 = vadd.f32 0.0, %v2329
  %v2331 = vpop.f32.mrf.mxu0
  %v2332 = vadd.f32 0.0, %v2331
  %v2333 = vpop.f32.mrf.mxu0
  %v2334 = vadd.f32 0.0, %v2333
  %2335 = vdwg.mxu0
  %2336 = vmatprep.subr.bf16.mxu0 %v330
  %2337 = vmatpush1.bf16.msra.mxu0 %v329
  %2338 = vmatprep.subr.bf16.mxu0 %v324
  %2339 = vmatpush1.bf16.msra.mxu0 %v323
  %2340 = vmatprep.subr.bf16.mxu0 %v318
  %2341 = vmatpush1.bf16.msra.mxu0 %v317
  %2342 = vmatprep.subr.bf16.mxu0 %v312
  %2343 = vmatpush1.bf16.msra.mxu0 %v311
  %2344 = vmatprep.subr.bf16.mxu0 %v306
  %2345 = vmatpush1.bf16.msra.mxu0 %v305
  %2346 = vmatprep.subr.bf16.mxu0 %v300
  %2347 = vmatpush1.bf16.msra.mxu0 %v299
  %2348 = vmatprep.subr.bf16.mxu0 %v294
  %2349 = vmatpush1.bf16.msra.mxu0 %v293
  %2350 = vmatprep.subr.bf16.mxu0 %v288
  %2351 = vmatpush1.bf16.msra.mxu0 %v287
  %2352 = vmatprep.subr.bf16.mxu0 0
  %2353 = vmatpush2.bf16.msra.mxu0 0
  %2354 = vmatprep.subr.bf16.mxu0 0
  %2355 = vmatpush2.bf16.msra.mxu0 0
  %2356 = vmatprep.subr.bf16.mxu0 0
  %2357 = vmatpush2.bf16.msra.mxu0 0
  %2358 = vmatprep.subr.bf16.mxu0 0
  %2359 = vmatpush2.bf16.msra.mxu0 0
  %2360 = vmatprep.subr.bf16.mxu0 0
  %2361 = vmatpush2.bf16.msra.mxu0 0
  %2362 = vmatprep.subr.bf16.mxu0 0
  %2363 = vmatpush2.bf16.msra.mxu0 0
  %2364 = vmatprep.subr.bf16.mxu0 %v342
  %2365 = vmatpush2.bf16.msra.mxu0 %v341
  %2366 = vmatprep.subr.bf16.mxu0 %v336
  %2367 = vmatpush2.bf16.msra.mxu0 %v335
  %2368 = vmatprep.mubr.bf16.mxu0 %v2278
  %2369 = vmatmul.mubr.bf16.gmra.mxu0 %v2271
  %v2370 = vpop.f32.mrf.mxu0
  %v2371 = vadd.f32 0.0, %v2370
  %v2372 = vpop.f32.mrf.mxu0
  %v2373 = vadd.f32 0.0, %v2372
  %v2374 = vpop.f32.mrf.mxu0
  %v2375 = vadd.f32 0.0, %v2374
  %v2376 = vpop.f32.mrf.mxu0
  %v2377 = vadd.f32 0.0, %v2376
  %2378 = vmatprep.mubr.bf16.mxu0 %v2281
  %2379 = vmatmul.mubr.bf16.gmra.mxu0 %v2273
  %v2380 = vpop.f32.mrf.mxu0
  %v2381 = vadd.f32 0.0, %v2380
  %v2382 = vpop.f32.mrf.mxu0
  %v2383 = vadd.f32 0.0, %v2382
  %v2384 = vpop.f32.mrf.mxu0
  %v2385 = vadd.f32 0.0, %v2384
  %v2386 = vpop.f32.mrf.mxu0
  %v2387 = vadd.f32 0.0, %v2386
  %2388 = vdwg.mxu0
  %2389 = vmatprep.subr.bf16.mxu0 %v332
  %2390 = vmatpush1.bf16.msra.mxu0 %v331
  %2391 = vmatprep.subr.bf16.mxu0 %v326
  %2392 = vmatpush1.bf16.msra.mxu0 %v325
  %2393 = vmatprep.subr.bf16.mxu0 %v320
  %2394 = vmatpush1.bf16.msra.mxu0 %v319
  %2395 = vmatprep.subr.bf16.mxu0 %v314
  %2396 = vmatpush1.bf16.msra.mxu0 %v313
  %2397 = vmatprep.subr.bf16.mxu0 %v308
  %2398 = vmatpush1.bf16.msra.mxu0 %v307
  %2399 = vmatprep.subr.bf16.mxu0 %v302
  %2400 = vmatpush1.bf16.msra.mxu0 %v301
  %2401 = vmatprep.subr.bf16.mxu0 %v296
  %2402 = vmatpush1.bf16.msra.mxu0 %v295
  %2403 = vmatprep.subr.bf16.mxu0 %v290
  %2404 = vmatpush1.bf16.msra.mxu0 %v289
  %2405 = vmatprep.subr.bf16.mxu0 0
  %2406 = vmatpush2.bf16.msra.mxu0 0
  %2407 = vmatprep.subr.bf16.mxu0 0
  %2408 = vmatpush2.bf16.msra.mxu0 0
  %2409 = vmatprep.subr.bf16.mxu0 0
  %2410 = vmatpush2.bf16.msra.mxu0 0
  %2411 = vmatprep.subr.bf16.mxu0 0
  %2412 = vmatpush2.bf16.msra.mxu0 0
  %2413 = vmatprep.subr.bf16.mxu0 0
  %2414 = vmatpush2.bf16.msra.mxu0 0
  %2415 = vmatprep.subr.bf16.mxu0 0
  %2416 = vmatpush2.bf16.msra.mxu0 0
  %2417 = vmatprep.subr.bf16.mxu0 %v344
  %2418 = vmatpush2.bf16.msra.mxu0 %v343
  %2419 = vmatprep.subr.bf16.mxu0 %v338
  %2420 = vmatpush2.bf16.msra.mxu0 %v337
  %2421 = vmatprep.mubr.bf16.mxu0 %v2278
  %2422 = vmatmul.mubr.bf16.gmra.mxu0 %v2271
  %v2423 = vpop.f32.mrf.mxu0
  %v2424 = vadd.f32 0.0, %v2423
  %v2425 = vpop.f32.mrf.mxu0
  %v2426 = vadd.f32 0.0, %v2425
  %v2427 = vpop.f32.mrf.mxu0
  %v2428 = vadd.f32 0.0, %v2427
  %v2429 = vpop.f32.mrf.mxu0
  %v2430 = vadd.f32 0.0, %v2429
  %2431 = vmatprep.mubr.bf16.mxu0 %v2281
  %2432 = vmatmul.mubr.bf16.gmra.mxu0 %v2273
  %v2433 = vpop.f32.mrf.mxu0
  %v2434 = vadd.f32 0.0, %v2433
  %v2435 = vpop.f32.mrf.mxu0
  %v2436 = vadd.f32 0.0, %v2435
  %v2437 = vpop.f32.mrf.mxu0
  %v2438 = vadd.f32 0.0, %v2437
  %v2439 = vpop.f32.mrf.mxu0
  %v2440 = vadd.f32 0.0, %v2439
  %2441 = vdwg.mxu0
  %2442 = vrot.lane.b32.xlu0 %v2318, 91
  %v2443 = vpop.permute.xlu0 %2442
  %2444 = vrot.lane.b32.xlu0 %v2322, 91
  %v2445 = vpop.permute.xlu0 %2444
  %2446 = vrot.lane.b32.xlu0 %v2328, 91
  %v2447 = vpop.permute.xlu0 %2446
  %2448 = vrot.lane.b32.xlu0 %v2332, 91
  %v2449 = vpop.permute.xlu0 %2448
  %2450 = vrot.lane.b32.xlu0 %v2320, 91
  %v2451 = vpop.permute.xlu0 %2450
  %2452 = vrot.lane.b32.xlu0 %v2324, 91
  %v2453 = vpop.permute.xlu0 %2452
  %2454 = vrot.lane.b32.xlu0 %v2330, 91
  %v2455 = vpop.permute.xlu0 %2454
  %2456 = vrot.lane.b32.xlu0 %v2334, 91
  %v2457 = vpop.permute.xlu0 %2456
  %2458 = vrot.lane.b32.xlu0 %v2371, 91
  %v2459 = vpop.permute.xlu0 %2458
  %2460 = vrot.lane.b32.xlu0 %v2375, 91
  %v2461 = vpop.permute.xlu0 %2460
  %2462 = vrot.lane.b32.xlu0 %v2381, 91
  %v2463 = vpop.permute.xlu0 %2462
  %2464 = vrot.lane.b32.xlu0 %v2385, 91
  %v2465 = vpop.permute.xlu0 %2464
  %2466 = vrot.lane.b32.xlu0 %v2373, 91
  %v2467 = vpop.permute.xlu0 %2466
  %2468 = vrot.lane.b32.xlu0 %v2377, 91
  %v2469 = vpop.permute.xlu0 %2468
  %2470 = vrot.lane.b32.xlu0 %v2383, 91
  %v2471 = vpop.permute.xlu0 %2470
  %2472 = vrot.lane.b32.xlu0 %v2387, 91
  %v2473 = vpop.permute.xlu0 %2472
  %2474 = vrot.lane.b32.xlu0 %v2424, 91
  %v2475 = vpop.permute.xlu0 %2474
  %2476 = vrot.lane.b32.xlu0 %v2428, 91
  %v2477 = vpop.permute.xlu0 %2476
  %2478 = vrot.lane.b32.xlu0 %v2434, 91
  %v2479 = vpop.permute.xlu0 %2478
  %2480 = vrot.lane.b32.xlu0 %v2438, 91
  %v2481 = vpop.permute.xlu0 %2480
  %2482 = vrot.lane.b32.xlu0 %v2426, 91
  %v2483 = vpop.permute.xlu0 %2482
  %2484 = vrot.lane.b32.xlu0 %v2430, 91
  %v2485 = vpop.permute.xlu0 %2484
  %2486 = vrot.lane.b32.xlu0 %v2436, 91
  %v2487 = vpop.permute.xlu0 %2486
  %2488 = vrot.lane.b32.xlu0 %v2440, 91
  %v2489 = vpop.permute.xlu0 %2488
  %vm2490 = vcmp.lt.s32.totalorder %v620, 91
  %v2491 = vsel %vm2490, %v2475, %v2483
  %v2492 = vsel %vm2490, %v2477, %v2485
  %v2493 = vsel %vm2490, %v2479, %v2487
  %v2494 = vsel %vm2490, %v2481, %v2489
  %v2495 = vsel %vm2490, %v2467, %v2475
  %v2496 = vsel %vm2490, %v2469, %v2477
  %v2497 = vsel %vm2490, %v2471, %v2479
  %v2498 = vsel %vm2490, %v2473, %v2481
  %v2499 = vsel %vm2490, %v2459, %v2467
  %v2500 = vsel %vm2490, %v2461, %v2469
  %v2501 = vsel %vm2490, %v2463, %v2471
  %v2502 = vsel %vm2490, %v2465, %v2473
  %v2503 = vsel %vm2490, %v2451, %v2459
  %v2504 = vsel %vm2490, %v2453, %v2461
  %v2505 = vsel %vm2490, %v2455, %v2463
  %v2506 = vsel %vm2490, %v2457, %v2465
  %v2507 = vsel %vm2490, %v2443, %v2451
  %v2508 = vsel %vm2490, %v2445, %v2453
  %v2509 = vsel %vm2490, %v2447, %v2455
  %v2510 = vsel %vm2490, %v2449, %v2457
  %v2511 = vsel %vm2490, %v2483, %v2443
  %v2512 = vsel %vm2490, %v2485, %v2445
  %v2513 = vsel %vm2490, %v2487, %v2447
  %v2514 = vsel %vm2490, %v2489, %v2449
  %v2515 = vadd.f32 %v2230, %v2507
  %v2516 = vadd.f32 %v2231, %v2503
  %v2517 = vadd.f32 %v2232, %v2499
  %v2518 = vadd.f32 %v2233, %v2495
  %v2519 = vadd.f32 %v2234, %v2491
  %v2520 = vadd.f32 %v2235, %v2511
  %v2521 = vadd.f32 %v2236, %v2508
  %v2522 = vadd.f32 %v2237, %v2504
  %v2523 = vadd.f32 %v2238, %v2500
  %v2524 = vadd.f32 %v2239, %v2496
  %v2525 = vadd.f32 %v2240, %v2492
  %v2526 = vadd.f32 %v2241, %v2512
  %v2527 = vadd.f32 %v2242, %v2509
  %v2528 = vadd.f32 %v2243, %v2505
  %v2529 = vadd.f32 %v2244, %v2501
  %v2530 = vadd.f32 %v2245, %v2497
  %v2531 = vadd.f32 %v2246, %v2493
  %v2532 = vadd.f32 %v2247, %v2513
  %v2533 = vadd.f32 %v2248, %v2510
  %v2534 = vadd.f32 %v2249, %v2506
  %v2535 = vadd.f32 %v2250, %v2502
  %v2536 = vadd.f32 %v2251, %v2498
  %v2537 = vadd.f32 %v2252, %v2494
  %v2538 = vadd.f32 %v2253, %v2514
  %s2539 = scalar_lea.vmem %s1, 256
  %v2540 = vld [vmem:[%s2539] sm:$0xff]
  %v2541 = vld [vmem:[%s2539 + $0x8] sm:$0xff]
  %v2542 = vld [vmem:[%s2539 + $0x10] sm:$0xff]
  %v2543 = vld [vmem:[%s2539 + $0x18] sm:$0xff]
  %v2548 = vunpack.c.l.b16 %v2540
  %v2549 = vunpack.c.h.b16 %v2540
  %v2550 = vunpack.c.l.b16 %v2541
  %v2551 = vunpack.c.h.b16 %v2541
  %v2552 = vunpack.c.l.b16 %v2542
  %v2553 = vunpack.c.h.b16 %v2542
  %v2554 = vunpack.c.l.b16 %v2543
  %v2555 = vunpack.c.h.b16 %v2543
  %v2556 = vpack.c.b16 %v2550, %v2548
  %v2557 = vpack.c.b16 %v2551, %v2549
  %v2558 = vpack.c.b16 %v2554, %v2552
  %v2559 = vpack.c.b16 %v2555, %v2553
  %v2563 = vsel %vm405, %v2557, 0
  %v2566 = vsel %vm405, %v2559, 0
  %2568 = vmatprep.subr.bf16.mxu0 %v328
  %2569 = vmatpush1.bf16.msra.mxu0 %v327
  %2570 = vmatprep.subr.bf16.mxu0 %v322
  %2571 = vmatpush1.bf16.msra.mxu0 %v321
  %2572 = vmatprep.subr.bf16.mxu0 %v316
  %2573 = vmatpush1.bf16.msra.mxu0 %v315
  %2574 = vmatprep.subr.bf16.mxu0 %v310
  %2575 = vmatpush1.bf16.msra.mxu0 %v309
  %2576 = vmatprep.subr.bf16.mxu0 %v304
  %2577 = vmatpush1.bf16.msra.mxu0 %v303
  %2578 = vmatprep.subr.bf16.mxu0 %v298
  %2579 = vmatpush1.bf16.msra.mxu0 %v297
  %2580 = vmatprep.subr.bf16.mxu0 %v292
  %2581 = vmatpush1.bf16.msra.mxu0 %v291
  %2582 = vmatprep.subr.bf16.mxu0 %v286
  %2583 = vmatpush1.bf16.msra.mxu0 %v285
  %2584 = vmatprep.subr.bf16.mxu0 0
  %2585 = vmatpush2.bf16.msra.mxu0 0
  %2586 = vmatprep.subr.bf16.mxu0 0
  %2587 = vmatpush2.bf16.msra.mxu0 0
  %2588 = vmatprep.subr.bf16.mxu0 0
  %2589 = vmatpush2.bf16.msra.mxu0 0
  %2590 = vmatprep.subr.bf16.mxu0 0
  %2591 = vmatpush2.bf16.msra.mxu0 0
  %2592 = vmatprep.subr.bf16.mxu0 0
  %2593 = vmatpush2.bf16.msra.mxu0 0
  %2594 = vmatprep.subr.bf16.mxu0 0
  %2595 = vmatpush2.bf16.msra.mxu0 0
  %2596 = vmatprep.subr.bf16.mxu0 %v340
  %2597 = vmatpush2.bf16.msra.mxu0 %v339
  %2598 = vmatprep.subr.bf16.mxu0 %v334
  %2599 = vmatpush2.bf16.msra.mxu0 %v333
  %2600 = vmatprep.mubr.bf16.mxu0 %v2563
  %2601 = vmatmul.mubr.bf16.gmra.mxu0 %v2556
  %v2602 = vpop.f32.mrf.mxu0
  %v2603 = vadd.f32 0.0, %v2602
  %v2604 = vpop.f32.mrf.mxu0
  %v2605 = vadd.f32 0.0, %v2604
  %v2606 = vpop.f32.mrf.mxu0
  %v2607 = vadd.f32 0.0, %v2606
  %v2608 = vpop.f32.mrf.mxu0
  %v2609 = vadd.f32 0.0, %v2608
  %2610 = vmatprep.mubr.bf16.mxu0 %v2566
  %2611 = vmatmul.mubr.bf16.gmra.mxu0 %v2558
  %v2612 = vpop.f32.mrf.mxu0
  %v2613 = vadd.f32 0.0, %v2612
  %v2614 = vpop.f32.mrf.mxu0
  %v2615 = vadd.f32 0.0, %v2614
  %v2616 = vpop.f32.mrf.mxu0
  %v2617 = vadd.f32 0.0, %v2616
  %v2618 = vpop.f32.mrf.mxu0
  %v2619 = vadd.f32 0.0, %v2618
  %2620 = vdwg.mxu0
  %2621 = vmatprep.subr.bf16.mxu0 %v330
  %2622 = vmatpush1.bf16.msra.mxu0 %v329
  %2623 = vmatprep.subr.bf16.mxu0 %v324
  %2624 = vmatpush1.bf16.msra.mxu0 %v323
  %2625 = vmatprep.subr.bf16.mxu0 %v318
  %2626 = vmatpush1.bf16.msra.mxu0 %v317
  %2627 = vmatprep.subr.bf16.mxu0 %v312
  %2628 = vmatpush1.bf16.msra.mxu0 %v311
  %2629 = vmatprep.subr.bf16.mxu0 %v306
  %2630 = vmatpush1.bf16.msra.mxu0 %v305
  %2631 = vmatprep.subr.bf16.mxu0 %v300
  %2632 = vmatpush1.bf16.msra.mxu0 %v299
  %2633 = vmatprep.subr.bf16.mxu0 %v294
  %2634 = vmatpush1.bf16.msra.mxu0 %v293
  %2635 = vmatprep.subr.bf16.mxu0 %v288
  %2636 = vmatpush1.bf16.msra.mxu0 %v287
  %2637 = vmatprep.subr.bf16.mxu0 0
  %2638 = vmatpush2.bf16.msra.mxu0 0
  %2639 = vmatprep.subr.bf16.mxu0 0
  %2640 = vmatpush2.bf16.msra.mxu0 0
  %2641 = vmatprep.subr.bf16.mxu0 0
  %2642 = vmatpush2.bf16.msra.mxu0 0
  %2643 = vmatprep.subr.bf16.mxu0 0
  %2644 = vmatpush2.bf16.msra.mxu0 0
  %2645 = vmatprep.subr.bf16.mxu0 0
  %2646 = vmatpush2.bf16.msra.mxu0 0
  %2647 = vmatprep.subr.bf16.mxu0 0
  %2648 = vmatpush2.bf16.msra.mxu0 0
  %2649 = vmatprep.subr.bf16.mxu0 %v342
  %2650 = vmatpush2.bf16.msra.mxu0 %v341
  %2651 = vmatprep.subr.bf16.mxu0 %v336
  %2652 = vmatpush2.bf16.msra.mxu0 %v335
  %2653 = vmatprep.mubr.bf16.mxu0 %v2563
  %2654 = vmatmul.mubr.bf16.gmra.mxu0 %v2556
  %v2655 = vpop.f32.mrf.mxu0
  %v2656 = vadd.f32 0.0, %v2655
  %v2657 = vpop.f32.mrf.mxu0
  %v2658 = vadd.f32 0.0, %v2657
  %v2659 = vpop.f32.mrf.mxu0
  %v2660 = vadd.f32 0.0, %v2659
  %v2661 = vpop.f32.mrf.mxu0
  %v2662 = vadd.f32 0.0, %v2661
  %2663 = vmatprep.mubr.bf16.mxu0 %v2566
  %2664 = vmatmul.mubr.bf16.gmra.mxu0 %v2558
  %v2665 = vpop.f32.mrf.mxu0
  %v2666 = vadd.f32 0.0, %v2665
  %v2667 = vpop.f32.mrf.mxu0
  %v2668 = vadd.f32 0.0, %v2667
  %v2669 = vpop.f32.mrf.mxu0
  %v2670 = vadd.f32 0.0, %v2669
  %v2671 = vpop.f32.mrf.mxu0
  %v2672 = vadd.f32 0.0, %v2671
  %2673 = vdwg.mxu0
  %2674 = vmatprep.subr.bf16.mxu0 %v332
  %2675 = vmatpush1.bf16.msra.mxu0 %v331
  %2676 = vmatprep.subr.bf16.mxu0 %v326
  %2677 = vmatpush1.bf16.msra.mxu0 %v325
  %2678 = vmatprep.subr.bf16.mxu0 %v320
  %2679 = vmatpush1.bf16.msra.mxu0 %v319
  %2680 = vmatprep.subr.bf16.mxu0 %v314
  %2681 = vmatpush1.bf16.msra.mxu0 %v313
  %2682 = vmatprep.subr.bf16.mxu0 %v308
  %2683 = vmatpush1.bf16.msra.mxu0 %v307
  %2684 = vmatprep.subr.bf16.mxu0 %v302
  %2685 = vmatpush1.bf16.msra.mxu0 %v301
  %2686 = vmatprep.subr.bf16.mxu0 %v296
  %2687 = vmatpush1.bf16.msra.mxu0 %v295
  %2688 = vmatprep.subr.bf16.mxu0 %v290
  %2689 = vmatpush1.bf16.msra.mxu0 %v289
  %2690 = vmatprep.subr.bf16.mxu0 0
  %2691 = vmatpush2.bf16.msra.mxu0 0
  %2692 = vmatprep.subr.bf16.mxu0 0
  %2693 = vmatpush2.bf16.msra.mxu0 0
  %2694 = vmatprep.subr.bf16.mxu0 0
  %2695 = vmatpush2.bf16.msra.mxu0 0
  %2696 = vmatprep.subr.bf16.mxu0 0
  %2697 = vmatpush2.bf16.msra.mxu0 0
  %2698 = vmatprep.subr.bf16.mxu0 0
  %2699 = vmatpush2.bf16.msra.mxu0 0
  %2700 = vmatprep.subr.bf16.mxu0 0
  %2701 = vmatpush2.bf16.msra.mxu0 0
  %2702 = vmatprep.subr.bf16.mxu0 %v344
  %2703 = vmatpush2.bf16.msra.mxu0 %v343
  %2704 = vmatprep.subr.bf16.mxu0 %v338
  %2705 = vmatpush2.bf16.msra.mxu0 %v337
  %2706 = vmatprep.mubr.bf16.mxu0 %v2563
  %2707 = vmatmul.mubr.bf16.gmra.mxu0 %v2556
  %v2708 = vpop.f32.mrf.mxu0
  %v2709 = vadd.f32 0.0, %v2708
  %v2710 = vpop.f32.mrf.mxu0
  %v2711 = vadd.f32 0.0, %v2710
  %v2712 = vpop.f32.mrf.mxu0
  %v2713 = vadd.f32 0.0, %v2712
  %v2714 = vpop.f32.mrf.mxu0
  %v2715 = vadd.f32 0.0, %v2714
  %2716 = vmatprep.mubr.bf16.mxu0 %v2566
  %2717 = vmatmul.mubr.bf16.gmra.mxu0 %v2558
  %v2718 = vpop.f32.mrf.mxu0
  %v2719 = vadd.f32 0.0, %v2718
  %v2720 = vpop.f32.mrf.mxu0
  %v2721 = vadd.f32 0.0, %v2720
  %v2722 = vpop.f32.mrf.mxu0
  %v2723 = vadd.f32 0.0, %v2722
  %v2724 = vpop.f32.mrf.mxu0
  %v2725 = vadd.f32 0.0, %v2724
  %2726 = vdwg.mxu0
  %2727 = vrot.lane.b32.xlu0 %v2603, 90
  %v2728 = vpop.permute.xlu0 %2727
  %2729 = vrot.lane.b32.xlu0 %v2607, 90
  %v2730 = vpop.permute.xlu0 %2729
  %2731 = vrot.lane.b32.xlu0 %v2613, 90
  %v2732 = vpop.permute.xlu0 %2731
  %2733 = vrot.lane.b32.xlu0 %v2617, 90
  %v2734 = vpop.permute.xlu0 %2733
  %2735 = vrot.lane.b32.xlu0 %v2605, 90
  %v2736 = vpop.permute.xlu0 %2735
  %2737 = vrot.lane.b32.xlu0 %v2609, 90
  %v2738 = vpop.permute.xlu0 %2737
  %2739 = vrot.lane.b32.xlu0 %v2615, 90
  %v2740 = vpop.permute.xlu0 %2739
  %2741 = vrot.lane.b32.xlu0 %v2619, 90
  %v2742 = vpop.permute.xlu0 %2741
  %2743 = vrot.lane.b32.xlu0 %v2656, 90
  %v2744 = vpop.permute.xlu0 %2743
  %2745 = vrot.lane.b32.xlu0 %v2660, 90
  %v2746 = vpop.permute.xlu0 %2745
  %2747 = vrot.lane.b32.xlu0 %v2666, 90
  %v2748 = vpop.permute.xlu0 %2747
  %2749 = vrot.lane.b32.xlu0 %v2670, 90
  %v2750 = vpop.permute.xlu0 %2749
  %2751 = vrot.lane.b32.xlu0 %v2658, 90
  %v2752 = vpop.permute.xlu0 %2751
  %2753 = vrot.lane.b32.xlu0 %v2662, 90
  %v2754 = vpop.permute.xlu0 %2753
  %2755 = vrot.lane.b32.xlu0 %v2668, 90
  %v2756 = vpop.permute.xlu0 %2755
  %2757 = vrot.lane.b32.xlu0 %v2672, 90
  %v2758 = vpop.permute.xlu0 %2757
  %2759 = vrot.lane.b32.xlu0 %v2709, 90
  %v2760 = vpop.permute.xlu0 %2759
  %2761 = vrot.lane.b32.xlu0 %v2713, 90
  %v2762 = vpop.permute.xlu0 %2761
  %2763 = vrot.lane.b32.xlu0 %v2719, 90
  %v2764 = vpop.permute.xlu0 %2763
  %2765 = vrot.lane.b32.xlu0 %v2723, 90
  %v2766 = vpop.permute.xlu0 %2765
  %2767 = vrot.lane.b32.xlu0 %v2711, 90
  %v2768 = vpop.permute.xlu0 %2767
  %2769 = vrot.lane.b32.xlu0 %v2715, 90
  %v2770 = vpop.permute.xlu0 %2769
  %2771 = vrot.lane.b32.xlu0 %v2721, 90
  %v2772 = vpop.permute.xlu0 %2771
  %2773 = vrot.lane.b32.xlu0 %v2725, 90
  %v2774 = vpop.permute.xlu0 %2773
  %vm2775 = vcmp.lt.s32.totalorder %v620, 90
  %v2776 = vsel %vm2775, %v2760, %v2768
  %v2777 = vsel %vm2775, %v2762, %v2770
  %v2778 = vsel %vm2775, %v2764, %v2772
  %v2779 = vsel %vm2775, %v2766, %v2774
  %v2780 = vsel %vm2775, %v2752, %v2760
  %v2781 = vsel %vm2775, %v2754, %v2762
  %v2782 = vsel %vm2775, %v2756, %v2764
  %v2783 = vsel %vm2775, %v2758, %v2766
  %v2784 = vsel %vm2775, %v2744, %v2752
  %v2785 = vsel %vm2775, %v2746, %v2754
  %v2786 = vsel %vm2775, %v2748, %v2756
  %v2787 = vsel %vm2775, %v2750, %v2758
  %v2788 = vsel %vm2775, %v2736, %v2744
  %v2789 = vsel %vm2775, %v2738, %v2746
  %v2790 = vsel %vm2775, %v2740, %v2748
  %v2791 = vsel %vm2775, %v2742, %v2750
  %v2792 = vsel %vm2775, %v2728, %v2736
  %v2793 = vsel %vm2775, %v2730, %v2738
  %v2794 = vsel %vm2775, %v2732, %v2740
  %v2795 = vsel %vm2775, %v2734, %v2742
  %v2796 = vsel %vm2775, %v2768, %v2728
  %v2797 = vsel %vm2775, %v2770, %v2730
  %v2798 = vsel %vm2775, %v2772, %v2732
  %v2799 = vsel %vm2775, %v2774, %v2734
  %v2800 = vadd.f32 %v2515, %v2792
  %v2801 = vadd.f32 %v2516, %v2788
  %v2802 = vadd.f32 %v2517, %v2784
  %v2803 = vadd.f32 %v2518, %v2780
  %v2804 = vadd.f32 %v2519, %v2776
  %v2805 = vadd.f32 %v2520, %v2796
  %v2806 = vadd.f32 %v2521, %v2793
  %v2807 = vadd.f32 %v2522, %v2789
  %v2808 = vadd.f32 %v2523, %v2785
  %v2809 = vadd.f32 %v2524, %v2781
  %v2810 = vadd.f32 %v2525, %v2777
  %v2811 = vadd.f32 %v2526, %v2797
  %v2812 = vadd.f32 %v2527, %v2794
  %v2813 = vadd.f32 %v2528, %v2790
  %v2814 = vadd.f32 %v2529, %v2786
  %v2815 = vadd.f32 %v2530, %v2782
  %v2816 = vadd.f32 %v2531, %v2778
  %v2817 = vadd.f32 %v2532, %v2798
  %v2818 = vadd.f32 %v2533, %v2795
  %v2819 = vadd.f32 %v2534, %v2791
  %v2820 = vadd.f32 %v2535, %v2787
  %v2821 = vadd.f32 %v2536, %v2783
  %v2822 = vadd.f32 %v2537, %v2779
  %v2823 = vadd.f32 %v2538, %v2799
  %v2824 = vld [vmem:[%s2] sm:$0xff]
  %v2825 = vld [vmem:[%s2 + $0x8] sm:$0xff]
  %v2826 = vld [vmem:[%s2 + $0x10] sm:$0xff]
  %v2827 = vld [vmem:[%s2 + $0x18] sm:$0xff]
  %2829 = vset.pattern.permute.xlu0 0
  %2830 = vperm.xlu0 %2829, %v2824
  %v2831 = vpop.permute.xlu0 %2830
  %2834 = vset.pattern.permute.xlu0 0
  %2835 = vperm.xlu0 %2834, %v2825
  %v2836 = vpop.permute.xlu0 %2835
  %2839 = vset.pattern.permute.xlu0 0
  %2840 = vperm.xlu0 %2839, %v2826
  %v2841 = vpop.permute.xlu0 %2840
  %2844 = vset.pattern.permute.xlu0 0
  %2845 = vperm.xlu0 %2844, %v2827
  %v2846 = vpop.permute.xlu0 %2845
  %v2848 = vadd.f32 %v2800, %v2831
  %v2849 = vadd.f32 %v2801, %v2831
  %v2850 = vadd.f32 %v2802, %v2831
  %v2851 = vadd.f32 %v2803, %v2831
  %v2852 = vadd.f32 %v2804, %v2831
  %v2853 = vadd.f32 %v2805, %v2831
  %v2854 = vadd.f32 %v2806, %v2836
  %v2855 = vadd.f32 %v2807, %v2836
  %v2856 = vadd.f32 %v2808, %v2836
  %v2857 = vadd.f32 %v2809, %v2836
  %v2858 = vadd.f32 %v2810, %v2836
  %v2859 = vadd.f32 %v2811, %v2836
  %v2860 = vadd.f32 %v2812, %v2841
  %v2861 = vadd.f32 %v2813, %v2841
  %v2862 = vadd.f32 %v2814, %v2841
  %v2863 = vadd.f32 %v2815, %v2841
  %v2864 = vadd.f32 %v2816, %v2841
  %v2865 = vadd.f32 %v2817, %v2841
  %v2866 = vadd.f32 %v2818, %v2846
  %v2867 = vadd.f32 %v2819, %v2846
  %v2868 = vadd.f32 %v2820, %v2846
  %v2869 = vadd.f32 %v2821, %v2846
  %v2870 = vadd.f32 %v2822, %v2846
  %v2871 = vadd.f32 %v2823, %v2846
  %v2872 = vmax.f32 %v2848, 0.0
  %v2873 = vmax.f32 %v2849, 0.0
  %v2874 = vmax.f32 %v2850, 0.0
  %v2875 = vmax.f32 %v2851, 0.0
  %v2876 = vmax.f32 %v2852, 0.0
  %v2877 = vmax.f32 %v2853, 0.0
  %v2878 = vmax.f32 %v2854, 0.0
  %v2879 = vmax.f32 %v2855, 0.0
  %v2880 = vmax.f32 %v2856, 0.0
  %v2881 = vmax.f32 %v2857, 0.0
  %v2882 = vmax.f32 %v2858, 0.0
  %v2883 = vmax.f32 %v2859, 0.0
  %v2884 = vmax.f32 %v2860, 0.0
  %v2885 = vmax.f32 %v2861, 0.0
  %v2886 = vmax.f32 %v2862, 0.0
  %v2887 = vmax.f32 %v2863, 0.0
  %v2888 = vmax.f32 %v2864, 0.0
  %v2889 = vmax.f32 %v2865, 0.0
  %v2890 = vmax.f32 %v2866, 0.0
  %v2891 = vmax.f32 %v2867, 0.0
  %v2892 = vmax.f32 %v2868, 0.0
  %v2893 = vmax.f32 %v2869, 0.0
  %v2894 = vmax.f32 %v2870, 0.0
  %v2895 = vmax.f32 %v2871, 0.0
  %v2896 = vld [vmem:[%s3] sm:$0x3f]
  %v2898 = vlaneseq
  %v2899 = vshrl.u32 %v2898, 7
  %v2900 = vsub.s32 0, %v2899
  %v2901 = vrot.slane %v2896, %v2900
  %v2902 = vlaneseq
  %v2903 = vshrl.u32 %v2902, 7
  %v2904 = vsub.s32 1, %v2903
  %v2905 = vrot.slane %v2896, %v2904
  %v2906 = vlaneseq
  %v2907 = vshrl.u32 %v2906, 7
  %v2908 = vsub.s32 2, %v2907
  %v2909 = vrot.slane %v2896, %v2908
  %v2910 = vlaneseq
  %v2911 = vshrl.u32 %v2910, 7
  %v2912 = vsub.s32 3, %v2911
  %v2913 = vrot.slane %v2896, %v2912
  %v2914 = vlaneseq
  %v2915 = vshrl.u32 %v2914, 7
  %v2916 = vsub.s32 4, %v2915
  %v2917 = vrot.slane %v2896, %v2916
  %v2918 = vlaneseq
  %v2919 = vshrl.u32 %v2918, 7
  %v2920 = vsub.s32 5, %v2919
  %v2921 = vrot.slane %v2896, %v2920
  %v2928 = vmul.f32 %v2872, %v2901
  %v2929 = vmul.f32 %v2873, %v2905
  %v2930 = vmul.f32 %v2874, %v2909
  %v2931 = vmul.f32 %v2875, %v2913
  %v2932 = vmul.f32 %v2876, %v2917
  %v2933 = vmul.f32 %v2877, %v2921
  %v2934 = vmul.f32 %v2878, %v2901
  %v2935 = vmul.f32 %v2879, %v2905
  %v2936 = vmul.f32 %v2880, %v2909
  %v2937 = vmul.f32 %v2881, %v2913
  %v2938 = vmul.f32 %v2882, %v2917
  %v2939 = vmul.f32 %v2883, %v2921
  %v2940 = vmul.f32 %v2884, %v2901
  %v2941 = vmul.f32 %v2885, %v2905
  %v2942 = vmul.f32 %v2886, %v2909
  %v2943 = vmul.f32 %v2887, %v2913
  %v2944 = vmul.f32 %v2888, %v2917
  %v2945 = vmul.f32 %v2889, %v2921
  %v2946 = vmul.f32 %v2890, %v2901
  %v2947 = vmul.f32 %v2891, %v2905
  %v2948 = vmul.f32 %v2892, %v2909
  %v2949 = vmul.f32 %v2893, %v2913
  %v2950 = vmul.f32 %v2894, %v2917
  %v2951 = vmul.f32 %v2895, %v2921
  %v2952 = vadd.f32 %v2928, %v2929
  %v2953 = vadd.f32 %v2952, %v2930
  %v2954 = vadd.f32 %v2953, %v2931
  %v2955 = vadd.f32 %v2954, %v2932
  %v2956 = vadd.f32 %v2955, %v2933
  %2957 = vadd.xlane.f32.xlu0 %v2956
  %v2958 = vpop.xlane.xlu0 %2957
  %v2959 = vadd.f32 %v2934, %v2935
  %v2960 = vadd.f32 %v2959, %v2936
  %v2961 = vadd.f32 %v2960, %v2937
  %v2962 = vadd.f32 %v2961, %v2938
  %v2963 = vadd.f32 %v2962, %v2939
  %2964 = vadd.xlane.f32.xlu0 %v2963
  %v2965 = vpop.xlane.xlu0 %2964
  %v2966 = vadd.f32 %v2940, %v2941
  %v2967 = vadd.f32 %v2966, %v2942
  %v2968 = vadd.f32 %v2967, %v2943
  %v2969 = vadd.f32 %v2968, %v2944
  %v2970 = vadd.f32 %v2969, %v2945
  %2971 = vadd.xlane.f32.xlu0 %v2970
  %v2972 = vpop.xlane.xlu0 %2971
  %v2973 = vadd.f32 %v2946, %v2947
  %v2974 = vadd.f32 %v2973, %v2948
  %v2975 = vadd.f32 %v2974, %v2949
  %v2976 = vadd.f32 %v2975, %v2950
  %v2977 = vadd.f32 %v2976, %v2951
  %2978 = vadd.xlane.f32.xlu0 %v2977
  %v2979 = vpop.xlane.xlu0 %2978
  %v2980 = vmul.f32 %v2928, %v2928
  %v2981 = vmul.f32 %v2929, %v2929
  %v2982 = vmul.f32 %v2930, %v2930
  %v2983 = vmul.f32 %v2931, %v2931
  %v2984 = vmul.f32 %v2932, %v2932
  %v2985 = vmul.f32 %v2933, %v2933
  %v2986 = vmul.f32 %v2934, %v2934
  %v2987 = vmul.f32 %v2935, %v2935
  %v2988 = vmul.f32 %v2936, %v2936
  %v2989 = vmul.f32 %v2937, %v2937
  %v2990 = vmul.f32 %v2938, %v2938
  %v2991 = vmul.f32 %v2939, %v2939
  %v2992 = vmul.f32 %v2940, %v2940
  %v2993 = vmul.f32 %v2941, %v2941
  %v2994 = vmul.f32 %v2942, %v2942
  %v2995 = vmul.f32 %v2943, %v2943
  %v2996 = vmul.f32 %v2944, %v2944
  %v2997 = vmul.f32 %v2945, %v2945
  %v2998 = vmul.f32 %v2946, %v2946
  %v2999 = vmul.f32 %v2947, %v2947
  %v3000 = vmul.f32 %v2948, %v2948
  %v3001 = vmul.f32 %v2949, %v2949
  %v3002 = vmul.f32 %v2950, %v2950
  %v3003 = vmul.f32 %v2951, %v2951
  %v3004 = vadd.f32 %v2980, %v2981
  %v3005 = vadd.f32 %v3004, %v2982
  %v3006 = vadd.f32 %v3005, %v2983
  %v3007 = vadd.f32 %v3006, %v2984
  %v3008 = vadd.f32 %v3007, %v2985
  %3009 = vadd.xlane.f32.xlu0 %v3008
  %v3010 = vpop.xlane.xlu0 %3009
  %v3011 = vadd.f32 %v2986, %v2987
  %v3012 = vadd.f32 %v3011, %v2988
  %v3013 = vadd.f32 %v3012, %v2989
  %v3014 = vadd.f32 %v3013, %v2990
  %v3015 = vadd.f32 %v3014, %v2991
  %3016 = vadd.xlane.f32.xlu0 %v3015
  %v3017 = vpop.xlane.xlu0 %3016
  %v3018 = vadd.f32 %v2992, %v2993
  %v3019 = vadd.f32 %v3018, %v2994
  %v3020 = vadd.f32 %v3019, %v2995
  %v3021 = vadd.f32 %v3020, %v2996
  %v3022 = vadd.f32 %v3021, %v2997
  %3023 = vadd.xlane.f32.xlu0 %v3022
  %v3024 = vpop.xlane.xlu0 %3023
  %v3025 = vadd.f32 %v2998, %v2999
  %v3026 = vadd.f32 %v3025, %v3000
  %v3027 = vadd.f32 %v3026, %v3001
  %v3028 = vadd.f32 %v3027, %v3002
  %v3029 = vadd.f32 %v3028, %v3003
  %3030 = vadd.xlane.f32.xlu0 %v3029
  %v3031 = vpop.xlane.xlu0 %3030
  %v3032 = vmul.f32 %v2958, 0.001953125
  %v3033 = vmul.f32 %v2965, 0.001953125
  %v3034 = vmul.f32 %v2972, 0.001953125
  %v3035 = vmul.f32 %v2979, 0.001953125
  %v3036 = vmul.f32 %v3010, 0.001953125
  %v3037 = vmul.f32 %v3017, 0.001953125
  %v3038 = vmul.f32 %v3024, 0.001953125
  %v3039 = vmul.f32 %v3031, 0.001953125
  %v3040 = vmul.f32 %v3032, %v3032
  %v3041 = vmul.f32 %v3033, %v3033
  %v3042 = vmul.f32 %v3034, %v3034
  %v3043 = vmul.f32 %v3035, %v3035
  %v3044 = vsub.f32 %v3036, %v3040
  %v3045 = vsub.f32 %v3037, %v3041
  %v3046 = vsub.f32 %v3038, %v3042
  %v3047 = vsub.f32 %v3039, %v3043
  %v3048 = vmax.f32 %v3044, 0.0
  %v3049 = vmax.f32 %v3045, 0.0
  %v3050 = vmax.f32 %v3046, 0.0
  %v3051 = vmax.f32 %v3047, 0.0
  %v3052 = vadd.f32 %v3048, 1e-05
  %v3053 = vadd.f32 %v3049, 1e-05
  %v3054 = vadd.f32 %v3050, 1e-05
  %v3055 = vadd.f32 %v3051, 1e-05
  %v3056 = vrsqrt.pop %v3052
  %v3057 = vrsqrt.pop %v3053
  %v3058 = vrsqrt.pop %v3054
  %v3059 = vrsqrt.pop %v3055
  %v3060 = vmul.f32 %v3056, %v2824
  %v3061 = vmul.f32 %v3057, %v2825
  %v3062 = vmul.f32 %v3058, %v2826
  %v3063 = vmul.f32 %v3059, %v2827
  %v3064 = vsub.f32 %v2872, %v3032
  %v3065 = vsub.f32 %v2873, %v3032
  %v3066 = vsub.f32 %v2874, %v3032
  %v3067 = vsub.f32 %v2875, %v3032
  %v3068 = vsub.f32 %v2876, %v3032
  %v3069 = vsub.f32 %v2877, %v3032
  %v3070 = vsub.f32 %v2878, %v3033
  %v3071 = vsub.f32 %v2879, %v3033
  %v3072 = vsub.f32 %v2880, %v3033
  %v3073 = vsub.f32 %v2881, %v3033
  %v3074 = vsub.f32 %v2882, %v3033
  %v3075 = vsub.f32 %v2883, %v3033
  %v3076 = vsub.f32 %v2884, %v3034
  %v3077 = vsub.f32 %v2885, %v3034
  %v3078 = vsub.f32 %v2886, %v3034
  %v3079 = vsub.f32 %v2887, %v3034
  %v3080 = vsub.f32 %v2888, %v3034
  %v3081 = vsub.f32 %v2889, %v3034
  %v3082 = vsub.f32 %v2890, %v3035
  %v3083 = vsub.f32 %v2891, %v3035
  %v3084 = vsub.f32 %v2892, %v3035
  %v3085 = vsub.f32 %v2893, %v3035
  %v3086 = vsub.f32 %v2894, %v3035
  %v3087 = vsub.f32 %v2895, %v3035
  %3089 = vset.pattern.permute.xlu0 1
  %3090 = vperm.xlu0 %3089, %v3060
  %v3091 = vpop.permute.xlu0 %3090
  %3094 = vset.pattern.permute.xlu0 1
  %3095 = vperm.xlu0 %3094, %v3061
  %v3096 = vpop.permute.xlu0 %3095
  %3099 = vset.pattern.permute.xlu0 1
  %3100 = vperm.xlu0 %3099, %v3062
  %v3101 = vpop.permute.xlu0 %3100
  %3104 = vset.pattern.permute.xlu0 1
  %3105 = vperm.xlu0 %3104, %v3063
  %v3106 = vpop.permute.xlu0 %3105
  %v3108 = vmul.f32 %v3064, %v3091
  %v3109 = vmul.f32 %v3065, %v3091
  %v3110 = vmul.f32 %v3066, %v3091
  %v3111 = vmul.f32 %v3067, %v3091
  %v3112 = vmul.f32 %v3068, %v3091
  %v3113 = vmul.f32 %v3069, %v3091
  %v3114 = vmul.f32 %v3070, %v3096
  %v3115 = vmul.f32 %v3071, %v3096
  %v3116 = vmul.f32 %v3072, %v3096
  %v3117 = vmul.f32 %v3073, %v3096
  %v3118 = vmul.f32 %v3074, %v3096
  %v3119 = vmul.f32 %v3075, %v3096
  %v3120 = vmul.f32 %v3076, %v3101
  %v3121 = vmul.f32 %v3077, %v3101
  %v3122 = vmul.f32 %v3078, %v3101
  %v3123 = vmul.f32 %v3079, %v3101
  %v3124 = vmul.f32 %v3080, %v3101
  %v3125 = vmul.f32 %v3081, %v3101
  %v3126 = vmul.f32 %v3082, %v3106
  %v3127 = vmul.f32 %v3083, %v3106
  %v3128 = vmul.f32 %v3084, %v3106
  %v3129 = vmul.f32 %v3085, %v3106
  %v3130 = vmul.f32 %v3086, %v3106
  %v3131 = vmul.f32 %v3087, %v3106
  %3132 = vset.pattern.permute.xlu0 2
  %3133 = vperm.xlu0 %3132, %v2824
  %v3134 = vpop.permute.xlu0 %3133
  %3136 = vset.pattern.permute.xlu0 2
  %3137 = vperm.xlu0 %3136, %v2825
  %v3138 = vpop.permute.xlu0 %3137
  %3140 = vset.pattern.permute.xlu0 2
  %3141 = vperm.xlu0 %3140, %v2826
  %v3142 = vpop.permute.xlu0 %3141
  %3144 = vset.pattern.permute.xlu0 2
  %3145 = vperm.xlu0 %3144, %v2827
  %v3146 = vpop.permute.xlu0 %3145
  %v3148 = vadd.f32 %v3108, %v3134
  %v3149 = vadd.f32 %v3109, %v3134
  %v3150 = vadd.f32 %v3110, %v3134
  %v3151 = vadd.f32 %v3111, %v3134
  %v3152 = vadd.f32 %v3112, %v3134
  %v3153 = vadd.f32 %v3113, %v3134
  %v3154 = vadd.f32 %v3114, %v3138
  %v3155 = vadd.f32 %v3115, %v3138
  %v3156 = vadd.f32 %v3116, %v3138
  %v3157 = vadd.f32 %v3117, %v3138
  %v3158 = vadd.f32 %v3118, %v3138
  %v3159 = vadd.f32 %v3119, %v3138
  %v3160 = vadd.f32 %v3120, %v3142
  %v3161 = vadd.f32 %v3121, %v3142
  %v3162 = vadd.f32 %v3122, %v3142
  %v3163 = vadd.f32 %v3123, %v3142
  %v3164 = vadd.f32 %v3124, %v3142
  %v3165 = vadd.f32 %v3125, %v3142
  %v3166 = vadd.f32 %v3126, %v3146
  %v3167 = vadd.f32 %v3127, %v3146
  %v3168 = vadd.f32 %v3128, %v3146
  %v3169 = vadd.f32 %v3129, %v3146
  %v3170 = vadd.f32 %v3130, %v3146
  %v3171 = vadd.f32 %v3131, %v3146
  %3172 = vst [vmem:[%s4] sm:$0xff] %v3148
  %3173 = vst [vmem:[%s4 + $0x8] sm:$0xff] %v3149
  %3174 = vst [vmem:[%s4 + $0x10] sm:$0xff] %v3150
  %3175 = vst [vmem:[%s4 + $0x18] sm:$0xff] %v3151
  %3176 = vst [vmem:[%s4 + $0x20] sm:$0xff] %v3152
  %3177 = vst [vmem:[%s4 + $0x28] sm:$0xff] %v3153
  %3178 = vst [vmem:[%s4 + $0x30] sm:$0xff] %v3154
  %3179 = vst [vmem:[%s4 + $0x38] sm:$0xff] %v3155
  %3180 = vst [vmem:[%s4 + $0x40] sm:$0xff] %v3156
  %3181 = vst [vmem:[%s4 + $0x48] sm:$0xff] %v3157
  %3182 = vst [vmem:[%s4 + $0x50] sm:$0xff] %v3158
  %3183 = vst [vmem:[%s4 + $0x58] sm:$0xff] %v3159
  %3184 = vst [vmem:[%s4 + $0x60] sm:$0xff] %v3160
  %3185 = vst [vmem:[%s4 + $0x68] sm:$0xff] %v3161
  %3186 = vst [vmem:[%s4 + $0x70] sm:$0xff] %v3162
  %3187 = vst [vmem:[%s4 + $0x78] sm:$0xff] %v3163
  %3188 = vst [vmem:[%s4 + $0x80] sm:$0xff] %v3164
  %3189 = vst [vmem:[%s4 + $0x88] sm:$0xff] %v3165
  %3190 = vst [vmem:[%s4 + $0x90] sm:$0xff] %v3166
  %3191 = vst [vmem:[%s4 + $0x98] sm:$0xff] %v3167
  %3192 = vst [vmem:[%s4 + $0xa0] sm:$0xff] %v3168
  %3193 = vst [vmem:[%s4 + $0xa8] sm:$0xff] %v3169
  %3194 = vst [vmem:[%s4 + $0xb0] sm:$0xff] %v3170
  %3195 = vst [vmem:[%s4 + $0xb8] sm:$0xff] %v3171
  // Predicated region
  $region18: #{cba_forward.1} parent=0 // pred_check
    _
  $region19: #{cba_forward.1} parent=0 // pred_check_branch
    %3197 = sbr.rel (0) target = $region21
  $region20: #{cba_forward.1} parent=0 // pred_region
    _
  $region21: #{cba_forward.1} parent=0 // pred_fallthru
    _
  // Predicated region
  $region22: #{cba_forward.1} parent=0 // pred_check
    _
  $region23: #{cba_forward.1} parent=0 // pred_check_branch
    %3199 = sbr.rel (0) target = $region25
  $region24: #{cba_forward.1} parent=0 // pred_region
    _
  $region25: #{cba_forward.1} parent=0 // pred_fallthru
    _

</llo_original>
